<compile_context>
chip_gen: v5e
topology: v5e:2x2
jax: 0.10.0
libtpu: 0.0.40
codegen_flags: <defaults>
</compile_context>

<pallas_src>
import jax
import jax.numpy as jnp
from jax import lax
from jax.experimental import pallas as pl
from jax.experimental.pallas import tpu as pltpu


def _lstm_cell_kernel(h_ref, x_ref, w_ref, b_ref, c_ref, out_ref,
                      xpad_ref, patch_ref):
    """One batch tile per grid step.

    h_ref    : (B, H, W, Cout)    bf16  previous hidden state (NHWC)
    x_ref    : (B, H, W, Cin)     bf16  input (NHWC)
    w_ref    : (9*Ct, 4*Cout)     bf16  stacked gate weights (tap-major, HWIO)
    b_ref    : (1, 4*Cout)        f32   stacked gate biases
    c_ref    : (B, H, W, Cout)    f32   previous cell state
    out_ref  : (B, H, W, 2*Cout)  f32   packed [new_cell | new_hidden]
    xpad_ref : (B, H+2, W+2, Ct)  bf16  scratch: zero-padded [hidden, x]
    patch_ref: (B, H, W, 9*Ct)    bf16  scratch: lane-dense im2col patches
    """
    B, H, W, Cout = c_ref.shape
    Cin = x_ref.shape[-1]
    Ct = Cout + Cin
    K = w_ref.shape[0]            # 9 * Ct
    M = B * H * W

    # In-kernel channel concat + zero padding.  Re-zeroed every step so it is
    # megacore-safe (scratch is per-core, program_id==0 may never run on a
    # given core under "parallel" splitting); the buffer is tiny anyway.
    xpad_ref[...] = jnp.zeros_like(xpad_ref)
    xpad_ref[:, 1:H + 1, 1:W + 1, 0:Cout] = h_ref[...]
    xpad_ref[:, 1:H + 1, 1:W + 1, Cout:Ct] = x_ref[...]

    # im2col: 9 shifted copies into the lane-dense (M, 9*Ct) patch buffer.
    # Static unroll: all slice bounds are compile-time constants.
    for t in range(9):
        dy, dx = divmod(t, 3)
        patch_ref[:, :, :, t * Ct:(t + 1) * Ct] = \
            xpad_ref[:, dy:dy + H, dx:dx + W, :]

    # One fat MXU matmul for all four gates: (M, 324) @ (324, 128).
    # f32 accumulation stays inside the MXU result path (no VMEM acc RMW).
    z = jnp.dot(patch_ref[...].reshape(M, K), w_ref[...],
                preferred_element_type=jnp.float32)
    z = z + b_ref[...]                                    # (M, 4*Cout), f32

    # Lane-dense nonlinearities: lanes [0:3*Cout] (f, i, o) -> sigmoid,
    # lanes [3*Cout:4*Cout] (g) -> tanh.  Sigmoid via EUP approx reciprocal.
    col = lax.broadcasted_iota(jnp.int32, z.shape, 1)
    sig = pl.reciprocal(1.0 + jnp.exp(-z), approx=True)
    act = jnp.where(col < 3 * Cout, sig, jnp.tanh(z))

    f_gate = act[:, 0 * Cout:1 * Cout]
    i_gate = act[:, 1 * Cout:2 * Cout]
    o_gate = act[:, 2 * Cout:3 * Cout]
    g_gate = act[:, 3 * Cout:4 * Cout]

    cell = c_ref[...].reshape(M, Cout)
    new_cell = f_gate * cell + i_gate * g_gate
    new_hidden = o_gate * jnp.tanh(new_cell)

    # Single packed store: [cell | hidden] along lanes -> one output DMA.
    out_ref[...] = jnp.concatenate(
        [new_cell, new_hidden], axis=-1).reshape(B, H, W, 2 * Cout)


def conv2d_lstm_cell(x_nchw, cell_nchw, hidden_nchw, params, b_tile=None):
    """Conv2dLSTMCell.forward (NCHW in/out).  Returns (new_cell, new_hidden)."""
    N, Cin, H, W = x_nchw.shape
    Cout = cell_nchw.shape[1]
    Ct = Cin + Cout
    G = 4 * Cout
    K = 9 * Ct

    # Batch tile: amortize per-grid-step pipeline overhead while keeping >=2
    # grid steps when possible (so both v7x TensorCores get work).
    if b_tile is None:
        if N <= 2:
            b_tile = 1
        else:
            b_tile = max(d for d in range(1, N + 1)
                         if N % d == 0 and N // d >= 2)
    assert N % b_tile == 0

    # NCHW -> NHWC at the module-interface boundary.  In a recurrent loop the
    # cell/hidden state would stay NHWC (cell f32, hidden bf16) between steps.
    x = jnp.transpose(x_nchw, (0, 2, 3, 1)).astype(jnp.bfloat16)
    h = jnp.transpose(hidden_nchw, (0, 2, 3, 1)).astype(jnp.bfloat16)
    c = jnp.transpose(cell_nchw, (0, 2, 3, 1)).astype(jnp.float32)

    # Stack the four gate weights along the output-channel (lane) axis so the
    # MXU result is 4*Cout = 128 lanes wide; flatten (kh, kw, cin) -> K rows in
    # the same tap-major order the kernel's im2col patch uses.
    w = jnp.concatenate(
        [params["wf"], params["wi"], params["wo"], params["wg"]], axis=-1)
    w = w.reshape(K, G).astype(jnp.bfloat16)
    b = jnp.concatenate(
        [params["bf"], params["bi"], params["bo"], params["bg"]],
        axis=-1).reshape(1, G).astype(jnp.float32)

    # VMEM footprint is tiny at these sizes; if b_tile / H / W are scaled up,
    # set pltpu.CompilerParams(vmem_limit_bytes=...) accordingly (64 MiB
    # physical on v7x).
    packed = pl.pallas_call(
        _lstm_cell_kernel,
        out_shape=jax.ShapeDtypeStruct((N, H, W, 2 * Cout), jnp.float32),
        grid=(N // b_tile,),
        in_specs=[
            pl.BlockSpec((b_tile, H, W, Cout), lambda n: (n, 0, 0, 0)),
            pl.BlockSpec((b_tile, H, W, Cin), lambda n: (n, 0, 0, 0)),
            pl.BlockSpec((K, G), lambda n: (0, 0)),           # resident
            pl.BlockSpec((1, G), lambda n: (0, 0)),           # resident
            pl.BlockSpec((b_tile, H, W, Cout), lambda n: (n, 0, 0, 0)),
        ],
        out_specs=pl.BlockSpec((b_tile, H, W, 2 * Cout),
                               lambda n: (n, 0, 0, 0)),
        scratch_shapes=[
            pltpu.VMEM((b_tile, H + 2, W + 2, Ct), jnp.bfloat16),
            pltpu.VMEM((b_tile, H, W, K), jnp.bfloat16),
        ],
        compiler_params=pltpu.CompilerParams(
            dimension_semantics=("parallel",)),
    )(h, x, w, b, c)

    new_c = jnp.transpose(packed[..., :Cout], (0, 3, 1, 2))
    new_h = jnp.transpose(packed[..., Cout:], (0, 3, 1, 2))
    return new_c, new_h


def _reference(x_nchw, cell_nchw, hidden_nchw, params):
    """Pure-JAX (f32) reference for correctness checking."""
    x = jnp.transpose(x_nchw, (0, 2, 3, 1))
    h = jnp.transpose(hidden_nchw, (0, 2, 3, 1))
    c = jnp.transpose(cell_nchw, (0, 2, 3, 1))
    xcat = jnp.concatenate([h, x], axis=-1)

    def conv(w, b):
        y = lax.conv_general_dilated(
            xcat, w, window_strides=(1, 1), padding="SAME",
            dimension_numbers=("NHWC", "HWIO", "NHWC"))
        return y + b

    f = jax.nn.sigmoid(conv(params["wf"], params["bf"]))
    i = jax.nn.sigmoid(conv(params["wi"], params["bi"]))
    o = jax.nn.sigmoid(conv(params["wo"], params["bo"]))
    g = jnp.tanh(conv(params["wg"], params["bg"]))
    new_c = f * c + i * g
    new_h = o * jnp.tanh(new_c)
    return (jnp.transpose(new_c, (0, 3, 1, 2)),
            jnp.transpose(new_h, (0, 3, 1, 2)))


if __name__ == "__main__":
    key = jax.random.PRNGKey(0)
    kx, kc, kh, kw = jax.random.split(key, 4)

    # in_channels=4, out_channels=32 -> 4*Cout = 128 (lane-dense gate matmul)
    N, Cin, Cout, H, W = 2, 4, 32, 16, 16
    Ct = Cin + Cout

    x = jax.random.normal(kx, (N, Cin, H, W), jnp.float32)
    cell = jax.random.normal(kc, (N, Cout, H, W), jnp.float32)
    hidden = jax.random.normal(kh, (N, Cout, H, W), jnp.float32)

    ws = jax.random.split(kw, 8)
    params = {}
    for idx, name in enumerate("fiog"):
        params["w" + name] = 0.05 * jax.random.normal(
            ws[2 * idx], (3, 3, Ct, Cout), jnp.float32)
        params["b" + name] = 0.05 * jax.random.normal(
            ws[2 * idx + 1], (Cout,), jnp.float32)

    new_c, new_h = jax.block_until_ready(
        conv2d_lstm_cell(x, cell, hidden, params))

    assert new_c.shape == (N, Cout, H, W), new_c.shape
    assert new_h.shape == (N, Cout, H, W), new_h.shape
    assert bool(jnp.all(jnp.isfinite(new_c)))
    # hidden = sigmoid * tanh; small slack for the approx EUP reciprocal.
    assert bool(jnp.all(jnp.abs(new_h) <= 1.0 + 1e-3))

    ref_c, ref_h = _reference(x, cell, hidden, params)
    err_c = float(jnp.max(jnp.abs(new_c - ref_c)))
    err_h = float(jnp.max(jnp.abs(new_h - ref_h)))
    # bf16 MXU inputs (f32 accumulation) + approx reciprocal -> bounded error.
    assert err_c < 0.15 and err_h < 0.15, (err_c, err_h)

    print("KERNEL_OK")
</pallas_src>

<mosaic_0001>
module attributes {stable_mosaic.version = 11 : i64} {
  func.func @_lstm_cell_kernel(%arg0: i32, %arg1: memref<1x16x16x32xbf16, #tpu.memory_space<vmem>>, %arg2: memref<1x16x16x4xbf16, #tpu.memory_space<vmem>>, %arg3: memref<324x128xbf16, #tpu.memory_space<vmem>>, %arg4: memref<1x128xf32, #tpu.memory_space<vmem>>, %arg5: memref<1x16x16x32xf32, #tpu.memory_space<vmem>>, %arg6: memref<1x16x16x64xf32, #tpu.memory_space<vmem>>, %arg7: memref<1x18x18x36xbf16, #tpu.memory_space<vmem>>, %arg8: memref<1x16x16x324xbf16, #tpu.memory_space<vmem>>) attributes {dimension_semantics = [#tpu.dimension_semantics<parallel>], iteration_bounds = array<i64: 2>, scalar_prefetch = 0 : i64, scratch_operands = 2 : i64, tpu.core_type = #tpu.core_type<tc>, window_params = [{transform_indices = @transform_0, window_bounds = array<i64: 1, 16, 16, 32>}, {transform_indices = @transform_1, window_bounds = array<i64: 1, 16, 16, 4>}, {pipeline_mode = #tpu.pipeline_mode<synchronous>, transform_indices = @transform_2, window_bounds = array<i64: 324, 128>}, {pipeline_mode = #tpu.pipeline_mode<synchronous>, transform_indices = @transform_3, window_bounds = array<i64: 1, 128>}, {transform_indices = @transform_4, window_bounds = array<i64: 1, 16, 16, 32>}, {transform_indices = @transform_5, window_bounds = array<i64: 1, 16, 16, 64>}]} {
    %cst = arith.constant 0.000000e+00 : bf16
    %0 = vector.broadcast %cst : bf16 to vector<1x18x18x36xbf16>
    %c0 = arith.constant 0 : index
    %c0_0 = arith.constant 0 : index
    %c0_1 = arith.constant 0 : index
    %c0_2 = arith.constant 0 : index
    %1 = vector.load %arg7[%c0, %c0_0, %c0_1, %c0_2] : memref<1x18x18x36xbf16, #tpu.memory_space<vmem>>, vector<1x18x18x36xbf16>
    tpu.vector_store %arg7[%c0, %c0_0, %c0_1, %c0_2], %0 {strides = array<i32>} : memref<1x18x18x36xbf16, #tpu.memory_space<vmem>>, vector<1x18x18x36xbf16>,
    %c0_3 = arith.constant 0 : index
    %c0_4 = arith.constant 0 : index
    %c0_5 = arith.constant 0 : index
    %c0_6 = arith.constant 0 : index
    %2 = vector.load %arg1[%c0_3, %c0_4, %c0_5, %c0_6] : memref<1x16x16x32xbf16, #tpu.memory_space<vmem>>, vector<1x16x16x32xbf16>
    %c0_7 = arith.constant 0 : index
    %c1 = arith.constant 1 : index
    %c1_8 = arith.constant 1 : index
    %c0_9 = arith.constant 0 : index
    %3 = vector.load %arg7[%c0_7, %c1, %c1_8, %c0_9] : memref<1x18x18x36xbf16, #tpu.memory_space<vmem>>, vector<1x16x16x32xbf16>
    tpu.vector_store %arg7[%c0_7, %c1, %c1_8, %c0_9], %2 {strides = array<i32>} : memref<1x18x18x36xbf16, #tpu.memory_space<vmem>>, vector<1x16x16x32xbf16>,
    %c0_10 = arith.constant 0 : index
    %c0_11 = arith.constant 0 : index
    %c0_12 = arith.constant 0 : index
    %c0_13 = arith.constant 0 : index
    %4 = vector.load %arg2[%c0_10, %c0_11, %c0_12, %c0_13] : memref<1x16x16x4xbf16, #tpu.memory_space<vmem>>, vector<1x16x16x4xbf16>
    %c0_14 = arith.constant 0 : index
    %c1_15 = arith.constant 1 : index
    %c1_16 = arith.constant 1 : index
    %c32 = arith.constant 32 : index
    %5 = vector.load %arg7[%c0_14, %c1_15, %c1_16, %c32] : memref<1x18x18x36xbf16, #tpu.memory_space<vmem>>, vector<1x16x16x4xbf16>
    tpu.vector_store %arg7[%c0_14, %c1_15, %c1_16, %c32], %4 {strides = array<i32>} : memref<1x18x18x36xbf16, #tpu.memory_space<vmem>>, vector<1x16x16x4xbf16>,
    %c0_17 = arith.constant 0 : index
    %c0_18 = arith.constant 0 : index
    %c0_19 = arith.constant 0 : index
    %c0_20 = arith.constant 0 : index
    %6 = vector.load %arg7[%c0_17, %c0_18, %c0_19, %c0_20] : memref<1x18x18x36xbf16, #tpu.memory_space<vmem>>, vector<1x16x16x36xbf16>
    %c0_21 = arith.constant 0 : index
    %c0_22 = arith.constant 0 : index
    %c0_23 = arith.constant 0 : index
    %c0_24 = arith.constant 0 : index
    %7 = vector.load %arg8[%c0_21, %c0_22, %c0_23, %c0_24] : memref<1x16x16x324xbf16, #tpu.memory_space<vmem>>, vector<1x16x16x36xbf16>
    tpu.vector_store %arg8[%c0_21, %c0_22, %c0_23, %c0_24], %6 {strides = array<i32>} : memref<1x16x16x324xbf16, #tpu.memory_space<vmem>>, vector<1x16x16x36xbf16>,
    %c0_25 = arith.constant 0 : index
    %c0_26 = arith.constant 0 : index
    %c1_27 = arith.constant 1 : index
    %c0_28 = arith.constant 0 : index
    %8 = vector.load %arg7[%c0_25, %c0_26, %c1_27, %c0_28] : memref<1x18x18x36xbf16, #tpu.memory_space<vmem>>, vector<1x16x16x36xbf16>
    %c0_29 = arith.constant 0 : index
    %c0_30 = arith.constant 0 : index
    %c0_31 = arith.constant 0 : index
    %c36 = arith.constant 36 : index
    %9 = vector.load %arg8[%c0_29, %c0_30, %c0_31, %c36] : memref<1x16x16x324xbf16, #tpu.memory_space<vmem>>, vector<1x16x16x36xbf16>
    tpu.vector_store %arg8[%c0_29, %c0_30, %c0_31, %c36], %8 {strides = array<i32>} : memref<1x16x16x324xbf16, #tpu.memory_space<vmem>>, vector<1x16x16x36xbf16>,
    %c0_32 = arith.constant 0 : index
    %c0_33 = arith.constant 0 : index
    %c2 = arith.constant 2 : index
    %c0_34 = arith.constant 0 : index
    %10 = vector.load %arg7[%c0_32, %c0_33, %c2, %c0_34] : memref<1x18x18x36xbf16, #tpu.memory_space<vmem>>, vector<1x16x16x36xbf16>
    %c0_35 = arith.constant 0 : index
    %c0_36 = arith.constant 0 : index
    %c0_37 = arith.constant 0 : index
    %c72 = arith.constant 72 : index
    %11 = vector.load %arg8[%c0_35, %c0_36, %c0_37, %c72] : memref<1x16x16x324xbf16, #tpu.memory_space<vmem>>, vector<1x16x16x36xbf16>
    tpu.vector_store %arg8[%c0_35, %c0_36, %c0_37, %c72], %10 {strides = array<i32>} : memref<1x16x16x324xbf16, #tpu.memory_space<vmem>>, vector<1x16x16x36xbf16>,
    %c0_38 = arith.constant 0 : index
    %c1_39 = arith.constant 1 : index
    %c0_40 = arith.constant 0 : index
    %c0_41 = arith.constant 0 : index
    %12 = vector.load %arg7[%c0_38, %c1_39, %c0_40, %c0_41] : memref<1x18x18x36xbf16, #tpu.memory_space<vmem>>, vector<1x16x16x36xbf16>
    %c0_42 = arith.constant 0 : index
    %c0_43 = arith.constant 0 : index
    %c0_44 = arith.constant 0 : index
    %c108 = arith.constant 108 : index
    %13 = vector.load %arg8[%c0_42, %c0_43, %c0_44, %c108] : memref<1x16x16x324xbf16, #tpu.memory_space<vmem>>, vector<1x16x16x36xbf16>
    tpu.vector_store %arg8[%c0_42, %c0_43, %c0_44, %c108], %12 {strides = array<i32>} : memref<1x16x16x324xbf16, #tpu.memory_space<vmem>>, vector<1x16x16x36xbf16>,
    %c0_45 = arith.constant 0 : index
    %c1_46 = arith.constant 1 : index
    %c1_47 = arith.constant 1 : index
    %c0_48 = arith.constant 0 : index
    %14 = vector.load %arg7[%c0_45, %c1_46, %c1_47, %c0_48] : memref<1x18x18x36xbf16, #tpu.memory_space<vmem>>, vector<1x16x16x36xbf16>
    %c0_49 = arith.constant 0 : index
    %c0_50 = arith.constant 0 : index
    %c0_51 = arith.constant 0 : index
    %c144 = arith.constant 144 : index
    %15 = vector.load %arg8[%c0_49, %c0_50, %c0_51, %c144] : memref<1x16x16x324xbf16, #tpu.memory_space<vmem>>, vector<1x16x16x36xbf16>
    tpu.vector_store %arg8[%c0_49, %c0_50, %c0_51, %c144], %14 {strides = array<i32>} : memref<1x16x16x324xbf16, #tpu.memory_space<vmem>>, vector<1x16x16x36xbf16>,
    %c0_52 = arith.constant 0 : index
    %c1_53 = arith.constant 1 : index
    %c2_54 = arith.constant 2 : index
    %c0_55 = arith.constant 0 : index
    %16 = vector.load %arg7[%c0_52, %c1_53, %c2_54, %c0_55] : memref<1x18x18x36xbf16, #tpu.memory_space<vmem>>, vector<1x16x16x36xbf16>
    %c0_56 = arith.constant 0 : index
    %c0_57 = arith.constant 0 : index
    %c0_58 = arith.constant 0 : index
    %c180 = arith.constant 180 : index
    %17 = vector.load %arg8[%c0_56, %c0_57, %c0_58, %c180] : memref<1x16x16x324xbf16, #tpu.memory_space<vmem>>, vector<1x16x16x36xbf16>
    tpu.vector_store %arg8[%c0_56, %c0_57, %c0_58, %c180], %16 {strides = array<i32>} : memref<1x16x16x324xbf16, #tpu.memory_space<vmem>>, vector<1x16x16x36xbf16>,
    %c0_59 = arith.constant 0 : index
    %c2_60 = arith.constant 2 : index
    %c0_61 = arith.constant 0 : index
    %c0_62 = arith.constant 0 : index
    %18 = vector.load %arg7[%c0_59, %c2_60, %c0_61, %c0_62] : memref<1x18x18x36xbf16, #tpu.memory_space<vmem>>, vector<1x16x16x36xbf16>
    %c0_63 = arith.constant 0 : index
    %c0_64 = arith.constant 0 : index
    %c0_65 = arith.constant 0 : index
    %c216 = arith.constant 216 : index
    %19 = vector.load %arg8[%c0_63, %c0_64, %c0_65, %c216] : memref<1x16x16x324xbf16, #tpu.memory_space<vmem>>, vector<1x16x16x36xbf16>
    tpu.vector_store %arg8[%c0_63, %c0_64, %c0_65, %c216], %18 {strides = array<i32>} : memref<1x16x16x324xbf16, #tpu.memory_space<vmem>>, vector<1x16x16x36xbf16>,
    %c0_66 = arith.constant 0 : index
    %c2_67 = arith.constant 2 : index
    %c1_68 = arith.constant 1 : index
    %c0_69 = arith.constant 0 : index
    %20 = vector.load %arg7[%c0_66, %c2_67, %c1_68, %c0_69] : memref<1x18x18x36xbf16, #tpu.memory_space<vmem>>, vector<1x16x16x36xbf16>
    %c0_70 = arith.constant 0 : index
    %c0_71 = arith.constant 0 : index
    %c0_72 = arith.constant 0 : index
    %c252 = arith.constant 252 : index
    %21 = vector.load %arg8[%c0_70, %c0_71, %c0_72, %c252] : memref<1x16x16x324xbf16, #tpu.memory_space<vmem>>, vector<1x16x16x36xbf16>
    tpu.vector_store %arg8[%c0_70, %c0_71, %c0_72, %c252], %20 {strides = array<i32>} : memref<1x16x16x324xbf16, #tpu.memory_space<vmem>>, vector<1x16x16x36xbf16>,
    %c0_73 = arith.constant 0 : index
    %c2_74 = arith.constant 2 : index
    %c2_75 = arith.constant 2 : index
    %c0_76 = arith.constant 0 : index
    %22 = vector.load %arg7[%c0_73, %c2_74, %c2_75, %c0_76] : memref<1x18x18x36xbf16, #tpu.memory_space<vmem>>, vector<1x16x16x36xbf16>
    %c0_77 = arith.constant 0 : index
    %c0_78 = arith.constant 0 : index
    %c0_79 = arith.constant 0 : index
    %c288 = arith.constant 288 : index
    %23 = vector.load %arg8[%c0_77, %c0_78, %c0_79, %c288] : memref<1x16x16x324xbf16, #tpu.memory_space<vmem>>, vector<1x16x16x36xbf16>
    tpu.vector_store %arg8[%c0_77, %c0_78, %c0_79, %c288], %22 {strides = array<i32>} : memref<1x16x16x324xbf16, #tpu.memory_space<vmem>>, vector<1x16x16x36xbf16>,
    %c0_80 = arith.constant 0 : index
    %c0_81 = arith.constant 0 : index
    %c0_82 = arith.constant 0 : index
    %c0_83 = arith.constant 0 : index
    %24 = vector.load %arg8[%c0_80, %c0_81, %c0_82, %c0_83] : memref<1x16x16x324xbf16, #tpu.memory_space<vmem>>, vector<1x16x16x324xbf16>
    %25 = vector.shape_cast %24 : vector<1x16x16x324xbf16> to vector<256x324xbf16>
    %c0_84 = arith.constant 0 : index
    %c0_85 = arith.constant 0 : index
    %26 = vector.load %arg3[%c0_84, %c0_85] : memref<324x128xbf16, #tpu.memory_space<vmem>>, vector<324x128xbf16>
    %cst_86 = arith.constant dense<0.000000e+00> : vector<256x128xf32>
    %27 = tpu.matmul %25, %26, %cst_86 {dimension_numbers = #tpu.dot_dimension_numbers<[1], [0], [0], [1], [0, 0, 1, 1], [], []>} : vector<256x324xbf16>, vector<324x128xbf16>, vector<256x128xf32> -> vector<256x128xf32>
    %c0_87 = arith.constant 0 : index
    %c0_88 = arith.constant 0 : index
    %28 = vector.load %arg4[%c0_87, %c0_88] : memref<1x128xf32, #tpu.memory_space<vmem>>, vector<1x128xf32>
    %29 = vector.broadcast %28 : vector<1x128xf32> to vector<256x128xf32>
    %30 = arith.addf %27, %29 : vector<256x128xf32>
    %31 = tpu.iota {dimensions = array<i32: 1>} : vector<256x128xi32>
    %cst_89 = arith.constant 0.000000e+00 : f32
    %32 = vector.broadcast %cst_89 : f32 to vector<256x128xf32>
    %33 = arith.subf %32, %30 : vector<256x128xf32>
    %34 = math.exp %33 : vector<256x128xf32>
    %cst_90 = arith.constant 1.000000e+00 : f32
    %35 = vector.broadcast %cst_90 : f32 to vector<256x128xf32>
    %36 = arith.addf %35, %34 : vector<256x128xf32>
    %37 = tpu.reciprocal %36 {approx = true} : vector<256x128xf32> -> vector<256x128xf32>
    %c96_i32 = arith.constant 96 : i32
    %38 = vector.broadcast %c96_i32 : i32 to vector<256x128xi32>
    %39 = arith.cmpi slt, %31, %38 : vector<256x128xi32>
    %40 = math.tanh %30 : vector<256x128xf32>
    %41 = arith.select %39, %37, %40 : vector<256x128xi1>, vector<256x128xf32>
    %42 = vector.extract_strided_slice %41 {offsets = [0, 0], sizes = [256, 32], strides = [1, 1]} : vector<256x128xf32> to vector<256x32xf32>
    %43 = vector.extract_strided_slice %41 {offsets = [0, 32], sizes = [256, 32], strides = [1, 1]} : vector<256x128xf32> to vector<256x32xf32>
    %44 = vector.extract_strided_slice %41 {offsets = [0, 64], sizes = [256, 32], strides = [1, 1]} : vector<256x128xf32> to vector<256x32xf32>
    %45 = vector.extract_strided_slice %41 {offsets = [0, 96], sizes = [256, 32], strides = [1, 1]} : vector<256x128xf32> to vector<256x32xf32>
    %c0_91 = arith.constant 0 : index
    %c0_92 = arith.constant 0 : index
    %c0_93 = arith.constant 0 : index
    %c0_94 = arith.constant 0 : index
    %46 = vector.load %arg5[%c0_91, %c0_92, %c0_93, %c0_94] : memref<1x16x16x32xf32, #tpu.memory_space<vmem>>, vector<1x16x16x32xf32>
    %47 = vector.shape_cast %46 : vector<1x16x16x32xf32> to vector<256x32xf32>
    %48 = arith.mulf %42, %47 : vector<256x32xf32>
    %49 = arith.mulf %43, %45 : vector<256x32xf32>
    %50 = arith.addf %48, %49 : vector<256x32xf32>
    %51 = math.tanh %50 : vector<256x32xf32>
    %52 = arith.mulf %44, %51 : vector<256x32xf32>
    %53 = tpu.concatenate %50, %52 in 1 : vector<256x32xf32>, vector<256x32xf32> -> vector<256x64xf32>
    %54 = vector.shape_cast %53 : vector<256x64xf32> to vector<1x16x16x64xf32>
    %c0_95 = arith.constant 0 : index
    %c0_96 = arith.constant 0 : index
    %c0_97 = arith.constant 0 : index
    %c0_98 = arith.constant 0 : index
    %55 = vector.load %arg6[%c0_95, %c0_96, %c0_97, %c0_98] : memref<1x16x16x64xf32, #tpu.memory_space<vmem>>, vector<1x16x16x64xf32>
    tpu.vector_store %arg6[%c0_95, %c0_96, %c0_97, %c0_98], %54 {strides = array<i32>} : memref<1x16x16x64xf32, #tpu.memory_space<vmem>>, vector<1x16x16x64xf32>,
    return
  }
  func.func @transform_0(%arg0: i32) -> (i32, i32, i32, i32) {
    %c0_i32 = arith.constant 0 : i32
    %c0_i32_0 = arith.constant 0 : i32
    %c0_i32_1 = arith.constant 0 : i32
    %c0_i32_2 = arith.constant 0 : i32
    return %arg0, %c0_i32, %c0_i32_0, %c0_i32_1 : i32, i32, i32, i32
  }
  func.func @transform_1(%arg0: i32) -> (i32, i32, i32, i32) {
    %c0_i32 = arith.constant 0 : i32
    %c0_i32_0 = arith.constant 0 : i32
    %c0_i32_1 = arith.constant 0 : i32
    %c0_i32_2 = arith.constant 0 : i32
    return %arg0, %c0_i32, %c0_i32_0, %c0_i32_1 : i32, i32, i32, i32
  }
  func.func @transform_2(%arg0: i32) -> (i32, i32) {
    %c0_i32 = arith.constant 0 : i32
    %c0_i32_0 = arith.constant 0 : i32
    %c0_i32_1 = arith.constant 0 : i32
    return %c0_i32, %c0_i32_0 : i32, i32
  }
  func.func @transform_3(%arg0: i32) -> (i32, i32) {
    %c0_i32 = arith.constant 0 : i32
    %c0_i32_0 = arith.constant 0 : i32
    %c0_i32_1 = arith.constant 0 : i32
    return %c0_i32, %c0_i32_0 : i32, i32
  }
  func.func @transform_4(%arg0: i32) -> (i32, i32, i32, i32) {
    %c0_i32 = arith.constant 0 : i32
    %c0_i32_0 = arith.constant 0 : i32
    %c0_i32_1 = arith.constant 0 : i32
    %c0_i32_2 = arith.constant 0 : i32
    return %arg0, %c0_i32, %c0_i32_0, %c0_i32_1 : i32, i32, i32, i32
  }
  func.func @transform_5(%arg0: i32) -> (i32, i32, i32, i32) {
    %c0_i32 = arith.constant 0 : i32
    %c0_i32_0 = arith.constant 0 : i32
    %c0_i32_1 = arith.constant 0 : i32
    %c0_i32_2 = arith.constant 0 : i32
    return %arg0, %c0_i32, %c0_i32_0, %c0_i32_1 : i32, i32, i32, i32
  }
}

</mosaic_0001>

<llo_original>
// kernel: tpu_custom_call.1
$region0: #{tpu_custom_call.1}
  #allocation0 [shape = 'u32[]', space=smem, size = 0x4, offset = 0x4, fixed_abs, tag = 'smem constant byte address 0x4 - core index']
  #allocation1 [shape = 'u32[72,128]{1,0:T(1,128)}', space=vmem, size = 0x9000, scoped, tag = 'internal scratch']
  #allocation2 [shape = 'bf16[1,18,18,36]{3,2,1,0:T(8,128)(2,1)}', space=vmem, size = 0x1b000, scoped, tag = 'scratch operand']
  #allocation3 [shape = 'bf16[1,16,16,324]{3,2,1,0:T(8,128)(2,1)}', space=vmem, size = 0x30000, scoped, tag = 'scratch operand']
  %s0 = inlined_call_operand.vmem [shape: bf16[2,16,16,32], index: 0, kind: input, shape index: {}]
  %s1 = inlined_call_operand.vmem [shape: bf16[2,16,16,4], index: 1, kind: input, shape index: {}]
  %s2 = inlined_call_operand.hbm [shape: bf16[324,128], index: 2, kind: input, shape index: {}]
  %s3 = inlined_call_operand.vmem [shape: f32[1,128], index: 3, kind: input, shape index: {}]
  %s4 = inlined_call_operand.hbm [shape: f32[2,16,16,32], index: 4, kind: input, shape index: {}]
  %s5 = inlined_call_operand.hbm [shape: f32[2,16,16,64], index: 5, kind: output, shape index: {}]
  %s6 = sld [smem:[#allocation0]]
  $region61: #{tpu_custom_call.1} parent=0
    _
  %s8 = ssub.s32 1, %s6
  %s9 = scalar_select 0, %s8, %s6
  $region1: #{tpu_custom_call.1} parent=0
    #allocation4 [shape = 'u8[83968]{0}', space=vmem, size = 0x14800, scoped, tag = 'input window, operand 2, single buffered']
    #allocation5 [shape = 's32[2]{0}', space=sflag, size = 0x8, scoped, tag = 'scoped memory for tpu_custom_call.1']
    #allocation6 [shape = 's32[2]{0}', space=sflag, size = 0x8, scoped, tag = 'scoped memory for tpu_custom_call.1']
    #allocation7 [shape = 'u8[262144]{0}', space=vmem, size = 0x40000, scoped, tag = 'input window, operand 4']
    #allocation8 [shape = 's32[2]{0}', space=sflag, size = 0x8, scoped, tag = 'scoped memory for tpu_custom_call.1']
    #allocation9 [shape = 'u8[262144]{0}', space=vmem, size = 0x40000, scoped, tag = 'output window, operand 0']
    %10 = vsyncpa [#allocation5], 0
    %11 = vsyncpa [#allocation8], 0
    %s12 = scalar_lea.sflag [#allocation8], 1
    %13 = vsyncpa %s12, 0
    %14 = vsyncpa [#allocation6], 0
    %s15 = scalar_lea.sflag [#allocation6], 1
    %16 = vsyncpa %s15, 0
    loop: start=0, step=1, limit=4
    $region2: #{tpu_custom_call.1} parent=1 // loop_pre_header
      _
    $region3: #{tpu_custom_call.1} parent=1 // loop_header
      %s18 = sphi 0, %s22
      %p19 = scmp.ge.s32.totalorder %s18, 4
      %s28 = sphi 0, %s30
      %s31 = sphi 0, %s28
      %s32 = sphi 0, %s31
      %s48 = sphi 0, %s32
      %s54 = sphi 0, %s56
      %s57 = sphi 0, %s54
      %s58 = sphi 0, %s57
      %s74 = sphi 0, %s58
      %s78 = sphi 0, %s78
      %s80 = sphi 0, %s78
      %s81 = sphi 0, %s80
      %s95 = sphi 0, %s81
      %s99 = sphi 0, %s99
      %s101 = sphi 0, %s99
      %s102 = sphi 0, %s101
      %s116 = sphi 0, %s102
      %s122 = sphi 0, %s124
      %s125 = sphi 0, %s122
      %s126 = sphi 0, %s125
      %s142 = sphi 0, %s126
      %s148 = sphi 0, %s150
      %s151 = sphi 0, %s148
      %s152 = sphi 0, %s151
      %s168 = sphi 0, %s152
    $region4: #{tpu_custom_call.1} parent=1 // loop_header_branch
      %21 = sbr.rel (%p19) target = $region8
    $region5: #{tpu_custom_call.1} parent=1 // loop_body
      %s23 = ssub.s32 %s18, 1
      %s24 = ssub.s32 %s18, 2
      %s25 = sadd.s32 %s18, 1
      %s26 = ssub.s32 %s18, %s25
      %p27 = scmp.eq.s32.totalorder %s26, 0
      %s29 = sadd.s32 %s28, 1
      %s30 = scalar_select %p27, %s28, %s29
      %p33 = pneg %p27
      %p34 = scmp.eq.s32.totalorder %s18, 1
      %p35 = por %p33, %p34
      %p36 = scmp.ne.s32.totalorder %s28, %s31
      %p37 = scmp.eq.s32.totalorder %s18, 0
      %p38 = por %p36, %p37
      %p39 = scmp.ne.s32.totalorder %s28, %s31
      %p40 = scmp.eq.s32.totalorder %s23, 1
      %p41 = por %p39, %p40
      %p42 = scmp.ne.s32.totalorder %s31, %s32
      %p43 = scmp.eq.s32.totalorder %s23, 0
      %p44 = por %p42, %p43
      %p45 = scmp.ne.s32.totalorder %s31, %s32
      %p46 = scmp.eq.s32.totalorder %s24, 1
      %p47 = por %p45, %p46
      %p49 = scmp.ne.s32.totalorder %s32, %s48
      %p50 = scmp.eq.s32.totalorder %s24, 0
      %p51 = por %p49, %p50
      %s52 = ssub.s32 %s18, %s25
      %p53 = scmp.eq.s32.totalorder %s52, 0
      %s55 = sadd.s32 %s54, 1
      %s56 = scalar_select %p53, %s54, %s55
      %p59 = pneg %p53
      %p60 = scmp.eq.s32.totalorder %s18, 1
      %p61 = por %p59, %p60
      %p62 = scmp.ne.s32.totalorder %s54, %s57
      %p63 = scmp.eq.s32.totalorder %s18, 0
      %p64 = por %p62, %p63
      %p65 = scmp.ne.s32.totalorder %s54, %s57
      %p66 = scmp.eq.s32.totalorder %s23, 1
      %p67 = por %p65, %p66
      %p68 = scmp.ne.s32.totalorder %s57, %s58
      %p69 = scmp.eq.s32.totalorder %s23, 0
      %p70 = por %p68, %p69
      %p71 = scmp.ne.s32.totalorder %s57, %s58
      %p72 = scmp.eq.s32.totalorder %s24, 1
      %p73 = por %p71, %p72
      %p75 = scmp.ne.s32.totalorder %s58, %s74
      %p76 = scmp.eq.s32.totalorder %s24, 0
      %p77 = por %p75, %p76
      %s79 = sadd.s32 %s78, 1
      %p82 = scmp.eq.s32.totalorder %s18, 1
      %p83 = scmp.ne.s32.totalorder %s78, %s80
      %p84 = scmp.eq.s32.totalorder %s18, 0
      %p85 = por %p83, %p84
      %p86 = scmp.ne.s32.totalorder %s78, %s80
      %p87 = scmp.eq.s32.totalorder %s23, 1
      %p88 = por %p86, %p87
      %p89 = scmp.ne.s32.totalorder %s80, %s81
      %p90 = scmp.eq.s32.totalorder %s23, 0
      %p91 = por %p89, %p90
      %p92 = scmp.ne.s32.totalorder %s80, %s81
      %p93 = scmp.eq.s32.totalorder %s24, 1
      %p94 = por %p92, %p93
      %p96 = scmp.ne.s32.totalorder %s81, %s95
      %p97 = scmp.eq.s32.totalorder %s24, 0
      %p98 = por %p96, %p97
      %s100 = sadd.s32 %s99, 1
      %p103 = scmp.eq.s32.totalorder %s18, 1
      %p104 = scmp.ne.s32.totalorder %s99, %s101
      %p105 = scmp.eq.s32.totalorder %s18, 0
      %p106 = por %p104, %p105
      %p107 = scmp.ne.s32.totalorder %s99, %s101
      %p108 = scmp.eq.s32.totalorder %s23, 1
      %p109 = por %p107, %p108
      %p110 = scmp.ne.s32.totalorder %s101, %s102
      %p111 = scmp.eq.s32.totalorder %s23, 0
      %p112 = por %p110, %p111
      %p113 = scmp.ne.s32.totalorder %s101, %s102
      %p114 = scmp.eq.s32.totalorder %s24, 1
      %p115 = por %p113, %p114
      %p117 = scmp.ne.s32.totalorder %s102, %s116
      %p118 = scmp.eq.s32.totalorder %s24, 0
      %p119 = por %p117, %p118
      %s120 = ssub.s32 %s18, %s25
      %p121 = scmp.eq.s32.totalorder %s120, 0
      %s123 = sadd.s32 %s122, 1
      %s124 = scalar_select %p121, %s122, %s123
      %p127 = pneg %p121
      %p128 = scmp.eq.s32.totalorder %s18, 1
      %p129 = por %p127, %p128
      %p130 = scmp.ne.s32.totalorder %s122, %s125
      %p131 = scmp.eq.s32.totalorder %s18, 0
      %p132 = por %p130, %p131
      %p133 = scmp.ne.s32.totalorder %s122, %s125
      %p134 = scmp.eq.s32.totalorder %s23, 1
      %p135 = por %p133, %p134
      %p136 = scmp.ne.s32.totalorder %s125, %s126
      %p137 = scmp.eq.s32.totalorder %s23, 0
      %p138 = por %p136, %p137
      %p139 = scmp.ne.s32.totalorder %s125, %s126
      %p140 = scmp.eq.s32.totalorder %s24, 1
      %p141 = por %p139, %p140
      %p143 = scmp.ne.s32.totalorder %s126, %s142
      %p144 = scmp.eq.s32.totalorder %s24, 0
      %p145 = por %p143, %p144
      %s146 = ssub.s32 %s18, %s25
      %p147 = scmp.eq.s32.totalorder %s146, 0
      %s149 = sadd.s32 %s148, 1
      %s150 = scalar_select %p147, %s148, %s149
      %p153 = pneg %p147
      %p154 = scmp.eq.s32.totalorder %s18, 1
      %p155 = por %p153, %p154
      %p156 = scmp.ne.s32.totalorder %s148, %s151
      %p157 = scmp.eq.s32.totalorder %s18, 0
      %p158 = por %p156, %p157
      %p159 = scmp.ne.s32.totalorder %s148, %s151
      %p160 = scmp.eq.s32.totalorder %s23, 1
      %p161 = por %p159, %p160
      %p162 = scmp.ne.s32.totalorder %s151, %s152
      %p163 = scmp.eq.s32.totalorder %s23, 0
      %p164 = por %p162, %p163
      %p165 = scmp.ne.s32.totalorder %s151, %s152
      %p166 = scmp.eq.s32.totalorder %s24, 1
      %p167 = por %p165, %p166
      %p169 = scmp.ne.s32.totalorder %s152, %s168
      %p170 = scmp.eq.s32.totalorder %s24, 0
      %p171 = por %p169, %p170
      %p172 = scmp.le.s32.totalorder 1, %s18
      %p173 = scmp.lt.s32.totalorder %s18, 3
      %p174 = pnand %p172, %p173
      %p175 = pneg %p174
      // Predicated region
      $region9: #{tpu_custom_call.1} parent=5 // pred_check
        _
      $region10: #{tpu_custom_call.1} parent=5 // pred_check_branch
        %177 = sbr.rel (%p174) target = $region12
      $region11: #{tpu_custom_call.1} parent=5 // pred_region
        %s178 = ssub.s32 %s18, 1
        // Predicated region
        $region13: #{tpu_custom_call.1} parent=11 // pred_check
          %p179 = pneg %p91
        $region14: #{tpu_custom_call.1} parent=11 // pred_check_branch
          %181 = sbr.rel (%p179) target = $region16
        $region15: #{tpu_custom_call.1} parent=11 // pred_region
          %183 = vsyncadd [#allocation5], 0
          %s184 = sshll.u32 %s2, 4
          %s185 = int_to_ptr.hbm [resolvable:$true] %s184
          %s186 = sshll.u32 [#allocation4], 4
          %s187 = int_to_ptr.vmem [resolvable:$true] %s186
          %192 = dma.hbm_to_vmem [thread:$0]  %s185, 2624, %s187, [#allocation5], 64, 64, 4
        $region16: #{tpu_custom_call.1} parent=11 // pred_fallthru
          _
        // Predicated region
        $region17: #{tpu_custom_call.1} parent=11 // pred_check
          %p193 = pneg %p112
        $region18: #{tpu_custom_call.1} parent=11 // pred_check_branch
          %195 = sbr.rel (%p193) target = $region20
        $region19: #{tpu_custom_call.1} parent=11 // pred_region
          _
        $region20: #{tpu_custom_call.1} parent=11 // pred_fallthru
          _
      $region12: #{tpu_custom_call.1} parent=5 // pred_fallthru
        _
      %p196 = scmp.lt.s32.totalorder %s18, 2
      // Predicated region
      $region21: #{tpu_custom_call.1} parent=5 // pred_check
        %p197 = pneg %p196
      $region22: #{tpu_custom_call.1} parent=5 // pred_check_branch
        %199 = sbr.rel (%p197) target = $region24
      $region23: #{tpu_custom_call.1} parent=5 // pred_region
        // Predicated region
        $region25: #{tpu_custom_call.1} parent=23 // pred_check
          %p200 = pneg %p38
        $region26: #{tpu_custom_call.1} parent=23 // pred_check_branch
          %202 = sbr.rel (%p200) target = $region28
        $region27: #{tpu_custom_call.1} parent=23 // pred_region
          %p203 = scmp.lt.s32.totalorder %s18, 1
          %s204 = scalar_select %p203, %s18, 1
          %s205 = smul.addr %s204, 32
          %s206 = smul.addr %s205, 4
          %s207 = scalar_lea.vmem %s0, %s206
        $region28: #{tpu_custom_call.1} parent=23 // pred_fallthru
          _
        // Predicated region
        $region29: #{tpu_custom_call.1} parent=23 // pred_check
          %p208 = pneg %p64
        $region30: #{tpu_custom_call.1} parent=23 // pred_check_branch
          %210 = sbr.rel (%p208) target = $region32
        $region31: #{tpu_custom_call.1} parent=23 // pred_region
          %p211 = scmp.lt.s32.totalorder %s18, 1
          %s212 = scalar_select %p211, %s18, 1
          %s213 = smul.addr %s212, 32
          %s214 = smul.addr %s213, 4
          %s215 = scalar_lea.vmem %s1, %s214
        $region32: #{tpu_custom_call.1} parent=23 // pred_fallthru
          _
        // Predicated region
        $region33: #{tpu_custom_call.1} parent=23 // pred_check
          %p216 = pneg %p132
        $region34: #{tpu_custom_call.1} parent=23 // pred_check_branch
          %218 = sbr.rel (%p216) target = $region36
        $region35: #{tpu_custom_call.1} parent=23 // pred_region
          %s219 = sand.u32 %s122, 1
          %s220 = scalar_lea.sflag [#allocation8], %s219
          %s221 = sand.u32 %s122, 1
          %s222 = smul.addr %s221, 256
          %s223 = scalar_lea.vmem [#allocation7], %s222
          %225 = vsyncadd %s220, 0
          %s226 = smul.addr %s18, 32
          %s227 = smul.addr %s226, 8
          %s228 = scalar_lea.hbm %s4, %s227
          %s229 = sshll.u32 %s228, 4
          %s230 = int_to_ptr.hbm [resolvable:$true] %s229
          %s231 = sshll.u32 %s223, 4
          %s232 = int_to_ptr.vmem [resolvable:$true] %s231
          %237 = dma.hbm_to_vmem [thread:$0]  %s230, 4096, %s232, %s220, 128, 128, 8
        $region36: #{tpu_custom_call.1} parent=23 // pred_fallthru
          _
      $region24: #{tpu_custom_call.1} parent=5 // pred_fallthru
        _
      %p238 = scmp.le.s32.totalorder 1, %s18
      %p239 = scmp.lt.s32.totalorder %s18, 3
      %p240 = pnand %p238, %p239
      %p241 = pneg %p240
      // Predicated region
      $region37: #{tpu_custom_call.1} parent=5 // pred_check
        _
      $region38: #{tpu_custom_call.1} parent=5 // pred_check_branch
        %243 = sbr.rel (%p240) target = $region40
      $region39: #{tpu_custom_call.1} parent=5 // pred_region
        %s244 = ssub.s32 %s18, 1
        // Predicated region
        $region41: #{tpu_custom_call.1} parent=39 // pred_check
          %p245 = pneg %p91
        $region42: #{tpu_custom_call.1} parent=39 // pred_check_branch
          %247 = sbr.rel (%p245) target = $region44
        $region43: #{tpu_custom_call.1} parent=39 // pred_region
          %249 = dma.done [#allocation5], 2624
        $region44: #{tpu_custom_call.1} parent=39 // pred_fallthru
          _
        %s250 = sand.u32 %s125, 1
        %s251 = scalar_lea.sflag [#allocation8], %s250
        %s252 = sand.u32 %s125, 1
        %s253 = smul.addr %s252, 256
        %s254 = scalar_lea.vmem [#allocation7], %s253
        // Predicated region
        $region45: #{tpu_custom_call.1} parent=39 // pred_check
          %p255 = pneg %p138
        $region46: #{tpu_custom_call.1} parent=39 // pred_check_branch
          %257 = sbr.rel (%p255) target = $region48
        $region47: #{tpu_custom_call.1} parent=39 // pred_region
          %259 = dma.done %s251, 4096
        $region48: #{tpu_custom_call.1} parent=39 // pred_fallthru
          _
        %p260 = scmp.lt.s32.totalorder %s23, 1
        %s261 = scalar_select %p260, %s23, 1
        %s262 = smul.addr %s261, 32
        %s263 = smul.addr %s262, 4
        %s264 = scalar_lea.vmem %s0, %s263
        %p265 = pneg %p44
        %p266 = pneg %p41
        %p267 = scmp.lt.s32.totalorder %s23, 1
        %s268 = scalar_select %p267, %s23, 1
        %s269 = smul.addr %s268, 32
        %s270 = smul.addr %s269, 4
        %s271 = scalar_lea.vmem %s1, %s270
        %p272 = pneg %p70
        %p273 = pneg %p67
        %p274 = pneg %p91
        %p275 = pneg %p88
        %p276 = pneg %p112
        %p277 = pneg %p109
        %s278 = sand.u32 %s125, 1
        %s279 = scalar_lea.sflag [#allocation8], %s278
        %s280 = sand.u32 %s125, 1
        %s281 = smul.addr %s280, 256
        %s282 = scalar_lea.vmem [#allocation7], %s281
        %p283 = pneg %p138
        %p284 = pneg %p135
        %p285 = pneg %p164
        %p286 = pneg %p161
        %s287 = sand.u32 %s151, 1
        %s288 = scalar_lea.sflag [#allocation6], %s287
        %s289 = sand.u32 %s151, 1
        %s290 = smul.addr %s289, 256
        %s291 = scalar_lea.vmem [#allocation9], %s290
        %p292 = scmp.lt.s32.totalorder %s23, 1
        %s293 = scalar_select %p292, %s23, 1
        %s294 = smul.addr %s293, 32
        %s295 = smul.addr %s294, 4
        %s296 = scalar_lea.vmem %s0, %s295
        %p297 = scmp.lt.s32.totalorder %s23, 1
        %s298 = scalar_select %p297, %s23, 1
        %s299 = smul.addr %s298, 32
        %s300 = smul.addr %s299, 4
        %s301 = scalar_lea.vmem %s1, %s300
        %vm303 = vcmask 289792
        %304 = vst.msk [vmem:[#allocation2] sm:$0xf] %vm303, 0
        %305 = vst.msk [vmem:[#allocation2 + $0x4] sm:$0xf] %vm303, 0
        %vm306 = vcmask 286720
        %307 = vst.msk [vmem:[#allocation2 + $0x8] sm:$0x1] %vm306, 0
        %308 = vst.msk [vmem:[#allocation2 + $0xc] sm:$0xf] %vm303, 0
        %309 = vst.msk [vmem:[#allocation2 + $0x10] sm:$0xf] %vm303, 0
        %310 = vst.msk [vmem:[#allocation2 + $0x14] sm:$0x1] %vm306, 0
        %311 = vst.msk [vmem:[#allocation2 + $0x18] sm:$0xf] %vm303, 0
        %312 = vst.msk [vmem:[#allocation2 + $0x1c] sm:$0xf] %vm303, 0
        %313 = vst.msk [vmem:[#allocation2 + $0x20] sm:$0x1] %vm306, 0
        %314 = vst.msk [vmem:[#allocation2 + $0x24] sm:$0xf] %vm303, 0
        %315 = vst.msk [vmem:[#allocation2 + $0x28] sm:$0xf] %vm303, 0
        %316 = vst.msk [vmem:[#allocation2 + $0x2c] sm:$0x1] %vm306, 0
        %317 = vst.msk [vmem:[#allocation2 + $0x30] sm:$0xf] %vm303, 0
        %318 = vst.msk [vmem:[#allocation2 + $0x34] sm:$0xf] %vm303, 0
        %319 = vst.msk [vmem:[#allocation2 + $0x38] sm:$0x1] %vm306, 0
        %320 = vst.msk [vmem:[#allocation2 + $0x3c] sm:$0xf] %vm303, 0
        %321 = vst.msk [vmem:[#allocation2 + $0x40] sm:$0xf] %vm303, 0
        %322 = vst.msk [vmem:[#allocation2 + $0x44] sm:$0x1] %vm306, 0
        %323 = vst.msk [vmem:[#allocation2 + $0x48] sm:$0xf] %vm303, 0
        %324 = vst.msk [vmem:[#allocation2 + $0x4c] sm:$0xf] %vm303, 0
        %325 = vst.msk [vmem:[#allocation2 + $0x50] sm:$0x1] %vm306, 0
        %326 = vst.msk [vmem:[#allocation2 + $0x54] sm:$0xf] %vm303, 0
        %327 = vst.msk [vmem:[#allocation2 + $0x58] sm:$0xf] %vm303, 0
        %328 = vst.msk [vmem:[#allocation2 + $0x5c] sm:$0x1] %vm306, 0
        %329 = vst.msk [vmem:[#allocation2 + $0x60] sm:$0xf] %vm303, 0
        %330 = vst.msk [vmem:[#allocation2 + $0x64] sm:$0xf] %vm303, 0
        %331 = vst.msk [vmem:[#allocation2 + $0x68] sm:$0x1] %vm306, 0
        %332 = vst.msk [vmem:[#allocation2 + $0x6c] sm:$0xf] %vm303, 0
        %333 = vst.msk [vmem:[#allocation2 + $0x70] sm:$0xf] %vm303, 0
        %334 = vst.msk [vmem:[#allocation2 + $0x74] sm:$0x1] %vm306, 0
        %335 = vst.msk [vmem:[#allocation2 + $0x78] sm:$0xf] %vm303, 0
        %336 = vst.msk [vmem:[#allocation2 + $0x7c] sm:$0xf] %vm303, 0
        %337 = vst.msk [vmem:[#allocation2 + $0x80] sm:$0x1] %vm306, 0
        %338 = vst.msk [vmem:[#allocation2 + $0x84] sm:$0xf] %vm303, 0
        %339 = vst.msk [vmem:[#allocation2 + $0x88] sm:$0xf] %vm303, 0
        %340 = vst.msk [vmem:[#allocation2 + $0x8c] sm:$0x1] %vm306, 0
        %341 = vst.msk [vmem:[#allocation2 + $0x90] sm:$0xf] %vm303, 0
        %342 = vst.msk [vmem:[#allocation2 + $0x94] sm:$0xf] %vm303, 0
        %343 = vst.msk [vmem:[#allocation2 + $0x98] sm:$0x1] %vm306, 0
        %344 = vst.msk [vmem:[#allocation2 + $0x9c] sm:$0xf] %vm303, 0
        %345 = vst.msk [vmem:[#allocation2 + $0xa0] sm:$0xf] %vm303, 0
        %346 = vst.msk [vmem:[#allocation2 + $0xa4] sm:$0x1] %vm306, 0
        %347 = vst.msk [vmem:[#allocation2 + $0xa8] sm:$0xf] %vm303, 0
        %348 = vst.msk [vmem:[#allocation2 + $0xac] sm:$0xf] %vm303, 0
        %349 = vst.msk [vmem:[#allocation2 + $0xb0] sm:$0x1] %vm306, 0
        %350 = vst.msk [vmem:[#allocation2 + $0xb4] sm:$0xf] %vm303, 0
        %351 = vst.msk [vmem:[#allocation2 + $0xb8] sm:$0xf] %vm303, 0
        %352 = vst.msk [vmem:[#allocation2 + $0xbc] sm:$0x1] %vm306, 0
        %353 = vst.msk [vmem:[#allocation2 + $0xc0] sm:$0xf] %vm303, 0
        %354 = vst.msk [vmem:[#allocation2 + $0xc4] sm:$0xf] %vm303, 0
        %355 = vst.msk [vmem:[#allocation2 + $0xc8] sm:$0x1] %vm306, 0
        %356 = vst.msk [vmem:[#allocation2 + $0xcc] sm:$0xf] %vm303, 0
        %357 = vst.msk [vmem:[#allocation2 + $0xd0] sm:$0xf] %vm303, 0
        %358 = vst.msk [vmem:[#allocation2 + $0xd4] sm:$0x1] %vm306, 0
        %v359 = vld [vmem:[%s296] sm:$0xf]
        %v360 = vld [vmem:[%s296 + $0x4] sm:$0xf]
        %v361 = vld [vmem:[%s296 + $0x8] sm:$0xf]
        %v362 = vld [vmem:[%s296 + $0xc] sm:$0xf]
        %v363 = vld [vmem:[%s296 + $0x10] sm:$0xf]
        %v364 = vld [vmem:[%s296 + $0x14] sm:$0xf]
        %v365 = vld [vmem:[%s296 + $0x18] sm:$0xf]
        %v366 = vld [vmem:[%s296 + $0x1c] sm:$0xf]
        %v367 = vld [vmem:[%s296 + $0x20] sm:$0xf]
        %v368 = vld [vmem:[%s296 + $0x24] sm:$0xf]
        %v369 = vld [vmem:[%s296 + $0x28] sm:$0xf]
        %v370 = vld [vmem:[%s296 + $0x2c] sm:$0xf]
        %v371 = vld [vmem:[%s296 + $0x30] sm:$0xf]
        %v372 = vld [vmem:[%s296 + $0x34] sm:$0xf]
        %v373 = vld [vmem:[%s296 + $0x38] sm:$0xf]
        %v374 = vld [vmem:[%s296 + $0x3c] sm:$0xf]
        %v375 = vld [vmem:[%s296 + $0x40] sm:$0xf]
        %v376 = vld [vmem:[%s296 + $0x44] sm:$0xf]
        %v377 = vld [vmem:[%s296 + $0x48] sm:$0xf]
        %v378 = vld [vmem:[%s296 + $0x4c] sm:$0xf]
        %v379 = vld [vmem:[%s296 + $0x50] sm:$0xf]
        %v380 = vld [vmem:[%s296 + $0x54] sm:$0xf]
        %v381 = vld [vmem:[%s296 + $0x58] sm:$0xf]
        %v382 = vld [vmem:[%s296 + $0x5c] sm:$0xf]
        %v383 = vld [vmem:[%s296 + $0x60] sm:$0xf]
        %v384 = vld [vmem:[%s296 + $0x64] sm:$0xf]
        %v385 = vld [vmem:[%s296 + $0x68] sm:$0xf]
        %v386 = vld [vmem:[%s296 + $0x6c] sm:$0xf]
        %v387 = vld [vmem:[%s296 + $0x70] sm:$0xf]
        %v388 = vld [vmem:[%s296 + $0x74] sm:$0xf]
        %v389 = vld [vmem:[%s296 + $0x78] sm:$0xf]
        %v390 = vld [vmem:[%s296 + $0x7c] sm:$0xf]
        %vm391 = vsmask.f32 256
        %vm392 = vsmask.f32 4368
        %vm393 = vmor %vm391, %vm392
        %v395 = vshrl.u32 %v359, 16
        %v397 = vrot.slane %v395, 7
        %v398 = vshll.u32 %v359, 16
        %v400 = vor.u32 %v397, %v398
        %v401 = vrot.slane %v397, 4
        %v403 = vshrl.u32 %v360, 16
        %v405 = vrot.slane %v403, 7
        %v406 = vshll.u32 %v360, 16
        %v408 = vor.u32 %v405, %v406
        %v409 = vsel %vm393, %v401, %v408
        %v410 = vrot.slane %v405, 4
        %v412 = vshrl.u32 %v361, 16
        %v414 = vrot.slane %v412, 7
        %v415 = vshll.u32 %v361, 16
        %v417 = vor.u32 %v414, %v415
        %v418 = vrot.slane %v414, 4
        %v420 = vshrl.u32 %v362, 16
        %v422 = vrot.slane %v420, 7
        %v423 = vshll.u32 %v362, 16
        %v425 = vor.u32 %v422, %v423
        %v426 = vsel %vm393, %v418, %v425
        %v427 = vrot.slane %v422, 4
        %v429 = vshrl.u32 %v363, 16
        %v431 = vrot.slane %v429, 7
        %v432 = vshll.u32 %v363, 16
        %v434 = vor.u32 %v431, %v432
        %v435 = vrot.slane %v431, 4
        %v437 = vshrl.u32 %v364, 16
        %v439 = vrot.slane %v437, 7
        %v440 = vshll.u32 %v364, 16
        %v442 = vor.u32 %v439, %v440
        %v443 = vsel %vm393, %v435, %v442
        %v444 = vrot.slane %v439, 4
        %v446 = vshrl.u32 %v365, 16
        %v448 = vrot.slane %v446, 7
        %v449 = vshll.u32 %v365, 16
        %v451 = vor.u32 %v448, %v449
        %v452 = vrot.slane %v448, 4
        %v454 = vshrl.u32 %v366, 16
        %v456 = vrot.slane %v454, 7
        %v457 = vshll.u32 %v366, 16
        %v459 = vor.u32 %v456, %v457
        %v460 = vsel %vm393, %v452, %v459
        %v461 = vrot.slane %v456, 4
        %v463 = vshrl.u32 %v367, 16
        %v465 = vrot.slane %v463, 7
        %v466 = vshll.u32 %v367, 16
        %v468 = vor.u32 %v465, %v466
        %v469 = vrot.slane %v465, 4
        %v471 = vshrl.u32 %v368, 16
        %v473 = vrot.slane %v471, 7
        %v474 = vshll.u32 %v368, 16
        %v476 = vor.u32 %v473, %v474
        %v477 = vsel %vm393, %v469, %v476
        %v478 = vrot.slane %v473, 4
        %v480 = vshrl.u32 %v369, 16
        %v482 = vrot.slane %v480, 7
        %v483 = vshll.u32 %v369, 16
        %v485 = vor.u32 %v482, %v483
        %v486 = vrot.slane %v482, 4
        %v488 = vshrl.u32 %v370, 16
        %v490 = vrot.slane %v488, 7
        %v491 = vshll.u32 %v370, 16
        %v493 = vor.u32 %v490, %v491
        %v494 = vsel %vm393, %v486, %v493
        %v495 = vrot.slane %v490, 4
        %v497 = vshrl.u32 %v371, 16
        %v499 = vrot.slane %v497, 7
        %v500 = vshll.u32 %v371, 16
        %v502 = vor.u32 %v499, %v500
        %v503 = vrot.slane %v499, 4
        %v505 = vshrl.u32 %v372, 16
        %v507 = vrot.slane %v505, 7
        %v508 = vshll.u32 %v372, 16
        %v510 = vor.u32 %v507, %v508
        %v511 = vsel %vm393, %v503, %v510
        %v512 = vrot.slane %v507, 4
        %v514 = vshrl.u32 %v373, 16
        %v516 = vrot.slane %v514, 7
        %v517 = vshll.u32 %v373, 16
        %v519 = vor.u32 %v516, %v517
        %v520 = vrot.slane %v516, 4
        %v522 = vshrl.u32 %v374, 16
        %v524 = vrot.slane %v522, 7
        %v525 = vshll.u32 %v374, 16
        %v527 = vor.u32 %v524, %v525
        %v528 = vsel %vm393, %v520, %v527
        %v529 = vrot.slane %v524, 4
        %v531 = vshrl.u32 %v375, 16
        %v533 = vrot.slane %v531, 7
        %v534 = vshll.u32 %v375, 16
        %v536 = vor.u32 %v533, %v534
        %v537 = vrot.slane %v533, 4
        %v539 = vshrl.u32 %v376, 16
        %v541 = vrot.slane %v539, 7
        %v542 = vshll.u32 %v376, 16
        %v544 = vor.u32 %v541, %v542
        %v545 = vsel %vm393, %v537, %v544
        %v546 = vrot.slane %v541, 4
        %v548 = vshrl.u32 %v377, 16
        %v550 = vrot.slane %v548, 7
        %v551 = vshll.u32 %v377, 16
        %v553 = vor.u32 %v550, %v551
        %v554 = vrot.slane %v550, 4
        %v556 = vshrl.u32 %v378, 16
        %v558 = vrot.slane %v556, 7
        %v559 = vshll.u32 %v378, 16
        %v561 = vor.u32 %v558, %v559
        %v562 = vsel %vm393, %v554, %v561
        %v563 = vrot.slane %v558, 4
        %v565 = vshrl.u32 %v379, 16
        %v567 = vrot.slane %v565, 7
        %v568 = vshll.u32 %v379, 16
        %v570 = vor.u32 %v567, %v568
        %v571 = vrot.slane %v567, 4
        %v573 = vshrl.u32 %v380, 16
        %v575 = vrot.slane %v573, 7
        %v576 = vshll.u32 %v380, 16
        %v578 = vor.u32 %v575, %v576
        %v579 = vsel %vm393, %v571, %v578
        %v580 = vrot.slane %v575, 4
        %v582 = vshrl.u32 %v381, 16
        %v584 = vrot.slane %v582, 7
        %v585 = vshll.u32 %v381, 16
        %v587 = vor.u32 %v584, %v585
        %v588 = vrot.slane %v584, 4
        %v590 = vshrl.u32 %v382, 16
        %v592 = vrot.slane %v590, 7
        %v593 = vshll.u32 %v382, 16
        %v595 = vor.u32 %v592, %v593
        %v596 = vsel %vm393, %v588, %v595
        %v597 = vrot.slane %v592, 4
        %v599 = vshrl.u32 %v383, 16
        %v601 = vrot.slane %v599, 7
        %v602 = vshll.u32 %v383, 16
        %v604 = vor.u32 %v601, %v602
        %v605 = vrot.slane %v601, 4
        %v607 = vshrl.u32 %v384, 16
        %v609 = vrot.slane %v607, 7
        %v610 = vshll.u32 %v384, 16
        %v612 = vor.u32 %v609, %v610
        %v613 = vsel %vm393, %v605, %v612
        %v614 = vrot.slane %v609, 4
        %v616 = vshrl.u32 %v385, 16
        %v618 = vrot.slane %v616, 7
        %v619 = vshll.u32 %v385, 16
        %v621 = vor.u32 %v618, %v619
        %v622 = vrot.slane %v618, 4
        %v624 = vshrl.u32 %v386, 16
        %v626 = vrot.slane %v624, 7
        %v627 = vshll.u32 %v386, 16
        %v629 = vor.u32 %v626, %v627
        %v630 = vsel %vm393, %v622, %v629
        %v631 = vrot.slane %v626, 4
        %v633 = vshrl.u32 %v387, 16
        %v635 = vrot.slane %v633, 7
        %v636 = vshll.u32 %v387, 16
        %v638 = vor.u32 %v635, %v636
        %v639 = vrot.slane %v635, 4
        %v641 = vshrl.u32 %v388, 16
        %v643 = vrot.slane %v641, 7
        %v644 = vshll.u32 %v388, 16
        %v646 = vor.u32 %v643, %v644
        %v647 = vsel %vm393, %v639, %v646
        %v648 = vrot.slane %v643, 4
        %v650 = vshrl.u32 %v389, 16
        %v652 = vrot.slane %v650, 7
        %v653 = vshll.u32 %v389, 16
        %v655 = vor.u32 %v652, %v653
        %v656 = vrot.slane %v652, 4
        %v658 = vshrl.u32 %v390, 16
        %v660 = vrot.slane %v658, 7
        %v661 = vshll.u32 %v390, 16
        %v663 = vor.u32 %v660, %v661
        %v664 = vsel %vm393, %v656, %v663
        %v665 = vrot.slane %v660, 4
        %s714 = scalar_lea.vmem [#allocation2], 12
        %vm715 = vcmask 257024
        %vm716 = vsmask.f32 7938
        %vm717 = vmand %vm715, %vm716
        %v718 = vld [vmem:[%s714] sm:$0xf]
        %v719 = vsel %vm717, %v400, %v718
        %720 = vst [vmem:[%s714] sm:$0xf] %v719
        %vm721 = vcmask 257024
        %722 = vst.msk [vmem:[%s714 + $0x4] sm:$0xf] %vm721, %v409
        %vm723 = vcmask 253952
        %vm724 = vmand %vm723, %vm391
        %v725 = vld [vmem:[%s714 + $0x8] sm:$0x1]
        %v726 = vsel %vm724, %v410, %v725
        %727 = vst [vmem:[%s714 + $0x8] sm:$0x1] %v726
        %v728 = vld [vmem:[%s714 + $0xc] sm:$0xf]
        %v729 = vsel %vm717, %v417, %v728
        %730 = vst [vmem:[%s714 + $0xc] sm:$0xf] %v729
        %731 = vst.msk [vmem:[%s714 + $0x10] sm:$0xf] %vm721, %v426
        %v732 = vld [vmem:[%s714 + $0x14] sm:$0x1]
        %v733 = vsel %vm724, %v427, %v732
        %734 = vst [vmem:[%s714 + $0x14] sm:$0x1] %v733
        %v735 = vld [vmem:[%s714 + $0x18] sm:$0xf]
        %v736 = vsel %vm717, %v434, %v735
        %737 = vst [vmem:[%s714 + $0x18] sm:$0xf] %v736
        %738 = vst.msk [vmem:[%s714 + $0x1c] sm:$0xf] %vm721, %v443
        %v739 = vld [vmem:[%s714 + $0x20] sm:$0x1]
        %v740 = vsel %vm724, %v444, %v739
        %741 = vst [vmem:[%s714 + $0x20] sm:$0x1] %v740
        %v742 = vld [vmem:[%s714 + $0x24] sm:$0xf]
        %v743 = vsel %vm717, %v451, %v742
        %744 = vst [vmem:[%s714 + $0x24] sm:$0xf] %v743
        %745 = vst.msk [vmem:[%s714 + $0x28] sm:$0xf] %vm721, %v460
        %v746 = vld [vmem:[%s714 + $0x2c] sm:$0x1]
        %v747 = vsel %vm724, %v461, %v746
        %748 = vst [vmem:[%s714 + $0x2c] sm:$0x1] %v747
        %v749 = vld [vmem:[%s714 + $0x30] sm:$0xf]
        %v750 = vsel %vm717, %v468, %v749
        %751 = vst [vmem:[%s714 + $0x30] sm:$0xf] %v750
        %752 = vst.msk [vmem:[%s714 + $0x34] sm:$0xf] %vm721, %v477
        %v753 = vld [vmem:[%s714 + $0x38] sm:$0x1]
        %v754 = vsel %vm724, %v478, %v753
        %755 = vst [vmem:[%s714 + $0x38] sm:$0x1] %v754
        %v756 = vld [vmem:[%s714 + $0x3c] sm:$0xf]
        %v757 = vsel %vm717, %v485, %v756
        %758 = vst [vmem:[%s714 + $0x3c] sm:$0xf] %v757
        %759 = vst.msk [vmem:[%s714 + $0x40] sm:$0xf] %vm721, %v494
        %v760 = vld [vmem:[%s714 + $0x44] sm:$0x1]
        %v761 = vsel %vm724, %v495, %v760
        %762 = vst [vmem:[%s714 + $0x44] sm:$0x1] %v761
        %v763 = vld [vmem:[%s714 + $0x48] sm:$0xf]
        %v764 = vsel %vm717, %v502, %v763
        %765 = vst [vmem:[%s714 + $0x48] sm:$0xf] %v764
        %766 = vst.msk [vmem:[%s714 + $0x4c] sm:$0xf] %vm721, %v511
        %v767 = vld [vmem:[%s714 + $0x50] sm:$0x1]
        %v768 = vsel %vm724, %v512, %v767
        %769 = vst [vmem:[%s714 + $0x50] sm:$0x1] %v768
        %v770 = vld [vmem:[%s714 + $0x54] sm:$0xf]
        %v771 = vsel %vm717, %v519, %v770
        %772 = vst [vmem:[%s714 + $0x54] sm:$0xf] %v771
        %773 = vst.msk [vmem:[%s714 + $0x58] sm:$0xf] %vm721, %v528
        %v774 = vld [vmem:[%s714 + $0x5c] sm:$0x1]
        %v775 = vsel %vm724, %v529, %v774
        %776 = vst [vmem:[%s714 + $0x5c] sm:$0x1] %v775
        %v777 = vld [vmem:[%s714 + $0x60] sm:$0xf]
        %v778 = vsel %vm717, %v536, %v777
        %779 = vst [vmem:[%s714 + $0x60] sm:$0xf] %v778
        %780 = vst.msk [vmem:[%s714 + $0x64] sm:$0xf] %vm721, %v545
        %v781 = vld [vmem:[%s714 + $0x68] sm:$0x1]
        %v782 = vsel %vm724, %v546, %v781
        %783 = vst [vmem:[%s714 + $0x68] sm:$0x1] %v782
        %v784 = vld [vmem:[%s714 + $0x6c] sm:$0xf]
        %v785 = vsel %vm717, %v553, %v784
        %786 = vst [vmem:[%s714 + $0x6c] sm:$0xf] %v785
        %787 = vst.msk [vmem:[%s714 + $0x70] sm:$0xf] %vm721, %v562
        %v788 = vld [vmem:[%s714 + $0x74] sm:$0x1]
        %v789 = vsel %vm724, %v563, %v788
        %790 = vst [vmem:[%s714 + $0x74] sm:$0x1] %v789
        %v791 = vld [vmem:[%s714 + $0x78] sm:$0xf]
        %v792 = vsel %vm717, %v570, %v791
        %793 = vst [vmem:[%s714 + $0x78] sm:$0xf] %v792
        %794 = vst.msk [vmem:[%s714 + $0x7c] sm:$0xf] %vm721, %v579
        %v795 = vld [vmem:[%s714 + $0x80] sm:$0x1]
        %v796 = vsel %vm724, %v580, %v795
        %797 = vst [vmem:[%s714 + $0x80] sm:$0x1] %v796
        %v798 = vld [vmem:[%s714 + $0x84] sm:$0xf]
        %v799 = vsel %vm717, %v587, %v798
        %800 = vst [vmem:[%s714 + $0x84] sm:$0xf] %v799
        %801 = vst.msk [vmem:[%s714 + $0x88] sm:$0xf] %vm721, %v596
        %v802 = vld [vmem:[%s714 + $0x8c] sm:$0x1]
        %v803 = vsel %vm724, %v597, %v802
        %804 = vst [vmem:[%s714 + $0x8c] sm:$0x1] %v803
        %v805 = vld [vmem:[%s714 + $0x90] sm:$0xf]
        %v806 = vsel %vm717, %v604, %v805
        %807 = vst [vmem:[%s714 + $0x90] sm:$0xf] %v806
        %808 = vst.msk [vmem:[%s714 + $0x94] sm:$0xf] %vm721, %v613
        %v809 = vld [vmem:[%s714 + $0x98] sm:$0x1]
        %v810 = vsel %vm724, %v614, %v809
        %811 = vst [vmem:[%s714 + $0x98] sm:$0x1] %v810
        %v812 = vld [vmem:[%s714 + $0x9c] sm:$0xf]
        %v813 = vsel %vm717, %v621, %v812
        %814 = vst [vmem:[%s714 + $0x9c] sm:$0xf] %v813
        %815 = vst.msk [vmem:[%s714 + $0xa0] sm:$0xf] %vm721, %v630
        %v816 = vld [vmem:[%s714 + $0xa4] sm:$0x1]
        %v817 = vsel %vm724, %v631, %v816
        %818 = vst [vmem:[%s714 + $0xa4] sm:$0x1] %v817
        %v819 = vld [vmem:[%s714 + $0xa8] sm:$0xf]
        %v820 = vsel %vm717, %v638, %v819
        %821 = vst [vmem:[%s714 + $0xa8] sm:$0xf] %v820
        %822 = vst.msk [vmem:[%s714 + $0xac] sm:$0xf] %vm721, %v647
        %v823 = vld [vmem:[%s714 + $0xb0] sm:$0x1]
        %v824 = vsel %vm724, %v648, %v823
        %825 = vst [vmem:[%s714 + $0xb0] sm:$0x1] %v824
        %v826 = vld [vmem:[%s714 + $0xb4] sm:$0xf]
        %v827 = vsel %vm717, %v655, %v826
        %828 = vst [vmem:[%s714 + $0xb4] sm:$0xf] %v827
        %829 = vst.msk [vmem:[%s714 + $0xb8] sm:$0xf] %vm721, %v664
        %v830 = vld [vmem:[%s714 + $0xbc] sm:$0x1]
        %v831 = vsel %vm724, %v665, %v830
        %832 = vst [vmem:[%s714 + $0xbc] sm:$0x1] %v831
        %v833 = vld [vmem:[%s301] sm:$0xf]
        %v834 = vld [vmem:[%s301 + $0x4] sm:$0xf]
        %v835 = vld [vmem:[%s301 + $0x8] sm:$0xf]
        %v836 = vld [vmem:[%s301 + $0xc] sm:$0xf]
        %v837 = vld [vmem:[%s301 + $0x10] sm:$0xf]
        %v838 = vld [vmem:[%s301 + $0x14] sm:$0xf]
        %v839 = vld [vmem:[%s301 + $0x18] sm:$0xf]
        %v840 = vld [vmem:[%s301 + $0x1c] sm:$0xf]
        %v841 = vld [vmem:[%s301 + $0x20] sm:$0xf]
        %v842 = vld [vmem:[%s301 + $0x24] sm:$0xf]
        %v843 = vld [vmem:[%s301 + $0x28] sm:$0xf]
        %v844 = vld [vmem:[%s301 + $0x2c] sm:$0xf]
        %v845 = vld [vmem:[%s301 + $0x30] sm:$0xf]
        %v846 = vld [vmem:[%s301 + $0x34] sm:$0xf]
        %v847 = vld [vmem:[%s301 + $0x38] sm:$0xf]
        %v848 = vld [vmem:[%s301 + $0x3c] sm:$0xf]
        %v849 = vld [vmem:[%s301 + $0x40] sm:$0xf]
        %v850 = vld [vmem:[%s301 + $0x44] sm:$0xf]
        %v851 = vld [vmem:[%s301 + $0x48] sm:$0xf]
        %v852 = vld [vmem:[%s301 + $0x4c] sm:$0xf]
        %v853 = vld [vmem:[%s301 + $0x50] sm:$0xf]
        %v854 = vld [vmem:[%s301 + $0x54] sm:$0xf]
        %v855 = vld [vmem:[%s301 + $0x58] sm:$0xf]
        %v856 = vld [vmem:[%s301 + $0x5c] sm:$0xf]
        %v857 = vld [vmem:[%s301 + $0x60] sm:$0xf]
        %v858 = vld [vmem:[%s301 + $0x64] sm:$0xf]
        %v859 = vld [vmem:[%s301 + $0x68] sm:$0xf]
        %v860 = vld [vmem:[%s301 + $0x6c] sm:$0xf]
        %v861 = vld [vmem:[%s301 + $0x70] sm:$0xf]
        %v862 = vld [vmem:[%s301 + $0x74] sm:$0xf]
        %v863 = vld [vmem:[%s301 + $0x78] sm:$0xf]
        %v864 = vld [vmem:[%s301 + $0x7c] sm:$0xf]
        %v866 = vshrl.u32 %v833, 16
        %v868 = vrot.slane %v866, 7
        %v869 = vshll.u32 %v833, 16
        %v871 = vor.u32 %v868, %v869
        %v872 = vrot.slane %v868, 4
        %v874 = vshrl.u32 %v834, 16
        %v876 = vrot.slane %v874, 7
        %v877 = vshll.u32 %v834, 16
        %v879 = vor.u32 %v876, %v877
        %v880 = vsel %vm393, %v872, %v879
        %v881 = vrot.slane %v876, 4
        %v883 = vshrl.u32 %v835, 16
        %v885 = vrot.slane %v883, 7
        %v886 = vshll.u32 %v835, 16
        %v888 = vor.u32 %v885, %v886
        %v889 = vrot.slane %v885, 4
        %v891 = vshrl.u32 %v836, 16
        %v893 = vrot.slane %v891, 7
        %v894 = vshll.u32 %v836, 16
        %v896 = vor.u32 %v893, %v894
        %v897 = vsel %vm393, %v889, %v896
        %v898 = vrot.slane %v893, 4
        %v900 = vshrl.u32 %v837, 16
        %v902 = vrot.slane %v900, 7
        %v903 = vshll.u32 %v837, 16
        %v905 = vor.u32 %v902, %v903
        %v906 = vrot.slane %v902, 4
        %v908 = vshrl.u32 %v838, 16
        %v910 = vrot.slane %v908, 7
        %v911 = vshll.u32 %v838, 16
        %v913 = vor.u32 %v910, %v911
        %v914 = vsel %vm393, %v906, %v913
        %v915 = vrot.slane %v910, 4
        %v917 = vshrl.u32 %v839, 16
        %v919 = vrot.slane %v917, 7
        %v920 = vshll.u32 %v839, 16
        %v922 = vor.u32 %v919, %v920
        %v923 = vrot.slane %v919, 4
        %v925 = vshrl.u32 %v840, 16
        %v927 = vrot.slane %v925, 7
        %v928 = vshll.u32 %v840, 16
        %v930 = vor.u32 %v927, %v928
        %v931 = vsel %vm393, %v923, %v930
        %v932 = vrot.slane %v927, 4
        %v934 = vshrl.u32 %v841, 16
        %v936 = vrot.slane %v934, 7
        %v937 = vshll.u32 %v841, 16
        %v939 = vor.u32 %v936, %v937
        %v940 = vrot.slane %v936, 4
        %v942 = vshrl.u32 %v842, 16
        %v944 = vrot.slane %v942, 7
        %v945 = vshll.u32 %v842, 16
        %v947 = vor.u32 %v944, %v945
        %v948 = vsel %vm393, %v940, %v947
        %v949 = vrot.slane %v944, 4
        %v951 = vshrl.u32 %v843, 16
        %v953 = vrot.slane %v951, 7
        %v954 = vshll.u32 %v843, 16
        %v956 = vor.u32 %v953, %v954
        %v957 = vrot.slane %v953, 4
        %v959 = vshrl.u32 %v844, 16
        %v961 = vrot.slane %v959, 7
        %v962 = vshll.u32 %v844, 16
        %v964 = vor.u32 %v961, %v962
        %v965 = vsel %vm393, %v957, %v964
        %v966 = vrot.slane %v961, 4
        %v968 = vshrl.u32 %v845, 16
        %v970 = vrot.slane %v968, 7
        %v971 = vshll.u32 %v845, 16
        %v973 = vor.u32 %v970, %v971
        %v974 = vrot.slane %v970, 4
        %v976 = vshrl.u32 %v846, 16
        %v978 = vrot.slane %v976, 7
        %v979 = vshll.u32 %v846, 16
        %v981 = vor.u32 %v978, %v979
        %v982 = vsel %vm393, %v974, %v981
        %v983 = vrot.slane %v978, 4
        %v985 = vshrl.u32 %v847, 16
        %v987 = vrot.slane %v985, 7
        %v988 = vshll.u32 %v847, 16
        %v990 = vor.u32 %v987, %v988
        %v991 = vrot.slane %v987, 4
        %v993 = vshrl.u32 %v848, 16
        %v995 = vrot.slane %v993, 7
        %v996 = vshll.u32 %v848, 16
        %v998 = vor.u32 %v995, %v996
        %v999 = vsel %vm393, %v991, %v998
        %v1000 = vrot.slane %v995, 4
        %v1002 = vshrl.u32 %v849, 16
        %v1004 = vrot.slane %v1002, 7
        %v1005 = vshll.u32 %v849, 16
        %v1007 = vor.u32 %v1004, %v1005
        %v1008 = vrot.slane %v1004, 4
        %v1010 = vshrl.u32 %v850, 16
        %v1012 = vrot.slane %v1010, 7
        %v1013 = vshll.u32 %v850, 16
        %v1015 = vor.u32 %v1012, %v1013
        %v1016 = vsel %vm393, %v1008, %v1015
        %v1017 = vrot.slane %v1012, 4
        %v1019 = vshrl.u32 %v851, 16
        %v1021 = vrot.slane %v1019, 7
        %v1022 = vshll.u32 %v851, 16
        %v1024 = vor.u32 %v1021, %v1022
        %v1025 = vrot.slane %v1021, 4
        %v1027 = vshrl.u32 %v852, 16
        %v1029 = vrot.slane %v1027, 7
        %v1030 = vshll.u32 %v852, 16
        %v1032 = vor.u32 %v1029, %v1030
        %v1033 = vsel %vm393, %v1025, %v1032
        %v1034 = vrot.slane %v1029, 4
        %v1036 = vshrl.u32 %v853, 16
        %v1038 = vrot.slane %v1036, 7
        %v1039 = vshll.u32 %v853, 16
        %v1041 = vor.u32 %v1038, %v1039
        %v1042 = vrot.slane %v1038, 4
        %v1044 = vshrl.u32 %v854, 16
        %v1046 = vrot.slane %v1044, 7
        %v1047 = vshll.u32 %v854, 16
        %v1049 = vor.u32 %v1046, %v1047
        %v1050 = vsel %vm393, %v1042, %v1049
        %v1051 = vrot.slane %v1046, 4
        %v1053 = vshrl.u32 %v855, 16
        %v1055 = vrot.slane %v1053, 7
        %v1056 = vshll.u32 %v855, 16
        %v1058 = vor.u32 %v1055, %v1056
        %v1059 = vrot.slane %v1055, 4
        %v1061 = vshrl.u32 %v856, 16
        %v1063 = vrot.slane %v1061, 7
        %v1064 = vshll.u32 %v856, 16
        %v1066 = vor.u32 %v1063, %v1064
        %v1067 = vsel %vm393, %v1059, %v1066
        %v1068 = vrot.slane %v1063, 4
        %v1070 = vshrl.u32 %v857, 16
        %v1072 = vrot.slane %v1070, 7
        %v1073 = vshll.u32 %v857, 16
        %v1075 = vor.u32 %v1072, %v1073
        %v1076 = vrot.slane %v1072, 4
        %v1078 = vshrl.u32 %v858, 16
        %v1080 = vrot.slane %v1078, 7
        %v1081 = vshll.u32 %v858, 16
        %v1083 = vor.u32 %v1080, %v1081
        %v1084 = vsel %vm393, %v1076, %v1083
        %v1085 = vrot.slane %v1080, 4
        %v1087 = vshrl.u32 %v859, 16
        %v1089 = vrot.slane %v1087, 7
        %v1090 = vshll.u32 %v859, 16
        %v1092 = vor.u32 %v1089, %v1090
        %v1093 = vrot.slane %v1089, 4
        %v1095 = vshrl.u32 %v860, 16
        %v1097 = vrot.slane %v1095, 7
        %v1098 = vshll.u32 %v860, 16
        %v1100 = vor.u32 %v1097, %v1098
        %v1101 = vsel %vm393, %v1093, %v1100
        %v1102 = vrot.slane %v1097, 4
        %v1104 = vshrl.u32 %v861, 16
        %v1106 = vrot.slane %v1104, 7
        %v1107 = vshll.u32 %v861, 16
        %v1109 = vor.u32 %v1106, %v1107
        %v1110 = vrot.slane %v1106, 4
        %v1112 = vshrl.u32 %v862, 16
        %v1114 = vrot.slane %v1112, 7
        %v1115 = vshll.u32 %v862, 16
        %v1117 = vor.u32 %v1114, %v1115
        %v1118 = vsel %vm393, %v1110, %v1117
        %v1119 = vrot.slane %v1114, 4
        %v1121 = vshrl.u32 %v863, 16
        %v1123 = vrot.slane %v1121, 7
        %v1124 = vshll.u32 %v863, 16
        %v1126 = vor.u32 %v1123, %v1124
        %v1127 = vrot.slane %v1123, 4
        %v1129 = vshrl.u32 %v864, 16
        %v1131 = vrot.slane %v1129, 7
        %v1132 = vshll.u32 %v864, 16
        %v1134 = vor.u32 %v1131, %v1132
        %v1135 = vsel %vm393, %v1127, %v1134
        %v1136 = vrot.slane %v1131, 4
        %1137 = vrot.lane.b32.xlu0 %v871, 32
        %v1138 = vpop.permute.xlu0 %1137
        %1139 = vrot.lane.b32.xlu0 %v880, 32
        %v1140 = vpop.permute.xlu0 %1139
        %1141 = vrot.lane.b32.xlu0 %v881, 32
        %v1142 = vpop.permute.xlu0 %1141
        %1143 = vrot.lane.b32.xlu0 %v888, 32
        %v1144 = vpop.permute.xlu0 %1143
        %1145 = vrot.lane.b32.xlu0 %v897, 32
        %v1146 = vpop.permute.xlu0 %1145
        %1147 = vrot.lane.b32.xlu0 %v898, 32
        %v1148 = vpop.permute.xlu0 %1147
        %1149 = vrot.lane.b32.xlu0 %v905, 32
        %v1150 = vpop.permute.xlu0 %1149
        %1151 = vrot.lane.b32.xlu0 %v914, 32
        %v1152 = vpop.permute.xlu0 %1151
        %1153 = vrot.lane.b32.xlu0 %v915, 32
        %v1154 = vpop.permute.xlu0 %1153
        %1155 = vrot.lane.b32.xlu0 %v922, 32
        %v1156 = vpop.permute.xlu0 %1155
        %1157 = vrot.lane.b32.xlu0 %v931, 32
        %v1158 = vpop.permute.xlu0 %1157
        %1159 = vrot.lane.b32.xlu0 %v932, 32
        %v1160 = vpop.permute.xlu0 %1159
        %1161 = vrot.lane.b32.xlu0 %v939, 32
        %v1162 = vpop.permute.xlu0 %1161
        %1163 = vrot.lane.b32.xlu0 %v948, 32
        %v1164 = vpop.permute.xlu0 %1163
        %1165 = vrot.lane.b32.xlu0 %v949, 32
        %v1166 = vpop.permute.xlu0 %1165
        %1167 = vrot.lane.b32.xlu0 %v956, 32
        %v1168 = vpop.permute.xlu0 %1167
        %1169 = vrot.lane.b32.xlu0 %v965, 32
        %v1170 = vpop.permute.xlu0 %1169
        %1171 = vrot.lane.b32.xlu0 %v966, 32
        %v1172 = vpop.permute.xlu0 %1171
        %1173 = vrot.lane.b32.xlu0 %v973, 32
        %v1174 = vpop.permute.xlu0 %1173
        %1175 = vrot.lane.b32.xlu0 %v982, 32
        %v1176 = vpop.permute.xlu0 %1175
        %1177 = vrot.lane.b32.xlu0 %v983, 32
        %v1178 = vpop.permute.xlu0 %1177
        %1179 = vrot.lane.b32.xlu0 %v990, 32
        %v1180 = vpop.permute.xlu0 %1179
        %1181 = vrot.lane.b32.xlu0 %v999, 32
        %v1182 = vpop.permute.xlu0 %1181
        %1183 = vrot.lane.b32.xlu0 %v1000, 32
        %v1184 = vpop.permute.xlu0 %1183
        %1185 = vrot.lane.b32.xlu0 %v1007, 32
        %v1186 = vpop.permute.xlu0 %1185
        %1187 = vrot.lane.b32.xlu0 %v1016, 32
        %v1188 = vpop.permute.xlu0 %1187
        %1189 = vrot.lane.b32.xlu0 %v1017, 32
        %v1190 = vpop.permute.xlu0 %1189
        %1191 = vrot.lane.b32.xlu0 %v1024, 32
        %v1192 = vpop.permute.xlu0 %1191
        %1193 = vrot.lane.b32.xlu0 %v1033, 32
        %v1194 = vpop.permute.xlu0 %1193
        %1195 = vrot.lane.b32.xlu0 %v1034, 32
        %v1196 = vpop.permute.xlu0 %1195
        %1197 = vrot.lane.b32.xlu0 %v1041, 32
        %v1198 = vpop.permute.xlu0 %1197
        %1199 = vrot.lane.b32.xlu0 %v1050, 32
        %v1200 = vpop.permute.xlu0 %1199
        %1201 = vrot.lane.b32.xlu0 %v1051, 32
        %v1202 = vpop.permute.xlu0 %1201
        %1203 = vrot.lane.b32.xlu0 %v1058, 32
        %v1204 = vpop.permute.xlu0 %1203
        %1205 = vrot.lane.b32.xlu0 %v1067, 32
        %v1206 = vpop.permute.xlu0 %1205
        %1207 = vrot.lane.b32.xlu0 %v1068, 32
        %v1208 = vpop.permute.xlu0 %1207
        %1209 = vrot.lane.b32.xlu0 %v1075, 32
        %v1210 = vpop.permute.xlu0 %1209
        %1211 = vrot.lane.b32.xlu0 %v1084, 32
        %v1212 = vpop.permute.xlu0 %1211
        %1213 = vrot.lane.b32.xlu0 %v1085, 32
        %v1214 = vpop.permute.xlu0 %1213
        %1215 = vrot.lane.b32.xlu0 %v1092, 32
        %v1216 = vpop.permute.xlu0 %1215
        %1217 = vrot.lane.b32.xlu0 %v1101, 32
        %v1218 = vpop.permute.xlu0 %1217
        %1219 = vrot.lane.b32.xlu0 %v1102, 32
        %v1220 = vpop.permute.xlu0 %1219
        %1221 = vrot.lane.b32.xlu0 %v1109, 32
        %v1222 = vpop.permute.xlu0 %1221
        %1223 = vrot.lane.b32.xlu0 %v1118, 32
        %v1224 = vpop.permute.xlu0 %1223
        %1225 = vrot.lane.b32.xlu0 %v1119, 32
        %v1226 = vpop.permute.xlu0 %1225
        %1227 = vrot.lane.b32.xlu0 %v1126, 32
        %v1228 = vpop.permute.xlu0 %1227
        %1229 = vrot.lane.b32.xlu0 %v1135, 32
        %v1230 = vpop.permute.xlu0 %1229
        %1231 = vrot.lane.b32.xlu0 %v1136, 32
        %v1232 = vpop.permute.xlu0 %1231
        %vm1281 = vcmask 290048
        %vm1282 = vmand %vm1281, %vm716
        %v1283 = vld [vmem:[%s714] sm:$0xf]
        %v1284 = vsel %vm1282, %v1138, %v1283
        %1285 = vst [vmem:[%s714] sm:$0xf] %v1284
        %vm1286 = vcmask 290048
        %1287 = vst.msk [vmem:[%s714 + $0x4] sm:$0xf] %vm1286, %v1140
        %vm1288 = vcmask 286976
        %vm1289 = vmand %vm1288, %vm391
        %v1290 = vld [vmem:[%s714 + $0x8] sm:$0x1]
        %v1291 = vsel %vm1289, %v1142, %v1290
        %1292 = vst [vmem:[%s714 + $0x8] sm:$0x1] %v1291
        %v1293 = vld [vmem:[%s714 + $0xc] sm:$0xf]
        %v1294 = vsel %vm1282, %v1144, %v1293
        %1295 = vst [vmem:[%s714 + $0xc] sm:$0xf] %v1294
        %1296 = vst.msk [vmem:[%s714 + $0x10] sm:$0xf] %vm1286, %v1146
        %v1297 = vld [vmem:[%s714 + $0x14] sm:$0x1]
        %v1298 = vsel %vm1289, %v1148, %v1297
        %1299 = vst [vmem:[%s714 + $0x14] sm:$0x1] %v1298
        %v1300 = vld [vmem:[%s714 + $0x18] sm:$0xf]
        %v1301 = vsel %vm1282, %v1150, %v1300
        %1302 = vst [vmem:[%s714 + $0x18] sm:$0xf] %v1301
        %1303 = vst.msk [vmem:[%s714 + $0x1c] sm:$0xf] %vm1286, %v1152
        %v1304 = vld [vmem:[%s714 + $0x20] sm:$0x1]
        %v1305 = vsel %vm1289, %v1154, %v1304
        %1306 = vst [vmem:[%s714 + $0x20] sm:$0x1] %v1305
        %v1307 = vld [vmem:[%s714 + $0x24] sm:$0xf]
        %v1308 = vsel %vm1282, %v1156, %v1307
        %1309 = vst [vmem:[%s714 + $0x24] sm:$0xf] %v1308
        %1310 = vst.msk [vmem:[%s714 + $0x28] sm:$0xf] %vm1286, %v1158
        %v1311 = vld [vmem:[%s714 + $0x2c] sm:$0x1]
        %v1312 = vsel %vm1289, %v1160, %v1311
        %1313 = vst [vmem:[%s714 + $0x2c] sm:$0x1] %v1312
        %v1314 = vld [vmem:[%s714 + $0x30] sm:$0xf]
        %v1315 = vsel %vm1282, %v1162, %v1314
        %1316 = vst [vmem:[%s714 + $0x30] sm:$0xf] %v1315
        %1317 = vst.msk [vmem:[%s714 + $0x34] sm:$0xf] %vm1286, %v1164
        %v1318 = vld [vmem:[%s714 + $0x38] sm:$0x1]
        %v1319 = vsel %vm1289, %v1166, %v1318
        %1320 = vst [vmem:[%s714 + $0x38] sm:$0x1] %v1319
        %v1321 = vld [vmem:[%s714 + $0x3c] sm:$0xf]
        %v1322 = vsel %vm1282, %v1168, %v1321
        %1323 = vst [vmem:[%s714 + $0x3c] sm:$0xf] %v1322
        %1324 = vst.msk [vmem:[%s714 + $0x40] sm:$0xf] %vm1286, %v1170
        %v1325 = vld [vmem:[%s714 + $0x44] sm:$0x1]
        %v1326 = vsel %vm1289, %v1172, %v1325
        %1327 = vst [vmem:[%s714 + $0x44] sm:$0x1] %v1326
        %v1328 = vld [vmem:[%s714 + $0x48] sm:$0xf]
        %v1329 = vsel %vm1282, %v1174, %v1328
        %1330 = vst [vmem:[%s714 + $0x48] sm:$0xf] %v1329
        %1331 = vst.msk [vmem:[%s714 + $0x4c] sm:$0xf] %vm1286, %v1176
        %v1332 = vld [vmem:[%s714 + $0x50] sm:$0x1]
        %v1333 = vsel %vm1289, %v1178, %v1332
        %1334 = vst [vmem:[%s714 + $0x50] sm:$0x1] %v1333
        %v1335 = vld [vmem:[%s714 + $0x54] sm:$0xf]
        %v1336 = vsel %vm1282, %v1180, %v1335
        %1337 = vst [vmem:[%s714 + $0x54] sm:$0xf] %v1336
        %1338 = vst.msk [vmem:[%s714 + $0x58] sm:$0xf] %vm1286, %v1182
        %v1339 = vld [vmem:[%s714 + $0x5c] sm:$0x1]
        %v1340 = vsel %vm1289, %v1184, %v1339
        %1341 = vst [vmem:[%s714 + $0x5c] sm:$0x1] %v1340
        %v1342 = vld [vmem:[%s714 + $0x60] sm:$0xf]
        %v1343 = vsel %vm1282, %v1186, %v1342
        %1344 = vst [vmem:[%s714 + $0x60] sm:$0xf] %v1343
        %1345 = vst.msk [vmem:[%s714 + $0x64] sm:$0xf] %vm1286, %v1188
        %v1346 = vld [vmem:[%s714 + $0x68] sm:$0x1]
        %v1347 = vsel %vm1289, %v1190, %v1346
        %1348 = vst [vmem:[%s714 + $0x68] sm:$0x1] %v1347
        %v1349 = vld [vmem:[%s714 + $0x6c] sm:$0xf]
        %v1350 = vsel %vm1282, %v1192, %v1349
        %1351 = vst [vmem:[%s714 + $0x6c] sm:$0xf] %v1350
        %1352 = vst.msk [vmem:[%s714 + $0x70] sm:$0xf] %vm1286, %v1194
        %v1353 = vld [vmem:[%s714 + $0x74] sm:$0x1]
        %v1354 = vsel %vm1289, %v1196, %v1353
        %1355 = vst [vmem:[%s714 + $0x74] sm:$0x1] %v1354
        %v1356 = vld [vmem:[%s714 + $0x78] sm:$0xf]
        %v1357 = vsel %vm1282, %v1198, %v1356
        %1358 = vst [vmem:[%s714 + $0x78] sm:$0xf] %v1357
        %1359 = vst.msk [vmem:[%s714 + $0x7c] sm:$0xf] %vm1286, %v1200
        %v1360 = vld [vmem:[%s714 + $0x80] sm:$0x1]
        %v1361 = vsel %vm1289, %v1202, %v1360
        %1362 = vst [vmem:[%s714 + $0x80] sm:$0x1] %v1361
        %v1363 = vld [vmem:[%s714 + $0x84] sm:$0xf]
        %v1364 = vsel %vm1282, %v1204, %v1363
        %1365 = vst [vmem:[%s714 + $0x84] sm:$0xf] %v1364
        %1366 = vst.msk [vmem:[%s714 + $0x88] sm:$0xf] %vm1286, %v1206
        %v1367 = vld [vmem:[%s714 + $0x8c] sm:$0x1]
        %v1368 = vsel %vm1289, %v1208, %v1367
        %1369 = vst [vmem:[%s714 + $0x8c] sm:$0x1] %v1368
        %v1370 = vld [vmem:[%s714 + $0x90] sm:$0xf]
        %v1371 = vsel %vm1282, %v1210, %v1370
        %1372 = vst [vmem:[%s714 + $0x90] sm:$0xf] %v1371
        %1373 = vst.msk [vmem:[%s714 + $0x94] sm:$0xf] %vm1286, %v1212
        %v1374 = vld [vmem:[%s714 + $0x98] sm:$0x1]
        %v1375 = vsel %vm1289, %v1214, %v1374
        %1376 = vst [vmem:[%s714 + $0x98] sm:$0x1] %v1375
        %v1377 = vld [vmem:[%s714 + $0x9c] sm:$0xf]
        %v1378 = vsel %vm1282, %v1216, %v1377
        %1379 = vst [vmem:[%s714 + $0x9c] sm:$0xf] %v1378
        %1380 = vst.msk [vmem:[%s714 + $0xa0] sm:$0xf] %vm1286, %v1218
        %v1381 = vld [vmem:[%s714 + $0xa4] sm:$0x1]
        %v1382 = vsel %vm1289, %v1220, %v1381
        %1383 = vst [vmem:[%s714 + $0xa4] sm:$0x1] %v1382
        %v1384 = vld [vmem:[%s714 + $0xa8] sm:$0xf]
        %v1385 = vsel %vm1282, %v1222, %v1384
        %1386 = vst [vmem:[%s714 + $0xa8] sm:$0xf] %v1385
        %1387 = vst.msk [vmem:[%s714 + $0xac] sm:$0xf] %vm1286, %v1224
        %v1388 = vld [vmem:[%s714 + $0xb0] sm:$0x1]
        %v1389 = vsel %vm1289, %v1226, %v1388
        %1390 = vst [vmem:[%s714 + $0xb0] sm:$0x1] %v1389
        %v1391 = vld [vmem:[%s714 + $0xb4] sm:$0xf]
        %v1392 = vsel %vm1282, %v1228, %v1391
        %1393 = vst [vmem:[%s714 + $0xb4] sm:$0xf] %v1392
        %1394 = vst.msk [vmem:[%s714 + $0xb8] sm:$0xf] %vm1286, %v1230
        %v1395 = vld [vmem:[%s714 + $0xbc] sm:$0x1]
        %v1396 = vsel %vm1289, %v1232, %v1395
        %1397 = vst [vmem:[%s714 + $0xbc] sm:$0x1] %v1396
        %v1398 = vld [vmem:[#allocation2] sm:$0xf]
        %v1399 = vld [vmem:[#allocation2 + $0x4] sm:$0xf]
        %v1400 = vld [vmem:[#allocation2 + $0xc] sm:$0xf]
        %v1401 = vld [vmem:[#allocation2 + $0x10] sm:$0xf]
        %v1402 = vld [vmem:[#allocation2 + $0x18] sm:$0xf]
        %v1403 = vld [vmem:[#allocation2 + $0x1c] sm:$0xf]
        %v1404 = vld [vmem:[#allocation2 + $0x24] sm:$0xf]
        %v1405 = vld [vmem:[#allocation2 + $0x28] sm:$0xf]
        %v1406 = vld [vmem:[#allocation2 + $0x30] sm:$0xf]
        %v1407 = vld [vmem:[#allocation2 + $0x34] sm:$0xf]
        %v1408 = vld [vmem:[#allocation2 + $0x3c] sm:$0xf]
        %v1409 = vld [vmem:[#allocation2 + $0x40] sm:$0xf]
        %v1410 = vld [vmem:[#allocation2 + $0x48] sm:$0xf]
        %v1411 = vld [vmem:[#allocation2 + $0x4c] sm:$0xf]
        %v1412 = vld [vmem:[#allocation2 + $0x54] sm:$0xf]
        %v1413 = vld [vmem:[#allocation2 + $0x58] sm:$0xf]
        %v1414 = vld [vmem:[#allocation2 + $0x60] sm:$0xf]
        %v1415 = vld [vmem:[#allocation2 + $0x64] sm:$0xf]
        %v1416 = vld [vmem:[#allocation2 + $0x6c] sm:$0xf]
        %v1417 = vld [vmem:[#allocation2 + $0x70] sm:$0xf]
        %v1418 = vld [vmem:[#allocation2 + $0x78] sm:$0xf]
        %v1419 = vld [vmem:[#allocation2 + $0x7c] sm:$0xf]
        %v1420 = vld [vmem:[#allocation2 + $0x84] sm:$0xf]
        %v1421 = vld [vmem:[#allocation2 + $0x88] sm:$0xf]
        %v1422 = vld [vmem:[#allocation2 + $0x90] sm:$0xf]
        %v1423 = vld [vmem:[#allocation2 + $0x94] sm:$0xf]
        %v1424 = vld [vmem:[#allocation2 + $0x9c] sm:$0xf]
        %v1425 = vld [vmem:[#allocation2 + $0xa0] sm:$0xf]
        %v1426 = vld [vmem:[#allocation2 + $0xa8] sm:$0xf]
        %v1427 = vld [vmem:[#allocation2 + $0xac] sm:$0xf]
        %v1428 = vld [vmem:[#allocation2 + $0xb4] sm:$0xf]
        %v1429 = vld [vmem:[#allocation2 + $0xb8] sm:$0xf]
        %1430 = vst.msk [vmem:[#allocation3] sm:$0xf] %vm303, %v1398
        %1431 = vst.msk [vmem:[#allocation3 + $0xc] sm:$0xf] %vm303, %v1399
        %1432 = vst.msk [vmem:[#allocation3 + $0x18] sm:$0xf] %vm303, %v1400
        %1433 = vst.msk [vmem:[#allocation3 + $0x24] sm:$0xf] %vm303, %v1401
        %1434 = vst.msk [vmem:[#allocation3 + $0x30] sm:$0xf] %vm303, %v1402
        %1435 = vst.msk [vmem:[#allocation3 + $0x3c] sm:$0xf] %vm303, %v1403
        %1436 = vst.msk [vmem:[#allocation3 + $0x48] sm:$0xf] %vm303, %v1404
        %1437 = vst.msk [vmem:[#allocation3 + $0x54] sm:$0xf] %vm303, %v1405
        %1438 = vst.msk [vmem:[#allocation3 + $0x60] sm:$0xf] %vm303, %v1406
        %1439 = vst.msk [vmem:[#allocation3 + $0x6c] sm:$0xf] %vm303, %v1407
        %1440 = vst.msk [vmem:[#allocation3 + $0x78] sm:$0xf] %vm303, %v1408
        %1441 = vst.msk [vmem:[#allocation3 + $0x84] sm:$0xf] %vm303, %v1409
        %1442 = vst.msk [vmem:[#allocation3 + $0x90] sm:$0xf] %vm303, %v1410
        %1443 = vst.msk [vmem:[#allocation3 + $0x9c] sm:$0xf] %vm303, %v1411
        %1444 = vst.msk [vmem:[#allocation3 + $0xa8] sm:$0xf] %vm303, %v1412
        %1445 = vst.msk [vmem:[#allocation3 + $0xb4] sm:$0xf] %vm303, %v1413
        %1446 = vst.msk [vmem:[#allocation3 + $0xc0] sm:$0xf] %vm303, %v1414
        %1447 = vst.msk [vmem:[#allocation3 + $0xcc] sm:$0xf] %vm303, %v1415
        %1448 = vst.msk [vmem:[#allocation3 + $0xd8] sm:$0xf] %vm303, %v1416
        %1449 = vst.msk [vmem:[#allocation3 + $0xe4] sm:$0xf] %vm303, %v1417
        %1450 = vst.msk [vmem:[#allocation3 + $0xf0] sm:$0xf] %vm303, %v1418
        %1451 = vst.msk [vmem:[#allocation3 + $0xfc] sm:$0xf] %vm303, %v1419
        %1452 = vst.msk [vmem:[#allocation3 + $0x108] sm:$0xf] %vm303, %v1420
        %1453 = vst.msk [vmem:[#allocation3 + $0x114] sm:$0xf] %vm303, %v1421
        %1454 = vst.msk [vmem:[#allocation3 + $0x120] sm:$0xf] %vm303, %v1422
        %1455 = vst.msk [vmem:[#allocation3 + $0x12c] sm:$0xf] %vm303, %v1423
        %1456 = vst.msk [vmem:[#allocation3 + $0x138] sm:$0xf] %vm303, %v1424
        %1457 = vst.msk [vmem:[#allocation3 + $0x144] sm:$0xf] %vm303, %v1425
        %1458 = vst.msk [vmem:[#allocation3 + $0x150] sm:$0xf] %vm303, %v1426
        %1459 = vst.msk [vmem:[#allocation3 + $0x15c] sm:$0xf] %vm303, %v1427
        %1460 = vst.msk [vmem:[#allocation3 + $0x168] sm:$0xf] %vm303, %v1428
        %1461 = vst.msk [vmem:[#allocation3 + $0x174] sm:$0xf] %vm303, %v1429
        %v1462 = vld [vmem:[#allocation2] sm:$0xf]
        %v1463 = vld [vmem:[#allocation2 + $0x4] sm:$0xf]
        %v1464 = vld [vmem:[#allocation2 + $0x8] sm:$0x1]
        %v1465 = vld [vmem:[#allocation2 + $0xc] sm:$0xf]
        %v1466 = vld [vmem:[#allocation2 + $0x10] sm:$0xf]
        %v1467 = vld [vmem:[#allocation2 + $0x14] sm:$0x1]
        %v1468 = vld [vmem:[#allocation2 + $0x18] sm:$0xf]
        %v1469 = vld [vmem:[#allocation2 + $0x1c] sm:$0xf]
        %v1470 = vld [vmem:[#allocation2 + $0x20] sm:$0x1]
        %v1471 = vld [vmem:[#allocation2 + $0x24] sm:$0xf]
        %v1472 = vld [vmem:[#allocation2 + $0x28] sm:$0xf]
        %v1473 = vld [vmem:[#allocation2 + $0x2c] sm:$0x1]
        %v1474 = vld [vmem:[#allocation2 + $0x30] sm:$0xf]
        %v1475 = vld [vmem:[#allocation2 + $0x34] sm:$0xf]
        %v1476 = vld [vmem:[#allocation2 + $0x38] sm:$0x1]
        %v1477 = vld [vmem:[#allocation2 + $0x3c] sm:$0xf]
        %v1478 = vld [vmem:[#allocation2 + $0x40] sm:$0xf]
        %v1479 = vld [vmem:[#allocation2 + $0x44] sm:$0x1]
        %v1480 = vld [vmem:[#allocation2 + $0x48] sm:$0xf]
        %v1481 = vld [vmem:[#allocation2 + $0x4c] sm:$0xf]
        %v1482 = vld [vmem:[#allocation2 + $0x50] sm:$0x1]
        %v1483 = vld [vmem:[#allocation2 + $0x54] sm:$0xf]
        %v1484 = vld [vmem:[#allocation2 + $0x58] sm:$0xf]
        %v1485 = vld [vmem:[#allocation2 + $0x5c] sm:$0x1]
        %v1486 = vld [vmem:[#allocation2 + $0x60] sm:$0xf]
        %v1487 = vld [vmem:[#allocation2 + $0x64] sm:$0xf]
        %v1488 = vld [vmem:[#allocation2 + $0x68] sm:$0x1]
        %v1489 = vld [vmem:[#allocation2 + $0x6c] sm:$0xf]
        %v1490 = vld [vmem:[#allocation2 + $0x70] sm:$0xf]
        %v1491 = vld [vmem:[#allocation2 + $0x74] sm:$0x1]
        %v1492 = vld [vmem:[#allocation2 + $0x78] sm:$0xf]
        %v1493 = vld [vmem:[#allocation2 + $0x7c] sm:$0xf]
        %v1494 = vld [vmem:[#allocation2 + $0x80] sm:$0x1]
        %v1495 = vld [vmem:[#allocation2 + $0x84] sm:$0xf]
        %v1496 = vld [vmem:[#allocation2 + $0x88] sm:$0xf]
        %v1497 = vld [vmem:[#allocation2 + $0x8c] sm:$0x1]
        %v1498 = vld [vmem:[#allocation2 + $0x90] sm:$0xf]
        %v1499 = vld [vmem:[#allocation2 + $0x94] sm:$0xf]
        %v1500 = vld [vmem:[#allocation2 + $0x98] sm:$0x1]
        %v1501 = vld [vmem:[#allocation2 + $0x9c] sm:$0xf]
        %v1502 = vld [vmem:[#allocation2 + $0xa0] sm:$0xf]
        %v1503 = vld [vmem:[#allocation2 + $0xa4] sm:$0x1]
        %v1504 = vld [vmem:[#allocation2 + $0xa8] sm:$0xf]
        %v1505 = vld [vmem:[#allocation2 + $0xac] sm:$0xf]
        %v1506 = vld [vmem:[#allocation2 + $0xb0] sm:$0x1]
        %v1507 = vld [vmem:[#allocation2 + $0xb4] sm:$0xf]
        %v1508 = vld [vmem:[#allocation2 + $0xb8] sm:$0xf]
        %v1509 = vld [vmem:[#allocation2 + $0xbc] sm:$0x1]
        %vm1510 = vsmask.f32 3328
        %vm1511 = vsmask.f32 7440
        %vm1512 = vmor %vm1510, %vm1511
        %v1514 = vshrl.u32 %v1462, 16
        %v1516 = vrot.slane %v1514, 4
        %v1517 = vshll.u32 %v1462, 16
        %v1519 = vrot.slane %v1517, 5
        %v1520 = vor.u32 %v1516, %v1519
        %v1521 = vrot.slane %v1520, 4
        %v1523 = vshll.u32 %v1463, 16
        %v1525 = vrot.slane %v1523, 5
        %v1526 = vsel %vm1512, %v1521, %v1525
        %v1527 = vshrl.u32 %v1463, 16
        %v1529 = vrot.slane %v1527, 4
        %v1530 = vor.u32 %v1529, %v1525
        %v1531 = vrot.slane %v1530, 4
        %v1533 = vshll.u32 %v1464, 16
        %v1535 = vrot.slane %v1533, 5
        %v1536 = vsel %vm1512, %v1531, %v1535
        %v1538 = vshrl.u32 %v1465, 16
        %v1540 = vrot.slane %v1538, 4
        %v1541 = vshll.u32 %v1465, 16
        %v1543 = vrot.slane %v1541, 5
        %v1544 = vor.u32 %v1540, %v1543
        %v1545 = vrot.slane %v1544, 4
        %v1547 = vshll.u32 %v1466, 16
        %v1549 = vrot.slane %v1547, 5
        %v1550 = vsel %vm1512, %v1545, %v1549
        %v1551 = vshrl.u32 %v1466, 16
        %v1553 = vrot.slane %v1551, 4
        %v1554 = vor.u32 %v1553, %v1549
        %v1555 = vrot.slane %v1554, 4
        %v1557 = vshll.u32 %v1467, 16
        %v1559 = vrot.slane %v1557, 5
        %v1560 = vsel %vm1512, %v1555, %v1559
        %v1562 = vshrl.u32 %v1468, 16
        %v1564 = vrot.slane %v1562, 4
        %v1565 = vshll.u32 %v1468, 16
        %v1567 = vrot.slane %v1565, 5
        %v1568 = vor.u32 %v1564, %v1567
        %v1569 = vrot.slane %v1568, 4
        %v1571 = vshll.u32 %v1469, 16
        %v1573 = vrot.slane %v1571, 5
        %v1574 = vsel %vm1512, %v1569, %v1573
        %v1575 = vshrl.u32 %v1469, 16
        %v1577 = vrot.slane %v1575, 4
        %v1578 = vor.u32 %v1577, %v1573
        %v1579 = vrot.slane %v1578, 4
        %v1581 = vshll.u32 %v1470, 16
        %v1583 = vrot.slane %v1581, 5
        %v1584 = vsel %vm1512, %v1579, %v1583
        %v1586 = vshrl.u32 %v1471, 16
        %v1588 = vrot.slane %v1586, 4
        %v1589 = vshll.u32 %v1471, 16
        %v1591 = vrot.slane %v1589, 5
        %v1592 = vor.u32 %v1588, %v1591
        %v1593 = vrot.slane %v1592, 4
        %v1595 = vshll.u32 %v1472, 16
        %v1597 = vrot.slane %v1595, 5
        %v1598 = vsel %vm1512, %v1593, %v1597
        %v1599 = vshrl.u32 %v1472, 16
        %v1601 = vrot.slane %v1599, 4
        %v1602 = vor.u32 %v1601, %v1597
        %v1603 = vrot.slane %v1602, 4
        %v1605 = vshll.u32 %v1473, 16
        %v1607 = vrot.slane %v1605, 5
        %v1608 = vsel %vm1512, %v1603, %v1607
        %v1610 = vshrl.u32 %v1474, 16
        %v1612 = vrot.slane %v1610, 4
        %v1613 = vshll.u32 %v1474, 16
        %v1615 = vrot.slane %v1613, 5
        %v1616 = vor.u32 %v1612, %v1615
        %v1617 = vrot.slane %v1616, 4
        %v1619 = vshll.u32 %v1475, 16
        %v1621 = vrot.slane %v1619, 5
        %v1622 = vsel %vm1512, %v1617, %v1621
        %v1623 = vshrl.u32 %v1475, 16
        %v1625 = vrot.slane %v1623, 4
        %v1626 = vor.u32 %v1625, %v1621
        %v1627 = vrot.slane %v1626, 4
        %v1629 = vshll.u32 %v1476, 16
        %v1631 = vrot.slane %v1629, 5
        %v1632 = vsel %vm1512, %v1627, %v1631
        %v1634 = vshrl.u32 %v1477, 16
        %v1636 = vrot.slane %v1634, 4
        %v1637 = vshll.u32 %v1477, 16
        %v1639 = vrot.slane %v1637, 5
        %v1640 = vor.u32 %v1636, %v1639
        %v1641 = vrot.slane %v1640, 4
        %v1643 = vshll.u32 %v1478, 16
        %v1645 = vrot.slane %v1643, 5
        %v1646 = vsel %vm1512, %v1641, %v1645
        %v1647 = vshrl.u32 %v1478, 16
        %v1649 = vrot.slane %v1647, 4
        %v1650 = vor.u32 %v1649, %v1645
        %v1651 = vrot.slane %v1650, 4
        %v1653 = vshll.u32 %v1479, 16
        %v1655 = vrot.slane %v1653, 5
        %v1656 = vsel %vm1512, %v1651, %v1655
        %v1658 = vshrl.u32 %v1480, 16
        %v1660 = vrot.slane %v1658, 4
        %v1661 = vshll.u32 %v1480, 16
        %v1663 = vrot.slane %v1661, 5
        %v1664 = vor.u32 %v1660, %v1663
        %v1665 = vrot.slane %v1664, 4
        %v1667 = vshll.u32 %v1481, 16
        %v1669 = vrot.slane %v1667, 5
        %v1670 = vsel %vm1512, %v1665, %v1669
        %v1671 = vshrl.u32 %v1481, 16
        %v1673 = vrot.slane %v1671, 4
        %v1674 = vor.u32 %v1673, %v1669
        %v1675 = vrot.slane %v1674, 4
        %v1677 = vshll.u32 %v1482, 16
        %v1679 = vrot.slane %v1677, 5
        %v1680 = vsel %vm1512, %v1675, %v1679
        %v1682 = vshrl.u32 %v1483, 16
        %v1684 = vrot.slane %v1682, 4
        %v1685 = vshll.u32 %v1483, 16
        %v1687 = vrot.slane %v1685, 5
        %v1688 = vor.u32 %v1684, %v1687
        %v1689 = vrot.slane %v1688, 4
        %v1691 = vshll.u32 %v1484, 16
        %v1693 = vrot.slane %v1691, 5
        %v1694 = vsel %vm1512, %v1689, %v1693
        %v1695 = vshrl.u32 %v1484, 16
        %v1697 = vrot.slane %v1695, 4
        %v1698 = vor.u32 %v1697, %v1693
        %v1699 = vrot.slane %v1698, 4
        %v1701 = vshll.u32 %v1485, 16
        %v1703 = vrot.slane %v1701, 5
        %v1704 = vsel %vm1512, %v1699, %v1703
        %v1706 = vshrl.u32 %v1486, 16
        %v1708 = vrot.slane %v1706, 4
        %v1709 = vshll.u32 %v1486, 16
        %v1711 = vrot.slane %v1709, 5
        %v1712 = vor.u32 %v1708, %v1711
        %v1713 = vrot.slane %v1712, 4
        %v1715 = vshll.u32 %v1487, 16
        %v1717 = vrot.slane %v1715, 5
        %v1718 = vsel %vm1512, %v1713, %v1717
        %v1719 = vshrl.u32 %v1487, 16
        %v1721 = vrot.slane %v1719, 4
        %v1722 = vor.u32 %v1721, %v1717
        %v1723 = vrot.slane %v1722, 4
        %v1725 = vshll.u32 %v1488, 16
        %v1727 = vrot.slane %v1725, 5
        %v1728 = vsel %vm1512, %v1723, %v1727
        %v1730 = vshrl.u32 %v1489, 16
        %v1732 = vrot.slane %v1730, 4
        %v1733 = vshll.u32 %v1489, 16
        %v1735 = vrot.slane %v1733, 5
        %v1736 = vor.u32 %v1732, %v1735
        %v1737 = vrot.slane %v1736, 4
        %v1739 = vshll.u32 %v1490, 16
        %v1741 = vrot.slane %v1739, 5
        %v1742 = vsel %vm1512, %v1737, %v1741
        %v1743 = vshrl.u32 %v1490, 16
        %v1745 = vrot.slane %v1743, 4
        %v1746 = vor.u32 %v1745, %v1741
        %v1747 = vrot.slane %v1746, 4
        %v1749 = vshll.u32 %v1491, 16
        %v1751 = vrot.slane %v1749, 5
        %v1752 = vsel %vm1512, %v1747, %v1751
        %v1754 = vshrl.u32 %v1492, 16
        %v1756 = vrot.slane %v1754, 4
        %v1757 = vshll.u32 %v1492, 16
        %v1759 = vrot.slane %v1757, 5
        %v1760 = vor.u32 %v1756, %v1759
        %v1761 = vrot.slane %v1760, 4
        %v1763 = vshll.u32 %v1493, 16
        %v1765 = vrot.slane %v1763, 5
        %v1766 = vsel %vm1512, %v1761, %v1765
        %v1767 = vshrl.u32 %v1493, 16
        %v1769 = vrot.slane %v1767, 4
        %v1770 = vor.u32 %v1769, %v1765
        %v1771 = vrot.slane %v1770, 4
        %v1773 = vshll.u32 %v1494, 16
        %v1775 = vrot.slane %v1773, 5
        %v1776 = vsel %vm1512, %v1771, %v1775
        %v1778 = vshrl.u32 %v1495, 16
        %v1780 = vrot.slane %v1778, 4
        %v1781 = vshll.u32 %v1495, 16
        %v1783 = vrot.slane %v1781, 5
        %v1784 = vor.u32 %v1780, %v1783
        %v1785 = vrot.slane %v1784, 4
        %v1787 = vshll.u32 %v1496, 16
        %v1789 = vrot.slane %v1787, 5
        %v1790 = vsel %vm1512, %v1785, %v1789
        %v1791 = vshrl.u32 %v1496, 16
        %v1793 = vrot.slane %v1791, 4
        %v1794 = vor.u32 %v1793, %v1789
        %v1795 = vrot.slane %v1794, 4
        %v1797 = vshll.u32 %v1497, 16
        %v1799 = vrot.slane %v1797, 5
        %v1800 = vsel %vm1512, %v1795, %v1799
        %v1802 = vshrl.u32 %v1498, 16
        %v1804 = vrot.slane %v1802, 4
        %v1805 = vshll.u32 %v1498, 16
        %v1807 = vrot.slane %v1805, 5
        %v1808 = vor.u32 %v1804, %v1807
        %v1809 = vrot.slane %v1808, 4
        %v1811 = vshll.u32 %v1499, 16
        %v1813 = vrot.slane %v1811, 5
        %v1814 = vsel %vm1512, %v1809, %v1813
        %v1815 = vshrl.u32 %v1499, 16
        %v1817 = vrot.slane %v1815, 4
        %v1818 = vor.u32 %v1817, %v1813
        %v1819 = vrot.slane %v1818, 4
        %v1821 = vshll.u32 %v1500, 16
        %v1823 = vrot.slane %v1821, 5
        %v1824 = vsel %vm1512, %v1819, %v1823
        %v1826 = vshrl.u32 %v1501, 16
        %v1828 = vrot.slane %v1826, 4
        %v1829 = vshll.u32 %v1501, 16
        %v1831 = vrot.slane %v1829, 5
        %v1832 = vor.u32 %v1828, %v1831
        %v1833 = vrot.slane %v1832, 4
        %v1835 = vshll.u32 %v1502, 16
        %v1837 = vrot.slane %v1835, 5
        %v1838 = vsel %vm1512, %v1833, %v1837
        %v1839 = vshrl.u32 %v1502, 16
        %v1841 = vrot.slane %v1839, 4
        %v1842 = vor.u32 %v1841, %v1837
        %v1843 = vrot.slane %v1842, 4
        %v1845 = vshll.u32 %v1503, 16
        %v1847 = vrot.slane %v1845, 5
        %v1848 = vsel %vm1512, %v1843, %v1847
        %v1850 = vshrl.u32 %v1504, 16
        %v1852 = vrot.slane %v1850, 4
        %v1853 = vshll.u32 %v1504, 16
        %v1855 = vrot.slane %v1853, 5
        %v1856 = vor.u32 %v1852, %v1855
        %v1857 = vrot.slane %v1856, 4
        %v1859 = vshll.u32 %v1505, 16
        %v1861 = vrot.slane %v1859, 5
        %v1862 = vsel %vm1512, %v1857, %v1861
        %v1863 = vshrl.u32 %v1505, 16
        %v1865 = vrot.slane %v1863, 4
        %v1866 = vor.u32 %v1865, %v1861
        %v1867 = vrot.slane %v1866, 4
        %v1869 = vshll.u32 %v1506, 16
        %v1871 = vrot.slane %v1869, 5
        %v1872 = vsel %vm1512, %v1867, %v1871
        %v1874 = vshrl.u32 %v1507, 16
        %v1876 = vrot.slane %v1874, 4
        %v1877 = vshll.u32 %v1507, 16
        %v1879 = vrot.slane %v1877, 5
        %v1880 = vor.u32 %v1876, %v1879
        %v1881 = vrot.slane %v1880, 4
        %v1883 = vshll.u32 %v1508, 16
        %v1885 = vrot.slane %v1883, 5
        %v1886 = vsel %vm1512, %v1881, %v1885
        %v1887 = vshrl.u32 %v1508, 16
        %v1889 = vrot.slane %v1887, 4
        %v1890 = vor.u32 %v1889, %v1885
        %v1891 = vrot.slane %v1890, 4
        %v1893 = vshll.u32 %v1509, 16
        %v1895 = vrot.slane %v1893, 5
        %v1896 = vsel %vm1512, %v1891, %v1895
        %1897 = vrot.lane.b32.xlu0 %v1526, 36
        %v1898 = vpop.permute.xlu0 %1897
        %1899 = vrot.lane.b32.xlu0 %v1536, 36
        %v1900 = vpop.permute.xlu0 %1899
        %1901 = vrot.lane.b32.xlu0 %v1550, 36
        %v1902 = vpop.permute.xlu0 %1901
        %1903 = vrot.lane.b32.xlu0 %v1560, 36
        %v1904 = vpop.permute.xlu0 %1903
        %1905 = vrot.lane.b32.xlu0 %v1574, 36
        %v1906 = vpop.permute.xlu0 %1905
        %1907 = vrot.lane.b32.xlu0 %v1584, 36
        %v1908 = vpop.permute.xlu0 %1907
        %1909 = vrot.lane.b32.xlu0 %v1598, 36
        %v1910 = vpop.permute.xlu0 %1909
        %1911 = vrot.lane.b32.xlu0 %v1608, 36
        %v1912 = vpop.permute.xlu0 %1911
        %1913 = vrot.lane.b32.xlu0 %v1622, 36
        %v1914 = vpop.permute.xlu0 %1913
        %1915 = vrot.lane.b32.xlu0 %v1632, 36
        %v1916 = vpop.permute.xlu0 %1915
        %1917 = vrot.lane.b32.xlu0 %v1646, 36
        %v1918 = vpop.permute.xlu0 %1917
        %1919 = vrot.lane.b32.xlu0 %v1656, 36
        %v1920 = vpop.permute.xlu0 %1919
        %1921 = vrot.lane.b32.xlu0 %v1670, 36
        %v1922 = vpop.permute.xlu0 %1921
        %1923 = vrot.lane.b32.xlu0 %v1680, 36
        %v1924 = vpop.permute.xlu0 %1923
        %1925 = vrot.lane.b32.xlu0 %v1694, 36
        %v1926 = vpop.permute.xlu0 %1925
        %1927 = vrot.lane.b32.xlu0 %v1704, 36
        %v1928 = vpop.permute.xlu0 %1927
        %1929 = vrot.lane.b32.xlu0 %v1718, 36
        %v1930 = vpop.permute.xlu0 %1929
        %1931 = vrot.lane.b32.xlu0 %v1728, 36
        %v1932 = vpop.permute.xlu0 %1931
        %1933 = vrot.lane.b32.xlu0 %v1742, 36
        %v1934 = vpop.permute.xlu0 %1933
        %1935 = vrot.lane.b32.xlu0 %v1752, 36
        %v1936 = vpop.permute.xlu0 %1935
        %1937 = vrot.lane.b32.xlu0 %v1766, 36
        %v1938 = vpop.permute.xlu0 %1937
        %1939 = vrot.lane.b32.xlu0 %v1776, 36
        %v1940 = vpop.permute.xlu0 %1939
        %1941 = vrot.lane.b32.xlu0 %v1790, 36
        %v1942 = vpop.permute.xlu0 %1941
        %1943 = vrot.lane.b32.xlu0 %v1800, 36
        %v1944 = vpop.permute.xlu0 %1943
        %1945 = vrot.lane.b32.xlu0 %v1814, 36
        %v1946 = vpop.permute.xlu0 %1945
        %1947 = vrot.lane.b32.xlu0 %v1824, 36
        %v1948 = vpop.permute.xlu0 %1947
        %1949 = vrot.lane.b32.xlu0 %v1838, 36
        %v1950 = vpop.permute.xlu0 %1949
        %1951 = vrot.lane.b32.xlu0 %v1848, 36
        %v1952 = vpop.permute.xlu0 %1951
        %1953 = vrot.lane.b32.xlu0 %v1862, 36
        %v1954 = vpop.permute.xlu0 %1953
        %1955 = vrot.lane.b32.xlu0 %v1872, 36
        %v1956 = vpop.permute.xlu0 %1955
        %1957 = vrot.lane.b32.xlu0 %v1886, 36
        %v1958 = vpop.permute.xlu0 %1957
        %1959 = vrot.lane.b32.xlu0 %v1896, 36
        %v1960 = vpop.permute.xlu0 %1959
        %vm1993 = vcmask 584992
        %1994 = vst.msk [vmem:[#allocation3] sm:$0xf] %vm1993, %v1898
        %1995 = vst.msk [vmem:[#allocation3 + $0xc] sm:$0xf] %vm1993, %v1900
        %1996 = vst.msk [vmem:[#allocation3 + $0x18] sm:$0xf] %vm1993, %v1902
        %1997 = vst.msk [vmem:[#allocation3 + $0x24] sm:$0xf] %vm1993, %v1904
        %1998 = vst.msk [vmem:[#allocation3 + $0x30] sm:$0xf] %vm1993, %v1906
        %1999 = vst.msk [vmem:[#allocation3 + $0x3c] sm:$0xf] %vm1993, %v1908
        %2000 = vst.msk [vmem:[#allocation3 + $0x48] sm:$0xf] %vm1993, %v1910
        %2001 = vst.msk [vmem:[#allocation3 + $0x54] sm:$0xf] %vm1993, %v1912
        %2002 = vst.msk [vmem:[#allocation3 + $0x60] sm:$0xf] %vm1993, %v1914
        %2003 = vst.msk [vmem:[#allocation3 + $0x6c] sm:$0xf] %vm1993, %v1916
        %2004 = vst.msk [vmem:[#allocation3 + $0x78] sm:$0xf] %vm1993, %v1918
        %2005 = vst.msk [vmem:[#allocation3 + $0x84] sm:$0xf] %vm1993, %v1920
        %2006 = vst.msk [vmem:[#allocation3 + $0x90] sm:$0xf] %vm1993, %v1922
        %2007 = vst.msk [vmem:[#allocation3 + $0x9c] sm:$0xf] %vm1993, %v1924
        %2008 = vst.msk [vmem:[#allocation3 + $0xa8] sm:$0xf] %vm1993, %v1926
        %2009 = vst.msk [vmem:[#allocation3 + $0xb4] sm:$0xf] %vm1993, %v1928
        %2010 = vst.msk [vmem:[#allocation3 + $0xc0] sm:$0xf] %vm1993, %v1930
        %2011 = vst.msk [vmem:[#allocation3 + $0xcc] sm:$0xf] %vm1993, %v1932
        %2012 = vst.msk [vmem:[#allocation3 + $0xd8] sm:$0xf] %vm1993, %v1934
        %2013 = vst.msk [vmem:[#allocation3 + $0xe4] sm:$0xf] %vm1993, %v1936
        %2014 = vst.msk [vmem:[#allocation3 + $0xf0] sm:$0xf] %vm1993, %v1938
        %2015 = vst.msk [vmem:[#allocation3 + $0xfc] sm:$0xf] %vm1993, %v1940
        %2016 = vst.msk [vmem:[#allocation3 + $0x108] sm:$0xf] %vm1993, %v1942
        %2017 = vst.msk [vmem:[#allocation3 + $0x114] sm:$0xf] %vm1993, %v1944
        %2018 = vst.msk [vmem:[#allocation3 + $0x120] sm:$0xf] %vm1993, %v1946
        %2019 = vst.msk [vmem:[#allocation3 + $0x12c] sm:$0xf] %vm1993, %v1948
        %2020 = vst.msk [vmem:[#allocation3 + $0x138] sm:$0xf] %vm1993, %v1950
        %2021 = vst.msk [vmem:[#allocation3 + $0x144] sm:$0xf] %vm1993, %v1952
        %2022 = vst.msk [vmem:[#allocation3 + $0x150] sm:$0xf] %vm1993, %v1954
        %2023 = vst.msk [vmem:[#allocation3 + $0x15c] sm:$0xf] %vm1993, %v1956
        %2024 = vst.msk [vmem:[#allocation3 + $0x168] sm:$0xf] %vm1993, %v1958
        %2025 = vst.msk [vmem:[#allocation3 + $0x174] sm:$0xf] %vm1993, %v1960
        %v2026 = vld [vmem:[#allocation2] sm:$0xe]
        %v2027 = vld [vmem:[#allocation2 + $0x4] sm:$0xf]
        %v2028 = vld [vmem:[#allocation2 + $0x8] sm:$0x1]
        %v2029 = vld [vmem:[#allocation2 + $0xc] sm:$0xe]
        %v2030 = vld [vmem:[#allocation2 + $0x10] sm:$0xf]
        %v2031 = vld [vmem:[#allocation2 + $0x14] sm:$0x1]
        %v2032 = vld [vmem:[#allocation2 + $0x18] sm:$0xe]
        %v2033 = vld [vmem:[#allocation2 + $0x1c] sm:$0xf]
        %v2034 = vld [vmem:[#allocation2 + $0x20] sm:$0x1]
        %v2035 = vld [vmem:[#allocation2 + $0x24] sm:$0xe]
        %v2036 = vld [vmem:[#allocation2 + $0x28] sm:$0xf]
        %v2037 = vld [vmem:[#allocation2 + $0x2c] sm:$0x1]
        %v2038 = vld [vmem:[#allocation2 + $0x30] sm:$0xe]
        %v2039 = vld [vmem:[#allocation2 + $0x34] sm:$0xf]
        %v2040 = vld [vmem:[#allocation2 + $0x38] sm:$0x1]
        %v2041 = vld [vmem:[#allocation2 + $0x3c] sm:$0xe]
        %v2042 = vld [vmem:[#allocation2 + $0x40] sm:$0xf]
        %v2043 = vld [vmem:[#allocation2 + $0x44] sm:$0x1]
        %v2044 = vld [vmem:[#allocation2 + $0x48] sm:$0xe]
        %v2045 = vld [vmem:[#allocation2 + $0x4c] sm:$0xf]
        %v2046 = vld [vmem:[#allocation2 + $0x50] sm:$0x1]
        %v2047 = vld [vmem:[#allocation2 + $0x54] sm:$0xe]
        %v2048 = vld [vmem:[#allocation2 + $0x58] sm:$0xf]
        %v2049 = vld [vmem:[#allocation2 + $0x5c] sm:$0x1]
        %v2050 = vld [vmem:[#allocation2 + $0x60] sm:$0xe]
        %v2051 = vld [vmem:[#allocation2 + $0x64] sm:$0xf]
        %v2052 = vld [vmem:[#allocation2 + $0x68] sm:$0x1]
        %v2053 = vld [vmem:[#allocation2 + $0x6c] sm:$0xe]
        %v2054 = vld [vmem:[#allocation2 + $0x70] sm:$0xf]
        %v2055 = vld [vmem:[#allocation2 + $0x74] sm:$0x1]
        %v2056 = vld [vmem:[#allocation2 + $0x78] sm:$0xe]
        %v2057 = vld [vmem:[#allocation2 + $0x7c] sm:$0xf]
        %v2058 = vld [vmem:[#allocation2 + $0x80] sm:$0x1]
        %v2059 = vld [vmem:[#allocation2 + $0x84] sm:$0xe]
        %v2060 = vld [vmem:[#allocation2 + $0x88] sm:$0xf]
        %v2061 = vld [vmem:[#allocation2 + $0x8c] sm:$0x1]
        %v2062 = vld [vmem:[#allocation2 + $0x90] sm:$0xe]
        %v2063 = vld [vmem:[#allocation2 + $0x94] sm:$0xf]
        %v2064 = vld [vmem:[#allocation2 + $0x98] sm:$0x1]
        %v2065 = vld [vmem:[#allocation2 + $0x9c] sm:$0xe]
        %v2066 = vld [vmem:[#allocation2 + $0xa0] sm:$0xf]
        %v2067 = vld [vmem:[#allocation2 + $0xa4] sm:$0x1]
        %v2068 = vld [vmem:[#allocation2 + $0xa8] sm:$0xe]
        %v2069 = vld [vmem:[#allocation2 + $0xac] sm:$0xf]
        %v2070 = vld [vmem:[#allocation2 + $0xb0] sm:$0x1]
        %v2071 = vld [vmem:[#allocation2 + $0xb4] sm:$0xe]
        %v2072 = vld [vmem:[#allocation2 + $0xb8] sm:$0xf]
        %v2073 = vld [vmem:[#allocation2 + $0xbc] sm:$0x1]
        %vm2122 = vcmask 1042432
        %vm2123 = vcmask 1046532
        %vm2124 = vmor %vm2122, %vm2123
        %v2125 = vrot.slane %v2026, 5
        %v2126 = vrot.slane %v2125, 4
        %v2127 = vrot.slane %v2027, 5
        %v2128 = vsel %vm2124, %v2126, %v2127
        %v2129 = vrot.slane %v2127, 4
        %v2130 = vrot.slane %v2028, 5
        %v2131 = vsel %vm2124, %v2129, %v2130
        %v2132 = vrot.slane %v2029, 5
        %v2133 = vrot.slane %v2132, 4
        %v2134 = vrot.slane %v2030, 5
        %v2135 = vsel %vm2124, %v2133, %v2134
        %v2136 = vrot.slane %v2134, 4
        %v2137 = vrot.slane %v2031, 5
        %v2138 = vsel %vm2124, %v2136, %v2137
        %v2139 = vrot.slane %v2032, 5
        %v2140 = vrot.slane %v2139, 4
        %v2141 = vrot.slane %v2033, 5
        %v2142 = vsel %vm2124, %v2140, %v2141
        %v2143 = vrot.slane %v2141, 4
        %v2144 = vrot.slane %v2034, 5
        %v2145 = vsel %vm2124, %v2143, %v2144
        %v2146 = vrot.slane %v2035, 5
        %v2147 = vrot.slane %v2146, 4
        %v2148 = vrot.slane %v2036, 5
        %v2149 = vsel %vm2124, %v2147, %v2148
        %v2150 = vrot.slane %v2148, 4
        %v2151 = vrot.slane %v2037, 5
        %v2152 = vsel %vm2124, %v2150, %v2151
        %v2153 = vrot.slane %v2038, 5
        %v2154 = vrot.slane %v2153, 4
        %v2155 = vrot.slane %v2039, 5
        %v2156 = vsel %vm2124, %v2154, %v2155
        %v2157 = vrot.slane %v2155, 4
        %v2158 = vrot.slane %v2040, 5
        %v2159 = vsel %vm2124, %v2157, %v2158
        %v2160 = vrot.slane %v2041, 5
        %v2161 = vrot.slane %v2160, 4
        %v2162 = vrot.slane %v2042, 5
        %v2163 = vsel %vm2124, %v2161, %v2162
        %v2164 = vrot.slane %v2162, 4
        %v2165 = vrot.slane %v2043, 5
        %v2166 = vsel %vm2124, %v2164, %v2165
        %v2167 = vrot.slane %v2044, 5
        %v2168 = vrot.slane %v2167, 4
        %v2169 = vrot.slane %v2045, 5
        %v2170 = vsel %vm2124, %v2168, %v2169
        %v2171 = vrot.slane %v2169, 4
        %v2172 = vrot.slane %v2046, 5
        %v2173 = vsel %vm2124, %v2171, %v2172
        %v2174 = vrot.slane %v2047, 5
        %v2175 = vrot.slane %v2174, 4
        %v2176 = vrot.slane %v2048, 5
        %v2177 = vsel %vm2124, %v2175, %v2176
        %v2178 = vrot.slane %v2176, 4
        %v2179 = vrot.slane %v2049, 5
        %v2180 = vsel %vm2124, %v2178, %v2179
        %v2181 = vrot.slane %v2050, 5
        %v2182 = vrot.slane %v2181, 4
        %v2183 = vrot.slane %v2051, 5
        %v2184 = vsel %vm2124, %v2182, %v2183
        %v2185 = vrot.slane %v2183, 4
        %v2186 = vrot.slane %v2052, 5
        %v2187 = vsel %vm2124, %v2185, %v2186
        %v2188 = vrot.slane %v2053, 5
        %v2189 = vrot.slane %v2188, 4
        %v2190 = vrot.slane %v2054, 5
        %v2191 = vsel %vm2124, %v2189, %v2190
        %v2192 = vrot.slane %v2190, 4
        %v2193 = vrot.slane %v2055, 5
        %v2194 = vsel %vm2124, %v2192, %v2193
        %v2195 = vrot.slane %v2056, 5
        %v2196 = vrot.slane %v2195, 4
        %v2197 = vrot.slane %v2057, 5
        %v2198 = vsel %vm2124, %v2196, %v2197
        %v2199 = vrot.slane %v2197, 4
        %v2200 = vrot.slane %v2058, 5
        %v2201 = vsel %vm2124, %v2199, %v2200
        %v2202 = vrot.slane %v2059, 5
        %v2203 = vrot.slane %v2202, 4
        %v2204 = vrot.slane %v2060, 5
        %v2205 = vsel %vm2124, %v2203, %v2204
        %v2206 = vrot.slane %v2204, 4
        %v2207 = vrot.slane %v2061, 5
        %v2208 = vsel %vm2124, %v2206, %v2207
        %v2209 = vrot.slane %v2062, 5
        %v2210 = vrot.slane %v2209, 4
        %v2211 = vrot.slane %v2063, 5
        %v2212 = vsel %vm2124, %v2210, %v2211
        %v2213 = vrot.slane %v2211, 4
        %v2214 = vrot.slane %v2064, 5
        %v2215 = vsel %vm2124, %v2213, %v2214
        %v2216 = vrot.slane %v2065, 5
        %v2217 = vrot.slane %v2216, 4
        %v2218 = vrot.slane %v2066, 5
        %v2219 = vsel %vm2124, %v2217, %v2218
        %v2220 = vrot.slane %v2218, 4
        %v2221 = vrot.slane %v2067, 5
        %v2222 = vsel %vm2124, %v2220, %v2221
        %v2223 = vrot.slane %v2068, 5
        %v2224 = vrot.slane %v2223, 4
        %v2225 = vrot.slane %v2069, 5
        %v2226 = vsel %vm2124, %v2224, %v2225
        %v2227 = vrot.slane %v2225, 4
        %v2228 = vrot.slane %v2070, 5
        %v2229 = vsel %vm2124, %v2227, %v2228
        %v2230 = vrot.slane %v2071, 5
        %v2231 = vrot.slane %v2230, 4
        %v2232 = vrot.slane %v2072, 5
        %v2233 = vsel %vm2124, %v2231, %v2232
        %v2234 = vrot.slane %v2232, 4
        %v2235 = vrot.slane %v2073, 5
        %v2236 = vsel %vm2124, %v2234, %v2235
        %2237 = vrot.lane.b32.xlu0 %v2128, 72
        %v2238 = vpop.permute.xlu0 %2237
        %2239 = vrot.lane.b32.xlu0 %v2131, 72
        %v2240 = vpop.permute.xlu0 %2239
        %2241 = vrot.lane.b32.xlu0 %v2135, 72
        %v2242 = vpop.permute.xlu0 %2241
        %2243 = vrot.lane.b32.xlu0 %v2138, 72
        %v2244 = vpop.permute.xlu0 %2243
        %2245 = vrot.lane.b32.xlu0 %v2142, 72
        %v2246 = vpop.permute.xlu0 %2245
        %2247 = vrot.lane.b32.xlu0 %v2145, 72
        %v2248 = vpop.permute.xlu0 %2247
        %2249 = vrot.lane.b32.xlu0 %v2149, 72
        %v2250 = vpop.permute.xlu0 %2249
        %2251 = vrot.lane.b32.xlu0 %v2152, 72
        %v2252 = vpop.permute.xlu0 %2251
        %2253 = vrot.lane.b32.xlu0 %v2156, 72
        %v2254 = vpop.permute.xlu0 %2253
        %2255 = vrot.lane.b32.xlu0 %v2159, 72
        %v2256 = vpop.permute.xlu0 %2255
        %2257 = vrot.lane.b32.xlu0 %v2163, 72
        %v2258 = vpop.permute.xlu0 %2257
        %2259 = vrot.lane.b32.xlu0 %v2166, 72
        %v2260 = vpop.permute.xlu0 %2259
        %2261 = vrot.lane.b32.xlu0 %v2170, 72
        %v2262 = vpop.permute.xlu0 %2261
        %2263 = vrot.lane.b32.xlu0 %v2173, 72
        %v2264 = vpop.permute.xlu0 %2263
        %2265 = vrot.lane.b32.xlu0 %v2177, 72
        %v2266 = vpop.permute.xlu0 %2265
        %2267 = vrot.lane.b32.xlu0 %v2180, 72
        %v2268 = vpop.permute.xlu0 %2267
        %2269 = vrot.lane.b32.xlu0 %v2184, 72
        %v2270 = vpop.permute.xlu0 %2269
        %2271 = vrot.lane.b32.xlu0 %v2187, 72
        %v2272 = vpop.permute.xlu0 %2271
        %2273 = vrot.lane.b32.xlu0 %v2191, 72
        %v2274 = vpop.permute.xlu0 %2273
        %2275 = vrot.lane.b32.xlu0 %v2194, 72
        %v2276 = vpop.permute.xlu0 %2275
        %2277 = vrot.lane.b32.xlu0 %v2198, 72
        %v2278 = vpop.permute.xlu0 %2277
        %2279 = vrot.lane.b32.xlu0 %v2201, 72
        %v2280 = vpop.permute.xlu0 %2279
        %2281 = vrot.lane.b32.xlu0 %v2205, 72
        %v2282 = vpop.permute.xlu0 %2281
        %2283 = vrot.lane.b32.xlu0 %v2208, 72
        %v2284 = vpop.permute.xlu0 %2283
        %2285 = vrot.lane.b32.xlu0 %v2212, 72
        %v2286 = vpop.permute.xlu0 %2285
        %2287 = vrot.lane.b32.xlu0 %v2215, 72
        %v2288 = vpop.permute.xlu0 %2287
        %2289 = vrot.lane.b32.xlu0 %v2219, 72
        %v2290 = vpop.permute.xlu0 %2289
        %2291 = vrot.lane.b32.xlu0 %v2222, 72
        %v2292 = vpop.permute.xlu0 %2291
        %2293 = vrot.lane.b32.xlu0 %v2226, 72
        %v2294 = vpop.permute.xlu0 %2293
        %2295 = vrot.lane.b32.xlu0 %v2229, 72
        %v2296 = vpop.permute.xlu0 %2295
        %2297 = vrot.lane.b32.xlu0 %v2233, 72
        %v2298 = vpop.permute.xlu0 %2297
        %2299 = vrot.lane.b32.xlu0 %v2236, 72
        %v2300 = vpop.permute.xlu0 %2299
        %vm2333 = vcmask 880192
        %2334 = vst.msk [vmem:[#allocation3] sm:$0xf] %vm2333, %v2238
        %2335 = vst.msk [vmem:[#allocation3 + $0xc] sm:$0xf] %vm2333, %v2240
        %2336 = vst.msk [vmem:[#allocation3 + $0x18] sm:$0xf] %vm2333, %v2242
        %2337 = vst.msk [vmem:[#allocation3 + $0x24] sm:$0xf] %vm2333, %v2244
        %2338 = vst.msk [vmem:[#allocation3 + $0x30] sm:$0xf] %vm2333, %v2246
        %2339 = vst.msk [vmem:[#allocation3 + $0x3c] sm:$0xf] %vm2333, %v2248
        %2340 = vst.msk [vmem:[#allocation3 + $0x48] sm:$0xf] %vm2333, %v2250
        %2341 = vst.msk [vmem:[#allocation3 + $0x54] sm:$0xf] %vm2333, %v2252
        %2342 = vst.msk [vmem:[#allocation3 + $0x60] sm:$0xf] %vm2333, %v2254
        %2343 = vst.msk [vmem:[#allocation3 + $0x6c] sm:$0xf] %vm2333, %v2256
        %2344 = vst.msk [vmem:[#allocation3 + $0x78] sm:$0xf] %vm2333, %v2258
        %2345 = vst.msk [vmem:[#allocation3 + $0x84] sm:$0xf] %vm2333, %v2260
        %2346 = vst.msk [vmem:[#allocation3 + $0x90] sm:$0xf] %vm2333, %v2262
        %2347 = vst.msk [vmem:[#allocation3 + $0x9c] sm:$0xf] %vm2333, %v2264
        %2348 = vst.msk [vmem:[#allocation3 + $0xa8] sm:$0xf] %vm2333, %v2266
        %2349 = vst.msk [vmem:[#allocation3 + $0xb4] sm:$0xf] %vm2333, %v2268
        %2350 = vst.msk [vmem:[#allocation3 + $0xc0] sm:$0xf] %vm2333, %v2270
        %2351 = vst.msk [vmem:[#allocation3 + $0xcc] sm:$0xf] %vm2333, %v2272
        %2352 = vst.msk [vmem:[#allocation3 + $0xd8] sm:$0xf] %vm2333, %v2274
        %2353 = vst.msk [vmem:[#allocation3 + $0xe4] sm:$0xf] %vm2333, %v2276
        %2354 = vst.msk [vmem:[#allocation3 + $0xf0] sm:$0xf] %vm2333, %v2278
        %2355 = vst.msk [vmem:[#allocation3 + $0xfc] sm:$0xf] %vm2333, %v2280
        %2356 = vst.msk [vmem:[#allocation3 + $0x108] sm:$0xf] %vm2333, %v2282
        %2357 = vst.msk [vmem:[#allocation3 + $0x114] sm:$0xf] %vm2333, %v2284
        %2358 = vst.msk [vmem:[#allocation3 + $0x120] sm:$0xf] %vm2333, %v2286
        %2359 = vst.msk [vmem:[#allocation3 + $0x12c] sm:$0xf] %vm2333, %v2288
        %2360 = vst.msk [vmem:[#allocation3 + $0x138] sm:$0xf] %vm2333, %v2290
        %2361 = vst.msk [vmem:[#allocation3 + $0x144] sm:$0xf] %vm2333, %v2292
        %2362 = vst.msk [vmem:[#allocation3 + $0x150] sm:$0xf] %vm2333, %v2294
        %2363 = vst.msk [vmem:[#allocation3 + $0x15c] sm:$0xf] %vm2333, %v2296
        %2364 = vst.msk [vmem:[#allocation3 + $0x168] sm:$0xf] %vm2333, %v2298
        %2365 = vst.msk [vmem:[#allocation3 + $0x174] sm:$0xf] %vm2333, %v2300
        %v2366 = vld [vmem:[%s714] sm:$0xf]
        %v2367 = vld [vmem:[%s714 + $0x4] sm:$0xf]
        %v2368 = vld [vmem:[%s714 + $0xc] sm:$0xf]
        %v2369 = vld [vmem:[%s714 + $0x10] sm:$0xf]
        %v2370 = vld [vmem:[%s714 + $0x18] sm:$0xf]
        %v2371 = vld [vmem:[%s714 + $0x1c] sm:$0xf]
        %v2372 = vld [vmem:[%s714 + $0x24] sm:$0xf]
        %v2373 = vld [vmem:[%s714 + $0x28] sm:$0xf]
        %v2374 = vld [vmem:[%s714 + $0x30] sm:$0xf]
        %v2375 = vld [vmem:[%s714 + $0x34] sm:$0xf]
        %v2376 = vld [vmem:[%s714 + $0x3c] sm:$0xf]
        %v2377 = vld [vmem:[%s714 + $0x40] sm:$0xf]
        %v2378 = vld [vmem:[%s714 + $0x48] sm:$0xf]
        %v2379 = vld [vmem:[%s714 + $0x4c] sm:$0xf]
        %v2380 = vld [vmem:[%s714 + $0x54] sm:$0xf]
        %v2381 = vld [vmem:[%s714 + $0x58] sm:$0xf]
        %v2382 = vld [vmem:[%s714 + $0x60] sm:$0xf]
        %v2383 = vld [vmem:[%s714 + $0x64] sm:$0xf]
        %v2384 = vld [vmem:[%s714 + $0x6c] sm:$0xf]
        %v2385 = vld [vmem:[%s714 + $0x70] sm:$0xf]
        %v2386 = vld [vmem:[%s714 + $0x78] sm:$0xf]
        %v2387 = vld [vmem:[%s714 + $0x7c] sm:$0xf]
        %v2388 = vld [vmem:[%s714 + $0x84] sm:$0xf]
        %v2389 = vld [vmem:[%s714 + $0x88] sm:$0xf]
        %v2390 = vld [vmem:[%s714 + $0x90] sm:$0xf]
        %v2391 = vld [vmem:[%s714 + $0x94] sm:$0xf]
        %v2392 = vld [vmem:[%s714 + $0x9c] sm:$0xf]
        %v2393 = vld [vmem:[%s714 + $0xa0] sm:$0xf]
        %v2394 = vld [vmem:[%s714 + $0xa8] sm:$0xf]
        %v2395 = vld [vmem:[%s714 + $0xac] sm:$0xf]
        %v2396 = vld [vmem:[%s714 + $0xb4] sm:$0xf]
        %v2397 = vld [vmem:[%s714 + $0xb8] sm:$0xf]
        %2430 = vrot.lane.b32.xlu0 %v2366, 108
        %v2431 = vpop.permute.xlu0 %2430
        %2432 = vrot.lane.b32.xlu0 %v2367, 108
        %v2433 = vpop.permute.xlu0 %2432
        %2434 = vrot.lane.b32.xlu0 %v2368, 108
        %v2435 = vpop.permute.xlu0 %2434
        %2436 = vrot.lane.b32.xlu0 %v2369, 108
        %v2437 = vpop.permute.xlu0 %2436
        %2438 = vrot.lane.b32.xlu0 %v2370, 108
        %v2439 = vpop.permute.xlu0 %2438
        %2440 = vrot.lane.b32.xlu0 %v2371, 108
        %v2441 = vpop.permute.xlu0 %2440
        %2442 = vrot.lane.b32.xlu0 %v2372, 108
        %v2443 = vpop.permute.xlu0 %2442
        %2444 = vrot.lane.b32.xlu0 %v2373, 108
        %v2445 = vpop.permute.xlu0 %2444
        %2446 = vrot.lane.b32.xlu0 %v2374, 108
        %v2447 = vpop.permute.xlu0 %2446
        %2448 = vrot.lane.b32.xlu0 %v2375, 108
        %v2449 = vpop.permute.xlu0 %2448
        %2450 = vrot.lane.b32.xlu0 %v2376, 108
        %v2451 = vpop.permute.xlu0 %2450
        %2452 = vrot.lane.b32.xlu0 %v2377, 108
        %v2453 = vpop.permute.xlu0 %2452
        %2454 = vrot.lane.b32.xlu0 %v2378, 108
        %v2455 = vpop.permute.xlu0 %2454
        %2456 = vrot.lane.b32.xlu0 %v2379, 108
        %v2457 = vpop.permute.xlu0 %2456
        %2458 = vrot.lane.b32.xlu0 %v2380, 108
        %v2459 = vpop.permute.xlu0 %2458
        %2460 = vrot.lane.b32.xlu0 %v2381, 108
        %v2461 = vpop.permute.xlu0 %2460
        %2462 = vrot.lane.b32.xlu0 %v2382, 108
        %v2463 = vpop.permute.xlu0 %2462
        %2464 = vrot.lane.b32.xlu0 %v2383, 108
        %v2465 = vpop.permute.xlu0 %2464
        %2466 = vrot.lane.b32.xlu0 %v2384, 108
        %v2467 = vpop.permute.xlu0 %2466
        %2468 = vrot.lane.b32.xlu0 %v2385, 108
        %v2469 = vpop.permute.xlu0 %2468
        %2470 = vrot.lane.b32.xlu0 %v2386, 108
        %v2471 = vpop.permute.xlu0 %2470
        %2472 = vrot.lane.b32.xlu0 %v2387, 108
        %v2473 = vpop.permute.xlu0 %2472
        %2474 = vrot.lane.b32.xlu0 %v2388, 108
        %v2475 = vpop.permute.xlu0 %2474
        %2476 = vrot.lane.b32.xlu0 %v2389, 108
        %v2477 = vpop.permute.xlu0 %2476
        %2478 = vrot.lane.b32.xlu0 %v2390, 108
        %v2479 = vpop.permute.xlu0 %2478
        %2480 = vrot.lane.b32.xlu0 %v2391, 108
        %v2481 = vpop.permute.xlu0 %2480
        %2482 = vrot.lane.b32.xlu0 %v2392, 108
        %v2483 = vpop.permute.xlu0 %2482
        %2484 = vrot.lane.b32.xlu0 %v2393, 108
        %v2485 = vpop.permute.xlu0 %2484
        %2486 = vrot.lane.b32.xlu0 %v2394, 108
        %v2487 = vpop.permute.xlu0 %2486
        %2488 = vrot.lane.b32.xlu0 %v2395, 108
        %v2489 = vpop.permute.xlu0 %2488
        %2490 = vrot.lane.b32.xlu0 %v2396, 108
        %v2491 = vpop.permute.xlu0 %2490
        %2492 = vrot.lane.b32.xlu0 %v2397, 108
        %v2493 = vpop.permute.xlu0 %2492
        %v2494 = vrot.slane %v2431, 4
        %v2495 = vrot.slane %v2433, 4
        %v2496 = vrot.slane %v2435, 4
        %v2497 = vrot.slane %v2437, 4
        %v2498 = vrot.slane %v2439, 4
        %v2499 = vrot.slane %v2441, 4
        %v2500 = vrot.slane %v2443, 4
        %v2501 = vrot.slane %v2445, 4
        %v2502 = vrot.slane %v2447, 4
        %v2503 = vrot.slane %v2449, 4
        %v2504 = vrot.slane %v2451, 4
        %v2505 = vrot.slane %v2453, 4
        %v2506 = vrot.slane %v2455, 4
        %v2507 = vrot.slane %v2457, 4
        %v2508 = vrot.slane %v2459, 4
        %v2509 = vrot.slane %v2461, 4
        %v2510 = vrot.slane %v2463, 4
        %v2511 = vrot.slane %v2465, 4
        %v2512 = vrot.slane %v2467, 4
        %v2513 = vrot.slane %v2469, 4
        %v2514 = vrot.slane %v2471, 4
        %v2515 = vrot.slane %v2473, 4
        %v2516 = vrot.slane %v2475, 4
        %v2517 = vrot.slane %v2477, 4
        %v2518 = vrot.slane %v2479, 4
        %v2519 = vrot.slane %v2481, 4
        %v2520 = vrot.slane %v2483, 4
        %v2521 = vrot.slane %v2485, 4
        %v2522 = vrot.slane %v2487, 4
        %v2523 = vrot.slane %v2489, 4
        %v2524 = vrot.slane %v2491, 4
        %v2525 = vrot.slane %v2493, 4
        %vm2526 = vcmask 883712
        %v2527 = vsel %vm2526, %v2494, %v2431
        %v2528 = vsel %vm2526, %v2495, %v2433
        %v2529 = vsel %vm2526, %v2496, %v2435
        %v2530 = vsel %vm2526, %v2497, %v2437
        %v2531 = vsel %vm2526, %v2498, %v2439
        %v2532 = vsel %vm2526, %v2499, %v2441
        %v2533 = vsel %vm2526, %v2500, %v2443
        %v2534 = vsel %vm2526, %v2501, %v2445
        %v2535 = vsel %vm2526, %v2502, %v2447
        %v2536 = vsel %vm2526, %v2503, %v2449
        %v2537 = vsel %vm2526, %v2504, %v2451
        %v2538 = vsel %vm2526, %v2505, %v2453
        %v2539 = vsel %vm2526, %v2506, %v2455
        %v2540 = vsel %vm2526, %v2507, %v2457
        %v2541 = vsel %vm2526, %v2508, %v2459
        %v2542 = vsel %vm2526, %v2509, %v2461
        %v2543 = vsel %vm2526, %v2510, %v2463
        %v2544 = vsel %vm2526, %v2511, %v2465
        %v2545 = vsel %vm2526, %v2512, %v2467
        %v2546 = vsel %vm2526, %v2513, %v2469
        %v2547 = vsel %vm2526, %v2514, %v2471
        %v2548 = vsel %vm2526, %v2515, %v2473
        %v2549 = vsel %vm2526, %v2516, %v2475
        %v2550 = vsel %vm2526, %v2517, %v2477
        %v2551 = vsel %vm2526, %v2518, %v2479
        %v2552 = vsel %vm2526, %v2519, %v2481
        %v2553 = vsel %vm2526, %v2520, %v2483
        %v2554 = vsel %vm2526, %v2521, %v2485
        %v2555 = vsel %vm2526, %v2522, %v2487
        %v2556 = vsel %vm2526, %v2523, %v2489
        %v2557 = vsel %vm2526, %v2524, %v2491
        %v2558 = vsel %vm2526, %v2525, %v2493
        %vm2591 = vcmask 1044320
        %vm2592 = vcmask 130052
        %vm2593 = vmor %vm2592, %vm2591
        %2594 = vst.msk [vmem:[#allocation3] sm:$0xff] %vm2593, %v2527
        %2595 = vst.msk [vmem:[#allocation3 + $0xc] sm:$0xff] %vm2593, %v2528
        %2596 = vst.msk [vmem:[#allocation3 + $0x18] sm:$0xff] %vm2593, %v2529
        %2597 = vst.msk [vmem:[#allocation3 + $0x24] sm:$0xff] %vm2593, %v2530
        %2598 = vst.msk [vmem:[#allocation3 + $0x30] sm:$0xff] %vm2593, %v2531
        %2599 = vst.msk [vmem:[#allocation3 + $0x3c] sm:$0xff] %vm2593, %v2532
        %2600 = vst.msk [vmem:[#allocation3 + $0x48] sm:$0xff] %vm2593, %v2533
        %2601 = vst.msk [vmem:[#allocation3 + $0x54] sm:$0xff] %vm2593, %v2534
        %2602 = vst.msk [vmem:[#allocation3 + $0x60] sm:$0xff] %vm2593, %v2535
        %2603 = vst.msk [vmem:[#allocation3 + $0x6c] sm:$0xff] %vm2593, %v2536
        %2604 = vst.msk [vmem:[#allocation3 + $0x78] sm:$0xff] %vm2593, %v2537
        %2605 = vst.msk [vmem:[#allocation3 + $0x84] sm:$0xff] %vm2593, %v2538
        %2606 = vst.msk [vmem:[#allocation3 + $0x90] sm:$0xff] %vm2593, %v2539
        %2607 = vst.msk [vmem:[#allocation3 + $0x9c] sm:$0xff] %vm2593, %v2540
        %2608 = vst.msk [vmem:[#allocation3 + $0xa8] sm:$0xff] %vm2593, %v2541
        %2609 = vst.msk [vmem:[#allocation3 + $0xb4] sm:$0xff] %vm2593, %v2542
        %2610 = vst.msk [vmem:[#allocation3 + $0xc0] sm:$0xff] %vm2593, %v2543
        %2611 = vst.msk [vmem:[#allocation3 + $0xcc] sm:$0xff] %vm2593, %v2544
        %2612 = vst.msk [vmem:[#allocation3 + $0xd8] sm:$0xff] %vm2593, %v2545
        %2613 = vst.msk [vmem:[#allocation3 + $0xe4] sm:$0xff] %vm2593, %v2546
        %2614 = vst.msk [vmem:[#allocation3 + $0xf0] sm:$0xff] %vm2593, %v2547
        %2615 = vst.msk [vmem:[#allocation3 + $0xfc] sm:$0xff] %vm2593, %v2548
        %2616 = vst.msk [vmem:[#allocation3 + $0x108] sm:$0xff] %vm2593, %v2549
        %2617 = vst.msk [vmem:[#allocation3 + $0x114] sm:$0xff] %vm2593, %v2550
        %2618 = vst.msk [vmem:[#allocation3 + $0x120] sm:$0xff] %vm2593, %v2551
        %2619 = vst.msk [vmem:[#allocation3 + $0x12c] sm:$0xff] %vm2593, %v2552
        %2620 = vst.msk [vmem:[#allocation3 + $0x138] sm:$0xff] %vm2593, %v2553
        %2621 = vst.msk [vmem:[#allocation3 + $0x144] sm:$0xff] %vm2593, %v2554
        %2622 = vst.msk [vmem:[#allocation3 + $0x150] sm:$0xff] %vm2593, %v2555
        %2623 = vst.msk [vmem:[#allocation3 + $0x15c] sm:$0xff] %vm2593, %v2556
        %2624 = vst.msk [vmem:[#allocation3 + $0x168] sm:$0xff] %vm2593, %v2557
        %2625 = vst.msk [vmem:[#allocation3 + $0x174] sm:$0xff] %vm2593, %v2558
        %v2626 = vld [vmem:[%s714] sm:$0xf]
        %v2627 = vld [vmem:[%s714 + $0x4] sm:$0xf]
        %v2628 = vld [vmem:[%s714 + $0x8] sm:$0x1]
        %v2629 = vld [vmem:[%s714 + $0xc] sm:$0xf]
        %v2630 = vld [vmem:[%s714 + $0x10] sm:$0xf]
        %v2631 = vld [vmem:[%s714 + $0x14] sm:$0x1]
        %v2632 = vld [vmem:[%s714 + $0x18] sm:$0xf]
        %v2633 = vld [vmem:[%s714 + $0x1c] sm:$0xf]
        %v2634 = vld [vmem:[%s714 + $0x20] sm:$0x1]
        %v2635 = vld [vmem:[%s714 + $0x24] sm:$0xf]
        %v2636 = vld [vmem:[%s714 + $0x28] sm:$0xf]
        %v2637 = vld [vmem:[%s714 + $0x2c] sm:$0x1]
        %v2638 = vld [vmem:[%s714 + $0x30] sm:$0xf]
        %v2639 = vld [vmem:[%s714 + $0x34] sm:$0xf]
        %v2640 = vld [vmem:[%s714 + $0x38] sm:$0x1]
        %v2641 = vld [vmem:[%s714 + $0x3c] sm:$0xf]
        %v2642 = vld [vmem:[%s714 + $0x40] sm:$0xf]
        %v2643 = vld [vmem:[%s714 + $0x44] sm:$0x1]
        %v2644 = vld [vmem:[%s714 + $0x48] sm:$0xf]
        %v2645 = vld [vmem:[%s714 + $0x4c] sm:$0xf]
        %v2646 = vld [vmem:[%s714 + $0x50] sm:$0x1]
        %v2647 = vld [vmem:[%s714 + $0x54] sm:$0xf]
        %v2648 = vld [vmem:[%s714 + $0x58] sm:$0xf]
        %v2649 = vld [vmem:[%s714 + $0x5c] sm:$0x1]
        %v2650 = vld [vmem:[%s714 + $0x60] sm:$0xf]
        %v2651 = vld [vmem:[%s714 + $0x64] sm:$0xf]
        %v2652 = vld [vmem:[%s714 + $0x68] sm:$0x1]
        %v2653 = vld [vmem:[%s714 + $0x6c] sm:$0xf]
        %v2654 = vld [vmem:[%s714 + $0x70] sm:$0xf]
        %v2655 = vld [vmem:[%s714 + $0x74] sm:$0x1]
        %v2656 = vld [vmem:[%s714 + $0x78] sm:$0xf]
        %v2657 = vld [vmem:[%s714 + $0x7c] sm:$0xf]
        %v2658 = vld [vmem:[%s714 + $0x80] sm:$0x1]
        %v2659 = vld [vmem:[%s714 + $0x84] sm:$0xf]
        %v2660 = vld [vmem:[%s714 + $0x88] sm:$0xf]
        %v2661 = vld [vmem:[%s714 + $0x8c] sm:$0x1]
        %v2662 = vld [vmem:[%s714 + $0x90] sm:$0xf]
        %v2663 = vld [vmem:[%s714 + $0x94] sm:$0xf]
        %v2664 = vld [vmem:[%s714 + $0x98] sm:$0x1]
        %v2665 = vld [vmem:[%s714 + $0x9c] sm:$0xf]
        %v2666 = vld [vmem:[%s714 + $0xa0] sm:$0xf]
        %v2667 = vld [vmem:[%s714 + $0xa4] sm:$0x1]
        %v2668 = vld [vmem:[%s714 + $0xa8] sm:$0xf]
        %v2669 = vld [vmem:[%s714 + $0xac] sm:$0xf]
        %v2670 = vld [vmem:[%s714 + $0xb0] sm:$0x1]
        %v2671 = vld [vmem:[%s714 + $0xb4] sm:$0xf]
        %v2672 = vld [vmem:[%s714 + $0xb8] sm:$0xf]
        %v2673 = vld [vmem:[%s714 + $0xbc] sm:$0x1]
        %v2675 = vshrl.u32 %v2626, 16
        %v2677 = vrot.slane %v2675, 4
        %v2678 = vshll.u32 %v2626, 16
        %v2680 = vrot.slane %v2678, 5
        %v2681 = vor.u32 %v2677, %v2680
        %v2682 = vrot.slane %v2681, 4
        %v2684 = vshll.u32 %v2627, 16
        %v2686 = vrot.slane %v2684, 5
        %v2687 = vsel %vm1512, %v2682, %v2686
        %v2688 = vshrl.u32 %v2627, 16
        %v2690 = vrot.slane %v2688, 4
        %v2691 = vor.u32 %v2690, %v2686
        %v2692 = vrot.slane %v2691, 4
        %v2694 = vshll.u32 %v2628, 16
        %v2696 = vrot.slane %v2694, 5
        %v2697 = vsel %vm1512, %v2692, %v2696
        %v2699 = vshrl.u32 %v2629, 16
        %v2701 = vrot.slane %v2699, 4
        %v2702 = vshll.u32 %v2629, 16
        %v2704 = vrot.slane %v2702, 5
        %v2705 = vor.u32 %v2701, %v2704
        %v2706 = vrot.slane %v2705, 4
        %v2708 = vshll.u32 %v2630, 16
        %v2710 = vrot.slane %v2708, 5
        %v2711 = vsel %vm1512, %v2706, %v2710
        %v2712 = vshrl.u32 %v2630, 16
        %v2714 = vrot.slane %v2712, 4
        %v2715 = vor.u32 %v2714, %v2710
        %v2716 = vrot.slane %v2715, 4
        %v2718 = vshll.u32 %v2631, 16
        %v2720 = vrot.slane %v2718, 5
        %v2721 = vsel %vm1512, %v2716, %v2720
        %v2723 = vshrl.u32 %v2632, 16
        %v2725 = vrot.slane %v2723, 4
        %v2726 = vshll.u32 %v2632, 16
        %v2728 = vrot.slane %v2726, 5
        %v2729 = vor.u32 %v2725, %v2728
        %v2730 = vrot.slane %v2729, 4
        %v2732 = vshll.u32 %v2633, 16
        %v2734 = vrot.slane %v2732, 5
        %v2735 = vsel %vm1512, %v2730, %v2734
        %v2736 = vshrl.u32 %v2633, 16
        %v2738 = vrot.slane %v2736, 4
        %v2739 = vor.u32 %v2738, %v2734
        %v2740 = vrot.slane %v2739, 4
        %v2742 = vshll.u32 %v2634, 16
        %v2744 = vrot.slane %v2742, 5
        %v2745 = vsel %vm1512, %v2740, %v2744
        %v2747 = vshrl.u32 %v2635, 16
        %v2749 = vrot.slane %v2747, 4
        %v2750 = vshll.u32 %v2635, 16
        %v2752 = vrot.slane %v2750, 5
        %v2753 = vor.u32 %v2749, %v2752
        %v2754 = vrot.slane %v2753, 4
        %v2756 = vshll.u32 %v2636, 16
        %v2758 = vrot.slane %v2756, 5
        %v2759 = vsel %vm1512, %v2754, %v2758
        %v2760 = vshrl.u32 %v2636, 16
        %v2762 = vrot.slane %v2760, 4
        %v2763 = vor.u32 %v2762, %v2758
        %v2764 = vrot.slane %v2763, 4
        %v2766 = vshll.u32 %v2637, 16
        %v2768 = vrot.slane %v2766, 5
        %v2769 = vsel %vm1512, %v2764, %v2768
        %v2771 = vshrl.u32 %v2638, 16
        %v2773 = vrot.slane %v2771, 4
        %v2774 = vshll.u32 %v2638, 16
        %v2776 = vrot.slane %v2774, 5
        %v2777 = vor.u32 %v2773, %v2776
        %v2778 = vrot.slane %v2777, 4
        %v2780 = vshll.u32 %v2639, 16
        %v2782 = vrot.slane %v2780, 5
        %v2783 = vsel %vm1512, %v2778, %v2782
        %v2784 = vshrl.u32 %v2639, 16
        %v2786 = vrot.slane %v2784, 4
        %v2787 = vor.u32 %v2786, %v2782
        %v2788 = vrot.slane %v2787, 4
        %v2790 = vshll.u32 %v2640, 16
        %v2792 = vrot.slane %v2790, 5
        %v2793 = vsel %vm1512, %v2788, %v2792
        %v2795 = vshrl.u32 %v2641, 16
        %v2797 = vrot.slane %v2795, 4
        %v2798 = vshll.u32 %v2641, 16
        %v2800 = vrot.slane %v2798, 5
        %v2801 = vor.u32 %v2797, %v2800
        %v2802 = vrot.slane %v2801, 4
        %v2804 = vshll.u32 %v2642, 16
        %v2806 = vrot.slane %v2804, 5
        %v2807 = vsel %vm1512, %v2802, %v2806
        %v2808 = vshrl.u32 %v2642, 16
        %v2810 = vrot.slane %v2808, 4
        %v2811 = vor.u32 %v2810, %v2806
        %v2812 = vrot.slane %v2811, 4
        %v2814 = vshll.u32 %v2643, 16
        %v2816 = vrot.slane %v2814, 5
        %v2817 = vsel %vm1512, %v2812, %v2816
        %v2819 = vshrl.u32 %v2644, 16
        %v2821 = vrot.slane %v2819, 4
        %v2822 = vshll.u32 %v2644, 16
        %v2824 = vrot.slane %v2822, 5
        %v2825 = vor.u32 %v2821, %v2824
        %v2826 = vrot.slane %v2825, 4
        %v2828 = vshll.u32 %v2645, 16
        %v2830 = vrot.slane %v2828, 5
        %v2831 = vsel %vm1512, %v2826, %v2830
        %v2832 = vshrl.u32 %v2645, 16
        %v2834 = vrot.slane %v2832, 4
        %v2835 = vor.u32 %v2834, %v2830
        %v2836 = vrot.slane %v2835, 4
        %v2838 = vshll.u32 %v2646, 16
        %v2840 = vrot.slane %v2838, 5
        %v2841 = vsel %vm1512, %v2836, %v2840
        %v2843 = vshrl.u32 %v2647, 16
        %v2845 = vrot.slane %v2843, 4
        %v2846 = vshll.u32 %v2647, 16
        %v2848 = vrot.slane %v2846, 5
        %v2849 = vor.u32 %v2845, %v2848
        %v2850 = vrot.slane %v2849, 4
        %v2852 = vshll.u32 %v2648, 16
        %v2854 = vrot.slane %v2852, 5
        %v2855 = vsel %vm1512, %v2850, %v2854
        %v2856 = vshrl.u32 %v2648, 16
        %v2858 = vrot.slane %v2856, 4
        %v2859 = vor.u32 %v2858, %v2854
        %v2860 = vrot.slane %v2859, 4
        %v2862 = vshll.u32 %v2649, 16
        %v2864 = vrot.slane %v2862, 5
        %v2865 = vsel %vm1512, %v2860, %v2864
        %v2867 = vshrl.u32 %v2650, 16
        %v2869 = vrot.slane %v2867, 4
        %v2870 = vshll.u32 %v2650, 16
        %v2872 = vrot.slane %v2870, 5
        %v2873 = vor.u32 %v2869, %v2872
        %v2874 = vrot.slane %v2873, 4
        %v2876 = vshll.u32 %v2651, 16
        %v2878 = vrot.slane %v2876, 5
        %v2879 = vsel %vm1512, %v2874, %v2878
        %v2880 = vshrl.u32 %v2651, 16
        %v2882 = vrot.slane %v2880, 4
        %v2883 = vor.u32 %v2882, %v2878
        %v2884 = vrot.slane %v2883, 4
        %v2886 = vshll.u32 %v2652, 16
        %v2888 = vrot.slane %v2886, 5
        %v2889 = vsel %vm1512, %v2884, %v2888
        %v2891 = vshrl.u32 %v2653, 16
        %v2893 = vrot.slane %v2891, 4
        %v2894 = vshll.u32 %v2653, 16
        %v2896 = vrot.slane %v2894, 5
        %v2897 = vor.u32 %v2893, %v2896
        %v2898 = vrot.slane %v2897, 4
        %v2900 = vshll.u32 %v2654, 16
        %v2902 = vrot.slane %v2900, 5
        %v2903 = vsel %vm1512, %v2898, %v2902
        %v2904 = vshrl.u32 %v2654, 16
        %v2906 = vrot.slane %v2904, 4
        %v2907 = vor.u32 %v2906, %v2902
        %v2908 = vrot.slane %v2907, 4
        %v2910 = vshll.u32 %v2655, 16
        %v2912 = vrot.slane %v2910, 5
        %v2913 = vsel %vm1512, %v2908, %v2912
        %v2915 = vshrl.u32 %v2656, 16
        %v2917 = vrot.slane %v2915, 4
        %v2918 = vshll.u32 %v2656, 16
        %v2920 = vrot.slane %v2918, 5
        %v2921 = vor.u32 %v2917, %v2920
        %v2922 = vrot.slane %v2921, 4
        %v2924 = vshll.u32 %v2657, 16
        %v2926 = vrot.slane %v2924, 5
        %v2927 = vsel %vm1512, %v2922, %v2926
        %v2928 = vshrl.u32 %v2657, 16
        %v2930 = vrot.slane %v2928, 4
        %v2931 = vor.u32 %v2930, %v2926
        %v2932 = vrot.slane %v2931, 4
        %v2934 = vshll.u32 %v2658, 16
        %v2936 = vrot.slane %v2934, 5
        %v2937 = vsel %vm1512, %v2932, %v2936
        %v2939 = vshrl.u32 %v2659, 16
        %v2941 = vrot.slane %v2939, 4
        %v2942 = vshll.u32 %v2659, 16
        %v2944 = vrot.slane %v2942, 5
        %v2945 = vor.u32 %v2941, %v2944
        %v2946 = vrot.slane %v2945, 4
        %v2948 = vshll.u32 %v2660, 16
        %v2950 = vrot.slane %v2948, 5
        %v2951 = vsel %vm1512, %v2946, %v2950
        %v2952 = vshrl.u32 %v2660, 16
        %v2954 = vrot.slane %v2952, 4
        %v2955 = vor.u32 %v2954, %v2950
        %v2956 = vrot.slane %v2955, 4
        %v2958 = vshll.u32 %v2661, 16
        %v2960 = vrot.slane %v2958, 5
        %v2961 = vsel %vm1512, %v2956, %v2960
        %v2963 = vshrl.u32 %v2662, 16
        %v2965 = vrot.slane %v2963, 4
        %v2966 = vshll.u32 %v2662, 16
        %v2968 = vrot.slane %v2966, 5
        %v2969 = vor.u32 %v2965, %v2968
        %v2970 = vrot.slane %v2969, 4
        %v2972 = vshll.u32 %v2663, 16
        %v2974 = vrot.slane %v2972, 5
        %v2975 = vsel %vm1512, %v2970, %v2974
        %v2976 = vshrl.u32 %v2663, 16
        %v2978 = vrot.slane %v2976, 4
        %v2979 = vor.u32 %v2978, %v2974
        %v2980 = vrot.slane %v2979, 4
        %v2982 = vshll.u32 %v2664, 16
        %v2984 = vrot.slane %v2982, 5
        %v2985 = vsel %vm1512, %v2980, %v2984
        %v2987 = vshrl.u32 %v2665, 16
        %v2989 = vrot.slane %v2987, 4
        %v2990 = vshll.u32 %v2665, 16
        %v2992 = vrot.slane %v2990, 5
        %v2993 = vor.u32 %v2989, %v2992
        %v2994 = vrot.slane %v2993, 4
        %v2996 = vshll.u32 %v2666, 16
        %v2998 = vrot.slane %v2996, 5
        %v2999 = vsel %vm1512, %v2994, %v2998
        %v3000 = vshrl.u32 %v2666, 16
        %v3002 = vrot.slane %v3000, 4
        %v3003 = vor.u32 %v3002, %v2998
        %v3004 = vrot.slane %v3003, 4
        %v3006 = vshll.u32 %v2667, 16
        %v3008 = vrot.slane %v3006, 5
        %v3009 = vsel %vm1512, %v3004, %v3008
        %v3011 = vshrl.u32 %v2668, 16
        %v3013 = vrot.slane %v3011, 4
        %v3014 = vshll.u32 %v2668, 16
        %v3016 = vrot.slane %v3014, 5
        %v3017 = vor.u32 %v3013, %v3016
        %v3018 = vrot.slane %v3017, 4
        %v3020 = vshll.u32 %v2669, 16
        %v3022 = vrot.slane %v3020, 5
        %v3023 = vsel %vm1512, %v3018, %v3022
        %v3024 = vshrl.u32 %v2669, 16
        %v3026 = vrot.slane %v3024, 4
        %v3027 = vor.u32 %v3026, %v3022
        %v3028 = vrot.slane %v3027, 4
        %v3030 = vshll.u32 %v2670, 16
        %v3032 = vrot.slane %v3030, 5
        %v3033 = vsel %vm1512, %v3028, %v3032
        %v3035 = vshrl.u32 %v2671, 16
        %v3037 = vrot.slane %v3035, 4
        %v3038 = vshll.u32 %v2671, 16
        %v3040 = vrot.slane %v3038, 5
        %v3041 = vor.u32 %v3037, %v3040
        %v3042 = vrot.slane %v3041, 4
        %v3044 = vshll.u32 %v2672, 16
        %v3046 = vrot.slane %v3044, 5
        %v3047 = vsel %vm1512, %v3042, %v3046
        %v3048 = vshrl.u32 %v2672, 16
        %v3050 = vrot.slane %v3048, 4
        %v3051 = vor.u32 %v3050, %v3046
        %v3052 = vrot.slane %v3051, 4
        %v3054 = vshll.u32 %v2673, 16
        %v3056 = vrot.slane %v3054, 5
        %v3057 = vsel %vm1512, %v3052, %v3056
        %3058 = vrot.lane.b32.xlu0 %v2687, 16
        %v3059 = vpop.permute.xlu0 %3058
        %3060 = vrot.lane.b32.xlu0 %v2697, 16
        %v3061 = vpop.permute.xlu0 %3060
        %3062 = vrot.lane.b32.xlu0 %v2711, 16
        %v3063 = vpop.permute.xlu0 %3062
        %3064 = vrot.lane.b32.xlu0 %v2721, 16
        %v3065 = vpop.permute.xlu0 %3064
        %3066 = vrot.lane.b32.xlu0 %v2735, 16
        %v3067 = vpop.permute.xlu0 %3066
        %3068 = vrot.lane.b32.xlu0 %v2745, 16
        %v3069 = vpop.permute.xlu0 %3068
        %3070 = vrot.lane.b32.xlu0 %v2759, 16
        %v3071 = vpop.permute.xlu0 %3070
        %3072 = vrot.lane.b32.xlu0 %v2769, 16
        %v3073 = vpop.permute.xlu0 %3072
        %3074 = vrot.lane.b32.xlu0 %v2783, 16
        %v3075 = vpop.permute.xlu0 %3074
        %3076 = vrot.lane.b32.xlu0 %v2793, 16
        %v3077 = vpop.permute.xlu0 %3076
        %3078 = vrot.lane.b32.xlu0 %v2807, 16
        %v3079 = vpop.permute.xlu0 %3078
        %3080 = vrot.lane.b32.xlu0 %v2817, 16
        %v3081 = vpop.permute.xlu0 %3080
        %3082 = vrot.lane.b32.xlu0 %v2831, 16
        %v3083 = vpop.permute.xlu0 %3082
        %3084 = vrot.lane.b32.xlu0 %v2841, 16
        %v3085 = vpop.permute.xlu0 %3084
        %3086 = vrot.lane.b32.xlu0 %v2855, 16
        %v3087 = vpop.permute.xlu0 %3086
        %3088 = vrot.lane.b32.xlu0 %v2865, 16
        %v3089 = vpop.permute.xlu0 %3088
        %3090 = vrot.lane.b32.xlu0 %v2879, 16
        %v3091 = vpop.permute.xlu0 %3090
        %3092 = vrot.lane.b32.xlu0 %v2889, 16
        %v3093 = vpop.permute.xlu0 %3092
        %3094 = vrot.lane.b32.xlu0 %v2903, 16
        %v3095 = vpop.permute.xlu0 %3094
        %3096 = vrot.lane.b32.xlu0 %v2913, 16
        %v3097 = vpop.permute.xlu0 %3096
        %3098 = vrot.lane.b32.xlu0 %v2927, 16
        %v3099 = vpop.permute.xlu0 %3098
        %3100 = vrot.lane.b32.xlu0 %v2937, 16
        %v3101 = vpop.permute.xlu0 %3100
        %3102 = vrot.lane.b32.xlu0 %v2951, 16
        %v3103 = vpop.permute.xlu0 %3102
        %3104 = vrot.lane.b32.xlu0 %v2961, 16
        %v3105 = vpop.permute.xlu0 %3104
        %3106 = vrot.lane.b32.xlu0 %v2975, 16
        %v3107 = vpop.permute.xlu0 %3106
        %3108 = vrot.lane.b32.xlu0 %v2985, 16
        %v3109 = vpop.permute.xlu0 %3108
        %3110 = vrot.lane.b32.xlu0 %v2999, 16
        %v3111 = vpop.permute.xlu0 %3110
        %3112 = vrot.lane.b32.xlu0 %v3009, 16
        %v3113 = vpop.permute.xlu0 %3112
        %3114 = vrot.lane.b32.xlu0 %v3023, 16
        %v3115 = vpop.permute.xlu0 %3114
        %3116 = vrot.lane.b32.xlu0 %v3033, 16
        %v3117 = vpop.permute.xlu0 %3116
        %3118 = vrot.lane.b32.xlu0 %v3047, 16
        %v3119 = vpop.permute.xlu0 %3118
        %3120 = vrot.lane.b32.xlu0 %v3057, 16
        %v3121 = vpop.permute.xlu0 %3120
        %vm3154 = vcmask 420992
        %3155 = vst.msk [vmem:[#allocation3 + $0x4] sm:$0xf] %vm3154, %v3059
        %3156 = vst.msk [vmem:[#allocation3 + $0x10] sm:$0xf] %vm3154, %v3061
        %3157 = vst.msk [vmem:[#allocation3 + $0x1c] sm:$0xf] %vm3154, %v3063
        %3158 = vst.msk [vmem:[#allocation3 + $0x28] sm:$0xf] %vm3154, %v3065
        %3159 = vst.msk [vmem:[#allocation3 + $0x34] sm:$0xf] %vm3154, %v3067
        %3160 = vst.msk [vmem:[#allocation3 + $0x40] sm:$0xf] %vm3154, %v3069
        %3161 = vst.msk [vmem:[#allocation3 + $0x4c] sm:$0xf] %vm3154, %v3071
        %3162 = vst.msk [vmem:[#allocation3 + $0x58] sm:$0xf] %vm3154, %v3073
        %3163 = vst.msk [vmem:[#allocation3 + $0x64] sm:$0xf] %vm3154, %v3075
        %3164 = vst.msk [vmem:[#allocation3 + $0x70] sm:$0xf] %vm3154, %v3077
        %3165 = vst.msk [vmem:[#allocation3 + $0x7c] sm:$0xf] %vm3154, %v3079
        %3166 = vst.msk [vmem:[#allocation3 + $0x88] sm:$0xf] %vm3154, %v3081
        %3167 = vst.msk [vmem:[#allocation3 + $0x94] sm:$0xf] %vm3154, %v3083
        %3168 = vst.msk [vmem:[#allocation3 + $0xa0] sm:$0xf] %vm3154, %v3085
        %3169 = vst.msk [vmem:[#allocation3 + $0xac] sm:$0xf] %vm3154, %v3087
        %3170 = vst.msk [vmem:[#allocation3 + $0xb8] sm:$0xf] %vm3154, %v3089
        %3171 = vst.msk [vmem:[#allocation3 + $0xc4] sm:$0xf] %vm3154, %v3091
        %3172 = vst.msk [vmem:[#allocation3 + $0xd0] sm:$0xf] %vm3154, %v3093
        %3173 = vst.msk [vmem:[#allocation3 + $0xdc] sm:$0xf] %vm3154, %v3095
        %3174 = vst.msk [vmem:[#allocation3 + $0xe8] sm:$0xf] %vm3154, %v3097
        %3175 = vst.msk [vmem:[#allocation3 + $0xf4] sm:$0xf] %vm3154, %v3099
        %3176 = vst.msk [vmem:[#allocation3 + $0x100] sm:$0xf] %vm3154, %v3101
        %3177 = vst.msk [vmem:[#allocation3 + $0x10c] sm:$0xf] %vm3154, %v3103
        %3178 = vst.msk [vmem:[#allocation3 + $0x118] sm:$0xf] %vm3154, %v3105
        %3179 = vst.msk [vmem:[#allocation3 + $0x124] sm:$0xf] %vm3154, %v3107
        %3180 = vst.msk [vmem:[#allocation3 + $0x130] sm:$0xf] %vm3154, %v3109
        %3181 = vst.msk [vmem:[#allocation3 + $0x13c] sm:$0xf] %vm3154, %v3111
        %3182 = vst.msk [vmem:[#allocation3 + $0x148] sm:$0xf] %vm3154, %v3113
        %3183 = vst.msk [vmem:[#allocation3 + $0x154] sm:$0xf] %vm3154, %v3115
        %3184 = vst.msk [vmem:[#allocation3 + $0x160] sm:$0xf] %vm3154, %v3117
        %3185 = vst.msk [vmem:[#allocation3 + $0x16c] sm:$0xf] %vm3154, %v3119
        %3186 = vst.msk [vmem:[#allocation3 + $0x178] sm:$0xf] %vm3154, %v3121
        %v3187 = vld [vmem:[%s714] sm:$0xe]
        %v3188 = vld [vmem:[%s714 + $0x4] sm:$0xf]
        %v3189 = vld [vmem:[%s714 + $0x8] sm:$0x1]
        %v3190 = vld [vmem:[%s714 + $0xc] sm:$0xe]
        %v3191 = vld [vmem:[%s714 + $0x10] sm:$0xf]
        %v3192 = vld [vmem:[%s714 + $0x14] sm:$0x1]
        %v3193 = vld [vmem:[%s714 + $0x18] sm:$0xe]
        %v3194 = vld [vmem:[%s714 + $0x1c] sm:$0xf]
        %v3195 = vld [vmem:[%s714 + $0x20] sm:$0x1]
        %v3196 = vld [vmem:[%s714 + $0x24] sm:$0xe]
        %v3197 = vld [vmem:[%s714 + $0x28] sm:$0xf]
        %v3198 = vld [vmem:[%s714 + $0x2c] sm:$0x1]
        %v3199 = vld [vmem:[%s714 + $0x30] sm:$0xe]
        %v3200 = vld [vmem:[%s714 + $0x34] sm:$0xf]
        %v3201 = vld [vmem:[%s714 + $0x38] sm:$0x1]
        %v3202 = vld [vmem:[%s714 + $0x3c] sm:$0xe]
        %v3203 = vld [vmem:[%s714 + $0x40] sm:$0xf]
        %v3204 = vld [vmem:[%s714 + $0x44] sm:$0x1]
        %v3205 = vld [vmem:[%s714 + $0x48] sm:$0xe]
        %v3206 = vld [vmem:[%s714 + $0x4c] sm:$0xf]
        %v3207 = vld [vmem:[%s714 + $0x50] sm:$0x1]
        %v3208 = vld [vmem:[%s714 + $0x54] sm:$0xe]
        %v3209 = vld [vmem:[%s714 + $0x58] sm:$0xf]
        %v3210 = vld [vmem:[%s714 + $0x5c] sm:$0x1]
        %v3211 = vld [vmem:[%s714 + $0x60] sm:$0xe]
        %v3212 = vld [vmem:[%s714 + $0x64] sm:$0xf]
        %v3213 = vld [vmem:[%s714 + $0x68] sm:$0x1]
        %v3214 = vld [vmem:[%s714 + $0x6c] sm:$0xe]
        %v3215 = vld [vmem:[%s714 + $0x70] sm:$0xf]
        %v3216 = vld [vmem:[%s714 + $0x74] sm:$0x1]
        %v3217 = vld [vmem:[%s714 + $0x78] sm:$0xe]
        %v3218 = vld [vmem:[%s714 + $0x7c] sm:$0xf]
        %v3219 = vld [vmem:[%s714 + $0x80] sm:$0x1]
        %v3220 = vld [vmem:[%s714 + $0x84] sm:$0xe]
        %v3221 = vld [vmem:[%s714 + $0x88] sm:$0xf]
        %v3222 = vld [vmem:[%s714 + $0x8c] sm:$0x1]
        %v3223 = vld [vmem:[%s714 + $0x90] sm:$0xe]
        %v3224 = vld [vmem:[%s714 + $0x94] sm:$0xf]
        %v3225 = vld [vmem:[%s714 + $0x98] sm:$0x1]
        %v3226 = vld [vmem:[%s714 + $0x9c] sm:$0xe]
        %v3227 = vld [vmem:[%s714 + $0xa0] sm:$0xf]
        %v3228 = vld [vmem:[%s714 + $0xa4] sm:$0x1]
        %v3229 = vld [vmem:[%s714 + $0xa8] sm:$0xe]
        %v3230 = vld [vmem:[%s714 + $0xac] sm:$0xf]
        %v3231 = vld [vmem:[%s714 + $0xb0] sm:$0x1]
        %v3232 = vld [vmem:[%s714 + $0xb4] sm:$0xe]
        %v3233 = vld [vmem:[%s714 + $0xb8] sm:$0xf]
        %v3234 = vld [vmem:[%s714 + $0xbc] sm:$0x1]
        %v3283 = vrot.slane %v3187, 5
        %v3284 = vrot.slane %v3283, 4
        %v3285 = vrot.slane %v3188, 5
        %v3286 = vsel %vm2124, %v3284, %v3285
        %v3287 = vrot.slane %v3285, 4
        %v3288 = vrot.slane %v3189, 5
        %v3289 = vsel %vm2124, %v3287, %v3288
        %v3290 = vrot.slane %v3190, 5
        %v3291 = vrot.slane %v3290, 4
        %v3292 = vrot.slane %v3191, 5
        %v3293 = vsel %vm2124, %v3291, %v3292
        %v3294 = vrot.slane %v3292, 4
        %v3295 = vrot.slane %v3192, 5
        %v3296 = vsel %vm2124, %v3294, %v3295
        %v3297 = vrot.slane %v3193, 5
        %v3298 = vrot.slane %v3297, 4
        %v3299 = vrot.slane %v3194, 5
        %v3300 = vsel %vm2124, %v3298, %v3299
        %v3301 = vrot.slane %v3299, 4
        %v3302 = vrot.slane %v3195, 5
        %v3303 = vsel %vm2124, %v3301, %v3302
        %v3304 = vrot.slane %v3196, 5
        %v3305 = vrot.slane %v3304, 4
        %v3306 = vrot.slane %v3197, 5
        %v3307 = vsel %vm2124, %v3305, %v3306
        %v3308 = vrot.slane %v3306, 4
        %v3309 = vrot.slane %v3198, 5
        %v3310 = vsel %vm2124, %v3308, %v3309
        %v3311 = vrot.slane %v3199, 5
        %v3312 = vrot.slane %v3311, 4
        %v3313 = vrot.slane %v3200, 5
        %v3314 = vsel %vm2124, %v3312, %v3313
        %v3315 = vrot.slane %v3313, 4
        %v3316 = vrot.slane %v3201, 5
        %v3317 = vsel %vm2124, %v3315, %v3316
        %v3318 = vrot.slane %v3202, 5
        %v3319 = vrot.slane %v3318, 4
        %v3320 = vrot.slane %v3203, 5
        %v3321 = vsel %vm2124, %v3319, %v3320
        %v3322 = vrot.slane %v3320, 4
        %v3323 = vrot.slane %v3204, 5
        %v3324 = vsel %vm2124, %v3322, %v3323
        %v3325 = vrot.slane %v3205, 5
        %v3326 = vrot.slane %v3325, 4
        %v3327 = vrot.slane %v3206, 5
        %v3328 = vsel %vm2124, %v3326, %v3327
        %v3329 = vrot.slane %v3327, 4
        %v3330 = vrot.slane %v3207, 5
        %v3331 = vsel %vm2124, %v3329, %v3330
        %v3332 = vrot.slane %v3208, 5
        %v3333 = vrot.slane %v3332, 4
        %v3334 = vrot.slane %v3209, 5
        %v3335 = vsel %vm2124, %v3333, %v3334
        %v3336 = vrot.slane %v3334, 4
        %v3337 = vrot.slane %v3210, 5
        %v3338 = vsel %vm2124, %v3336, %v3337
        %v3339 = vrot.slane %v3211, 5
        %v3340 = vrot.slane %v3339, 4
        %v3341 = vrot.slane %v3212, 5
        %v3342 = vsel %vm2124, %v3340, %v3341
        %v3343 = vrot.slane %v3341, 4
        %v3344 = vrot.slane %v3213, 5
        %v3345 = vsel %vm2124, %v3343, %v3344
        %v3346 = vrot.slane %v3214, 5
        %v3347 = vrot.slane %v3346, 4
        %v3348 = vrot.slane %v3215, 5
        %v3349 = vsel %vm2124, %v3347, %v3348
        %v3350 = vrot.slane %v3348, 4
        %v3351 = vrot.slane %v3216, 5
        %v3352 = vsel %vm2124, %v3350, %v3351
        %v3353 = vrot.slane %v3217, 5
        %v3354 = vrot.slane %v3353, 4
        %v3355 = vrot.slane %v3218, 5
        %v3356 = vsel %vm2124, %v3354, %v3355
        %v3357 = vrot.slane %v3355, 4
        %v3358 = vrot.slane %v3219, 5
        %v3359 = vsel %vm2124, %v3357, %v3358
        %v3360 = vrot.slane %v3220, 5
        %v3361 = vrot.slane %v3360, 4
        %v3362 = vrot.slane %v3221, 5
        %v3363 = vsel %vm2124, %v3361, %v3362
        %v3364 = vrot.slane %v3362, 4
        %v3365 = vrot.slane %v3222, 5
        %v3366 = vsel %vm2124, %v3364, %v3365
        %v3367 = vrot.slane %v3223, 5
        %v3368 = vrot.slane %v3367, 4
        %v3369 = vrot.slane %v3224, 5
        %v3370 = vsel %vm2124, %v3368, %v3369
        %v3371 = vrot.slane %v3369, 4
        %v3372 = vrot.slane %v3225, 5
        %v3373 = vsel %vm2124, %v3371, %v3372
        %v3374 = vrot.slane %v3226, 5
        %v3375 = vrot.slane %v3374, 4
        %v3376 = vrot.slane %v3227, 5
        %v3377 = vsel %vm2124, %v3375, %v3376
        %v3378 = vrot.slane %v3376, 4
        %v3379 = vrot.slane %v3228, 5
        %v3380 = vsel %vm2124, %v3378, %v3379
        %v3381 = vrot.slane %v3229, 5
        %v3382 = vrot.slane %v3381, 4
        %v3383 = vrot.slane %v3230, 5
        %v3384 = vsel %vm2124, %v3382, %v3383
        %v3385 = vrot.slane %v3383, 4
        %v3386 = vrot.slane %v3231, 5
        %v3387 = vsel %vm2124, %v3385, %v3386
        %v3388 = vrot.slane %v3232, 5
        %v3389 = vrot.slane %v3388, 4
        %v3390 = vrot.slane %v3233, 5
        %v3391 = vsel %vm2124, %v3389, %v3390
        %v3392 = vrot.slane %v3390, 4
        %v3393 = vrot.slane %v3234, 5
        %v3394 = vsel %vm2124, %v3392, %v3393
        %3395 = vrot.lane.b32.xlu0 %v3286, 52
        %v3396 = vpop.permute.xlu0 %3395
        %3397 = vrot.lane.b32.xlu0 %v3289, 52
        %v3398 = vpop.permute.xlu0 %3397
        %3399 = vrot.lane.b32.xlu0 %v3293, 52
        %v3400 = vpop.permute.xlu0 %3399
        %3401 = vrot.lane.b32.xlu0 %v3296, 52
        %v3402 = vpop.permute.xlu0 %3401
        %3403 = vrot.lane.b32.xlu0 %v3300, 52
        %v3404 = vpop.permute.xlu0 %3403
        %3405 = vrot.lane.b32.xlu0 %v3303, 52
        %v3406 = vpop.permute.xlu0 %3405
        %3407 = vrot.lane.b32.xlu0 %v3307, 52
        %v3408 = vpop.permute.xlu0 %3407
        %3409 = vrot.lane.b32.xlu0 %v3310, 52
        %v3410 = vpop.permute.xlu0 %3409
        %3411 = vrot.lane.b32.xlu0 %v3314, 52
        %v3412 = vpop.permute.xlu0 %3411
        %3413 = vrot.lane.b32.xlu0 %v3317, 52
        %v3414 = vpop.permute.xlu0 %3413
        %3415 = vrot.lane.b32.xlu0 %v3321, 52
        %v3416 = vpop.permute.xlu0 %3415
        %3417 = vrot.lane.b32.xlu0 %v3324, 52
        %v3418 = vpop.permute.xlu0 %3417
        %3419 = vrot.lane.b32.xlu0 %v3328, 52
        %v3420 = vpop.permute.xlu0 %3419
        %3421 = vrot.lane.b32.xlu0 %v3331, 52
        %v3422 = vpop.permute.xlu0 %3421
        %3423 = vrot.lane.b32.xlu0 %v3335, 52
        %v3424 = vpop.permute.xlu0 %3423
        %3425 = vrot.lane.b32.xlu0 %v3338, 52
        %v3426 = vpop.permute.xlu0 %3425
        %3427 = vrot.lane.b32.xlu0 %v3342, 52
        %v3428 = vpop.permute.xlu0 %3427
        %3429 = vrot.lane.b32.xlu0 %v3345, 52
        %v3430 = vpop.permute.xlu0 %3429
        %3431 = vrot.lane.b32.xlu0 %v3349, 52
        %v3432 = vpop.permute.xlu0 %3431
        %3433 = vrot.lane.b32.xlu0 %v3352, 52
        %v3434 = vpop.permute.xlu0 %3433
        %3435 = vrot.lane.b32.xlu0 %v3356, 52
        %v3436 = vpop.permute.xlu0 %3435
        %3437 = vrot.lane.b32.xlu0 %v3359, 52
        %v3438 = vpop.permute.xlu0 %3437
        %3439 = vrot.lane.b32.xlu0 %v3363, 52
        %v3440 = vpop.permute.xlu0 %3439
        %3441 = vrot.lane.b32.xlu0 %v3366, 52
        %v3442 = vpop.permute.xlu0 %3441
        %3443 = vrot.lane.b32.xlu0 %v3370, 52
        %v3444 = vpop.permute.xlu0 %3443
        %3445 = vrot.lane.b32.xlu0 %v3373, 52
        %v3446 = vpop.permute.xlu0 %3445
        %3447 = vrot.lane.b32.xlu0 %v3377, 52
        %v3448 = vpop.permute.xlu0 %3447
        %3449 = vrot.lane.b32.xlu0 %v3380, 52
        %v3450 = vpop.permute.xlu0 %3449
        %3451 = vrot.lane.b32.xlu0 %v3384, 52
        %v3452 = vpop.permute.xlu0 %3451
        %3453 = vrot.lane.b32.xlu0 %v3387, 52
        %v3454 = vpop.permute.xlu0 %3453
        %3455 = vrot.lane.b32.xlu0 %v3391, 52
        %v3456 = vpop.permute.xlu0 %3455
        %3457 = vrot.lane.b32.xlu0 %v3394, 52
        %v3458 = vpop.permute.xlu0 %3457
        %vm3491 = vcmask 716192
        %3492 = vst.msk [vmem:[#allocation3 + $0x4] sm:$0xf] %vm3491, %v3396
        %3493 = vst.msk [vmem:[#allocation3 + $0x10] sm:$0xf] %vm3491, %v3398
        %3494 = vst.msk [vmem:[#allocation3 + $0x1c] sm:$0xf] %vm3491, %v3400
        %3495 = vst.msk [vmem:[#allocation3 + $0x28] sm:$0xf] %vm3491, %v3402
        %3496 = vst.msk [vmem:[#allocation3 + $0x34] sm:$0xf] %vm3491, %v3404
        %3497 = vst.msk [vmem:[#allocation3 + $0x40] sm:$0xf] %vm3491, %v3406
        %3498 = vst.msk [vmem:[#allocation3 + $0x4c] sm:$0xf] %vm3491, %v3408
        %3499 = vst.msk [vmem:[#allocation3 + $0x58] sm:$0xf] %vm3491, %v3410
        %3500 = vst.msk [vmem:[#allocation3 + $0x64] sm:$0xf] %vm3491, %v3412
        %3501 = vst.msk [vmem:[#allocation3 + $0x70] sm:$0xf] %vm3491, %v3414
        %3502 = vst.msk [vmem:[#allocation3 + $0x7c] sm:$0xf] %vm3491, %v3416
        %3503 = vst.msk [vmem:[#allocation3 + $0x88] sm:$0xf] %vm3491, %v3418
        %3504 = vst.msk [vmem:[#allocation3 + $0x94] sm:$0xf] %vm3491, %v3420
        %3505 = vst.msk [vmem:[#allocation3 + $0xa0] sm:$0xf] %vm3491, %v3422
        %3506 = vst.msk [vmem:[#allocation3 + $0xac] sm:$0xf] %vm3491, %v3424
        %3507 = vst.msk [vmem:[#allocation3 + $0xb8] sm:$0xf] %vm3491, %v3426
        %3508 = vst.msk [vmem:[#allocation3 + $0xc4] sm:$0xf] %vm3491, %v3428
        %3509 = vst.msk [vmem:[#allocation3 + $0xd0] sm:$0xf] %vm3491, %v3430
        %3510 = vst.msk [vmem:[#allocation3 + $0xdc] sm:$0xf] %vm3491, %v3432
        %3511 = vst.msk [vmem:[#allocation3 + $0xe8] sm:$0xf] %vm3491, %v3434
        %3512 = vst.msk [vmem:[#allocation3 + $0xf4] sm:$0xf] %vm3491, %v3436
        %3513 = vst.msk [vmem:[#allocation3 + $0x100] sm:$0xf] %vm3491, %v3438
        %3514 = vst.msk [vmem:[#allocation3 + $0x10c] sm:$0xf] %vm3491, %v3440
        %3515 = vst.msk [vmem:[#allocation3 + $0x118] sm:$0xf] %vm3491, %v3442
        %3516 = vst.msk [vmem:[#allocation3 + $0x124] sm:$0xf] %vm3491, %v3444
        %3517 = vst.msk [vmem:[#allocation3 + $0x130] sm:$0xf] %vm3491, %v3446
        %3518 = vst.msk [vmem:[#allocation3 + $0x13c] sm:$0xf] %vm3491, %v3448
        %3519 = vst.msk [vmem:[#allocation3 + $0x148] sm:$0xf] %vm3491, %v3450
        %3520 = vst.msk [vmem:[#allocation3 + $0x154] sm:$0xf] %vm3491, %v3452
        %3521 = vst.msk [vmem:[#allocation3 + $0x160] sm:$0xf] %vm3491, %v3454
        %3522 = vst.msk [vmem:[#allocation3 + $0x16c] sm:$0xf] %vm3491, %v3456
        %3523 = vst.msk [vmem:[#allocation3 + $0x178] sm:$0xf] %vm3491, %v3458
        %s3524 = scalar_lea.vmem [#allocation2], 24
        %v3525 = vld [vmem:[%s3524] sm:$0xf]
        %v3526 = vld [vmem:[%s3524 + $0x4] sm:$0xf]
        %v3527 = vld [vmem:[%s3524 + $0xc] sm:$0xf]
        %v3528 = vld [vmem:[%s3524 + $0x10] sm:$0xf]
        %v3529 = vld [vmem:[%s3524 + $0x18] sm:$0xf]
        %v3530 = vld [vmem:[%s3524 + $0x1c] sm:$0xf]
        %v3531 = vld [vmem:[%s3524 + $0x24] sm:$0xf]
        %v3532 = vld [vmem:[%s3524 + $0x28] sm:$0xf]
        %v3533 = vld [vmem:[%s3524 + $0x30] sm:$0xf]
        %v3534 = vld [vmem:[%s3524 + $0x34] sm:$0xf]
        %v3535 = vld [vmem:[%s3524 + $0x3c] sm:$0xf]
        %v3536 = vld [vmem:[%s3524 + $0x40] sm:$0xf]
        %v3537 = vld [vmem:[%s3524 + $0x48] sm:$0xf]
        %v3538 = vld [vmem:[%s3524 + $0x4c] sm:$0xf]
        %v3539 = vld [vmem:[%s3524 + $0x54] sm:$0xf]
        %v3540 = vld [vmem:[%s3524 + $0x58] sm:$0xf]
        %v3541 = vld [vmem:[%s3524 + $0x60] sm:$0xf]
        %v3542 = vld [vmem:[%s3524 + $0x64] sm:$0xf]
        %v3543 = vld [vmem:[%s3524 + $0x6c] sm:$0xf]
        %v3544 = vld [vmem:[%s3524 + $0x70] sm:$0xf]
        %v3545 = vld [vmem:[%s3524 + $0x78] sm:$0xf]
        %v3546 = vld [vmem:[%s3524 + $0x7c] sm:$0xf]
        %v3547 = vld [vmem:[%s3524 + $0x84] sm:$0xf]
        %v3548 = vld [vmem:[%s3524 + $0x88] sm:$0xf]
        %v3549 = vld [vmem:[%s3524 + $0x90] sm:$0xf]
        %v3550 = vld [vmem:[%s3524 + $0x94] sm:$0xf]
        %v3551 = vld [vmem:[%s3524 + $0x9c] sm:$0xf]
        %v3552 = vld [vmem:[%s3524 + $0xa0] sm:$0xf]
        %v3553 = vld [vmem:[%s3524 + $0xa8] sm:$0xf]
        %v3554 = vld [vmem:[%s3524 + $0xac] sm:$0xf]
        %v3555 = vld [vmem:[%s3524 + $0xb4] sm:$0xf]
        %v3556 = vld [vmem:[%s3524 + $0xb8] sm:$0xf]
        %3589 = vrot.lane.b32.xlu0 %v3525, 88
        %v3590 = vpop.permute.xlu0 %3589
        %3591 = vrot.lane.b32.xlu0 %v3526, 88
        %v3592 = vpop.permute.xlu0 %3591
        %3593 = vrot.lane.b32.xlu0 %v3527, 88
        %v3594 = vpop.permute.xlu0 %3593
        %3595 = vrot.lane.b32.xlu0 %v3528, 88
        %v3596 = vpop.permute.xlu0 %3595
        %3597 = vrot.lane.b32.xlu0 %v3529, 88
        %v3598 = vpop.permute.xlu0 %3597
        %3599 = vrot.lane.b32.xlu0 %v3530, 88
        %v3600 = vpop.permute.xlu0 %3599
        %3601 = vrot.lane.b32.xlu0 %v3531, 88
        %v3602 = vpop.permute.xlu0 %3601
        %3603 = vrot.lane.b32.xlu0 %v3532, 88
        %v3604 = vpop.permute.xlu0 %3603
        %3605 = vrot.lane.b32.xlu0 %v3533, 88
        %v3606 = vpop.permute.xlu0 %3605
        %3607 = vrot.lane.b32.xlu0 %v3534, 88
        %v3608 = vpop.permute.xlu0 %3607
        %3609 = vrot.lane.b32.xlu0 %v3535, 88
        %v3610 = vpop.permute.xlu0 %3609
        %3611 = vrot.lane.b32.xlu0 %v3536, 88
        %v3612 = vpop.permute.xlu0 %3611
        %3613 = vrot.lane.b32.xlu0 %v3537, 88
        %v3614 = vpop.permute.xlu0 %3613
        %3615 = vrot.lane.b32.xlu0 %v3538, 88
        %v3616 = vpop.permute.xlu0 %3615
        %3617 = vrot.lane.b32.xlu0 %v3539, 88
        %v3618 = vpop.permute.xlu0 %3617
        %3619 = vrot.lane.b32.xlu0 %v3540, 88
        %v3620 = vpop.permute.xlu0 %3619
        %3621 = vrot.lane.b32.xlu0 %v3541, 88
        %v3622 = vpop.permute.xlu0 %3621
        %3623 = vrot.lane.b32.xlu0 %v3542, 88
        %v3624 = vpop.permute.xlu0 %3623
        %3625 = vrot.lane.b32.xlu0 %v3543, 88
        %v3626 = vpop.permute.xlu0 %3625
        %3627 = vrot.lane.b32.xlu0 %v3544, 88
        %v3628 = vpop.permute.xlu0 %3627
        %3629 = vrot.lane.b32.xlu0 %v3545, 88
        %v3630 = vpop.permute.xlu0 %3629
        %3631 = vrot.lane.b32.xlu0 %v3546, 88
        %v3632 = vpop.permute.xlu0 %3631
        %3633 = vrot.lane.b32.xlu0 %v3547, 88
        %v3634 = vpop.permute.xlu0 %3633
        %3635 = vrot.lane.b32.xlu0 %v3548, 88
        %v3636 = vpop.permute.xlu0 %3635
        %3637 = vrot.lane.b32.xlu0 %v3549, 88
        %v3638 = vpop.permute.xlu0 %3637
        %3639 = vrot.lane.b32.xlu0 %v3550, 88
        %v3640 = vpop.permute.xlu0 %3639
        %3641 = vrot.lane.b32.xlu0 %v3551, 88
        %v3642 = vpop.permute.xlu0 %3641
        %3643 = vrot.lane.b32.xlu0 %v3552, 88
        %v3644 = vpop.permute.xlu0 %3643
        %3645 = vrot.lane.b32.xlu0 %v3553, 88
        %v3646 = vpop.permute.xlu0 %3645
        %3647 = vrot.lane.b32.xlu0 %v3554, 88
        %v3648 = vpop.permute.xlu0 %3647
        %3649 = vrot.lane.b32.xlu0 %v3555, 88
        %v3650 = vpop.permute.xlu0 %3649
        %3651 = vrot.lane.b32.xlu0 %v3556, 88
        %v3652 = vpop.permute.xlu0 %3651
        %vm3685 = vcmask 1011392
        %3686 = vst.msk [vmem:[#allocation3 + $0x4] sm:$0xf] %vm3685, %v3590
        %3687 = vst.msk [vmem:[#allocation3 + $0x10] sm:$0xf] %vm3685, %v3592
        %3688 = vst.msk [vmem:[#allocation3 + $0x1c] sm:$0xf] %vm3685, %v3594
        %3689 = vst.msk [vmem:[#allocation3 + $0x28] sm:$0xf] %vm3685, %v3596
        %3690 = vst.msk [vmem:[#allocation3 + $0x34] sm:$0xf] %vm3685, %v3598
        %3691 = vst.msk [vmem:[#allocation3 + $0x40] sm:$0xf] %vm3685, %v3600
        %3692 = vst.msk [vmem:[#allocation3 + $0x4c] sm:$0xf] %vm3685, %v3602
        %3693 = vst.msk [vmem:[#allocation3 + $0x58] sm:$0xf] %vm3685, %v3604
        %3694 = vst.msk [vmem:[#allocation3 + $0x64] sm:$0xf] %vm3685, %v3606
        %3695 = vst.msk [vmem:[#allocation3 + $0x70] sm:$0xf] %vm3685, %v3608
        %3696 = vst.msk [vmem:[#allocation3 + $0x7c] sm:$0xf] %vm3685, %v3610
        %3697 = vst.msk [vmem:[#allocation3 + $0x88] sm:$0xf] %vm3685, %v3612
        %3698 = vst.msk [vmem:[#allocation3 + $0x94] sm:$0xf] %vm3685, %v3614
        %3699 = vst.msk [vmem:[#allocation3 + $0xa0] sm:$0xf] %vm3685, %v3616
        %3700 = vst.msk [vmem:[#allocation3 + $0xac] sm:$0xf] %vm3685, %v3618
        %3701 = vst.msk [vmem:[#allocation3 + $0xb8] sm:$0xf] %vm3685, %v3620
        %3702 = vst.msk [vmem:[#allocation3 + $0xc4] sm:$0xf] %vm3685, %v3622
        %3703 = vst.msk [vmem:[#allocation3 + $0xd0] sm:$0xf] %vm3685, %v3624
        %3704 = vst.msk [vmem:[#allocation3 + $0xdc] sm:$0xf] %vm3685, %v3626
        %3705 = vst.msk [vmem:[#allocation3 + $0xe8] sm:$0xf] %vm3685, %v3628
        %3706 = vst.msk [vmem:[#allocation3 + $0xf4] sm:$0xf] %vm3685, %v3630
        %3707 = vst.msk [vmem:[#allocation3 + $0x100] sm:$0xf] %vm3685, %v3632
        %3708 = vst.msk [vmem:[#allocation3 + $0x10c] sm:$0xf] %vm3685, %v3634
        %3709 = vst.msk [vmem:[#allocation3 + $0x118] sm:$0xf] %vm3685, %v3636
        %3710 = vst.msk [vmem:[#allocation3 + $0x124] sm:$0xf] %vm3685, %v3638
        %3711 = vst.msk [vmem:[#allocation3 + $0x130] sm:$0xf] %vm3685, %v3640
        %3712 = vst.msk [vmem:[#allocation3 + $0x13c] sm:$0xf] %vm3685, %v3642
        %3713 = vst.msk [vmem:[#allocation3 + $0x148] sm:$0xf] %vm3685, %v3644
        %3714 = vst.msk [vmem:[#allocation3 + $0x154] sm:$0xf] %vm3685, %v3646
        %3715 = vst.msk [vmem:[#allocation3 + $0x160] sm:$0xf] %vm3685, %v3648
        %3716 = vst.msk [vmem:[#allocation3 + $0x16c] sm:$0xf] %vm3685, %v3650
        %3717 = vst.msk [vmem:[#allocation3 + $0x178] sm:$0xf] %vm3685, %v3652
        %v3718 = vld [vmem:[%s3524] sm:$0xf]
        %v3719 = vld [vmem:[%s3524 + $0x4] sm:$0xf]
        %v3720 = vld [vmem:[%s3524 + $0x8] sm:$0x1]
        %v3721 = vld [vmem:[%s3524 + $0xc] sm:$0xf]
        %v3722 = vld [vmem:[%s3524 + $0x10] sm:$0xf]
        %v3723 = vld [vmem:[%s3524 + $0x14] sm:$0x1]
        %v3724 = vld [vmem:[%s3524 + $0x18] sm:$0xf]
        %v3725 = vld [vmem:[%s3524 + $0x1c] sm:$0xf]
        %v3726 = vld [vmem:[%s3524 + $0x20] sm:$0x1]
        %v3727 = vld [vmem:[%s3524 + $0x24] sm:$0xf]
        %v3728 = vld [vmem:[%s3524 + $0x28] sm:$0xf]
        %v3729 = vld [vmem:[%s3524 + $0x2c] sm:$0x1]
        %v3730 = vld [vmem:[%s3524 + $0x30] sm:$0xf]
        %v3731 = vld [vmem:[%s3524 + $0x34] sm:$0xf]
        %v3732 = vld [vmem:[%s3524 + $0x38] sm:$0x1]
        %v3733 = vld [vmem:[%s3524 + $0x3c] sm:$0xf]
        %v3734 = vld [vmem:[%s3524 + $0x40] sm:$0xf]
        %v3735 = vld [vmem:[%s3524 + $0x44] sm:$0x1]
        %v3736 = vld [vmem:[%s3524 + $0x48] sm:$0xf]
        %v3737 = vld [vmem:[%s3524 + $0x4c] sm:$0xf]
        %v3738 = vld [vmem:[%s3524 + $0x50] sm:$0x1]
        %v3739 = vld [vmem:[%s3524 + $0x54] sm:$0xf]
        %v3740 = vld [vmem:[%s3524 + $0x58] sm:$0xf]
        %v3741 = vld [vmem:[%s3524 + $0x5c] sm:$0x1]
        %v3742 = vld [vmem:[%s3524 + $0x60] sm:$0xf]
        %v3743 = vld [vmem:[%s3524 + $0x64] sm:$0xf]
        %v3744 = vld [vmem:[%s3524 + $0x68] sm:$0x1]
        %v3745 = vld [vmem:[%s3524 + $0x6c] sm:$0xf]
        %v3746 = vld [vmem:[%s3524 + $0x70] sm:$0xf]
        %v3747 = vld [vmem:[%s3524 + $0x74] sm:$0x1]
        %v3748 = vld [vmem:[%s3524 + $0x78] sm:$0xf]
        %v3749 = vld [vmem:[%s3524 + $0x7c] sm:$0xf]
        %v3750 = vld [vmem:[%s3524 + $0x80] sm:$0x1]
        %v3751 = vld [vmem:[%s3524 + $0x84] sm:$0xf]
        %v3752 = vld [vmem:[%s3524 + $0x88] sm:$0xf]
        %v3753 = vld [vmem:[%s3524 + $0x8c] sm:$0x1]
        %v3754 = vld [vmem:[%s3524 + $0x90] sm:$0xf]
        %v3755 = vld [vmem:[%s3524 + $0x94] sm:$0xf]
        %v3756 = vld [vmem:[%s3524 + $0x98] sm:$0x1]
        %v3757 = vld [vmem:[%s3524 + $0x9c] sm:$0xf]
        %v3758 = vld [vmem:[%s3524 + $0xa0] sm:$0xf]
        %v3759 = vld [vmem:[%s3524 + $0xa4] sm:$0x1]
        %v3760 = vld [vmem:[%s3524 + $0xa8] sm:$0xf]
        %v3761 = vld [vmem:[%s3524 + $0xac] sm:$0xf]
        %v3762 = vld [vmem:[%s3524 + $0xb0] sm:$0x1]
        %v3763 = vld [vmem:[%s3524 + $0xb4] sm:$0xf]
        %v3764 = vld [vmem:[%s3524 + $0xb8] sm:$0xf]
        %v3765 = vld [vmem:[%s3524 + $0xbc] sm:$0x1]
        %v3767 = vshrl.u32 %v3718, 16
        %v3769 = vrot.slane %v3767, 4
        %v3770 = vshll.u32 %v3718, 16
        %v3772 = vrot.slane %v3770, 5
        %v3773 = vor.u32 %v3769, %v3772
        %v3774 = vrot.slane %v3773, 4
        %v3776 = vshll.u32 %v3719, 16
        %v3778 = vrot.slane %v3776, 5
        %v3779 = vsel %vm1512, %v3774, %v3778
        %v3780 = vshrl.u32 %v3719, 16
        %v3782 = vrot.slane %v3780, 4
        %v3783 = vor.u32 %v3782, %v3778
        %v3784 = vrot.slane %v3783, 4
        %v3786 = vshll.u32 %v3720, 16
        %v3788 = vrot.slane %v3786, 5
        %v3789 = vsel %vm1512, %v3784, %v3788
        %v3791 = vshrl.u32 %v3721, 16
        %v3793 = vrot.slane %v3791, 4
        %v3794 = vshll.u32 %v3721, 16
        %v3796 = vrot.slane %v3794, 5
        %v3797 = vor.u32 %v3793, %v3796
        %v3798 = vrot.slane %v3797, 4
        %v3800 = vshll.u32 %v3722, 16
        %v3802 = vrot.slane %v3800, 5
        %v3803 = vsel %vm1512, %v3798, %v3802
        %v3804 = vshrl.u32 %v3722, 16
        %v3806 = vrot.slane %v3804, 4
        %v3807 = vor.u32 %v3806, %v3802
        %v3808 = vrot.slane %v3807, 4
        %v3810 = vshll.u32 %v3723, 16
        %v3812 = vrot.slane %v3810, 5
        %v3813 = vsel %vm1512, %v3808, %v3812
        %v3815 = vshrl.u32 %v3724, 16
        %v3817 = vrot.slane %v3815, 4
        %v3818 = vshll.u32 %v3724, 16
        %v3820 = vrot.slane %v3818, 5
        %v3821 = vor.u32 %v3817, %v3820
        %v3822 = vrot.slane %v3821, 4
        %v3824 = vshll.u32 %v3725, 16
        %v3826 = vrot.slane %v3824, 5
        %v3827 = vsel %vm1512, %v3822, %v3826
        %v3828 = vshrl.u32 %v3725, 16
        %v3830 = vrot.slane %v3828, 4
        %v3831 = vor.u32 %v3830, %v3826
        %v3832 = vrot.slane %v3831, 4
        %v3834 = vshll.u32 %v3726, 16
        %v3836 = vrot.slane %v3834, 5
        %v3837 = vsel %vm1512, %v3832, %v3836
        %v3839 = vshrl.u32 %v3727, 16
        %v3841 = vrot.slane %v3839, 4
        %v3842 = vshll.u32 %v3727, 16
        %v3844 = vrot.slane %v3842, 5
        %v3845 = vor.u32 %v3841, %v3844
        %v3846 = vrot.slane %v3845, 4
        %v3848 = vshll.u32 %v3728, 16
        %v3850 = vrot.slane %v3848, 5
        %v3851 = vsel %vm1512, %v3846, %v3850
        %v3852 = vshrl.u32 %v3728, 16
        %v3854 = vrot.slane %v3852, 4
        %v3855 = vor.u32 %v3854, %v3850
        %v3856 = vrot.slane %v3855, 4
        %v3858 = vshll.u32 %v3729, 16
        %v3860 = vrot.slane %v3858, 5
        %v3861 = vsel %vm1512, %v3856, %v3860
        %v3863 = vshrl.u32 %v3730, 16
        %v3865 = vrot.slane %v3863, 4
        %v3866 = vshll.u32 %v3730, 16
        %v3868 = vrot.slane %v3866, 5
        %v3869 = vor.u32 %v3865, %v3868
        %v3870 = vrot.slane %v3869, 4
        %v3872 = vshll.u32 %v3731, 16
        %v3874 = vrot.slane %v3872, 5
        %v3875 = vsel %vm1512, %v3870, %v3874
        %v3876 = vshrl.u32 %v3731, 16
        %v3878 = vrot.slane %v3876, 4
        %v3879 = vor.u32 %v3878, %v3874
        %v3880 = vrot.slane %v3879, 4
        %v3882 = vshll.u32 %v3732, 16
        %v3884 = vrot.slane %v3882, 5
        %v3885 = vsel %vm1512, %v3880, %v3884
        %v3887 = vshrl.u32 %v3733, 16
        %v3889 = vrot.slane %v3887, 4
        %v3890 = vshll.u32 %v3733, 16
        %v3892 = vrot.slane %v3890, 5
        %v3893 = vor.u32 %v3889, %v3892
        %v3894 = vrot.slane %v3893, 4
        %v3896 = vshll.u32 %v3734, 16
        %v3898 = vrot.slane %v3896, 5
        %v3899 = vsel %vm1512, %v3894, %v3898
        %v3900 = vshrl.u32 %v3734, 16
        %v3902 = vrot.slane %v3900, 4
        %v3903 = vor.u32 %v3902, %v3898
        %v3904 = vrot.slane %v3903, 4
        %v3906 = vshll.u32 %v3735, 16
        %v3908 = vrot.slane %v3906, 5
        %v3909 = vsel %vm1512, %v3904, %v3908
        %v3911 = vshrl.u32 %v3736, 16
        %v3913 = vrot.slane %v3911, 4
        %v3914 = vshll.u32 %v3736, 16
        %v3916 = vrot.slane %v3914, 5
        %v3917 = vor.u32 %v3913, %v3916
        %v3918 = vrot.slane %v3917, 4
        %v3920 = vshll.u32 %v3737, 16
        %v3922 = vrot.slane %v3920, 5
        %v3923 = vsel %vm1512, %v3918, %v3922
        %v3924 = vshrl.u32 %v3737, 16
        %v3926 = vrot.slane %v3924, 4
        %v3927 = vor.u32 %v3926, %v3922
        %v3928 = vrot.slane %v3927, 4
        %v3930 = vshll.u32 %v3738, 16
        %v3932 = vrot.slane %v3930, 5
        %v3933 = vsel %vm1512, %v3928, %v3932
        %v3935 = vshrl.u32 %v3739, 16
        %v3937 = vrot.slane %v3935, 4
        %v3938 = vshll.u32 %v3739, 16
        %v3940 = vrot.slane %v3938, 5
        %v3941 = vor.u32 %v3937, %v3940
        %v3942 = vrot.slane %v3941, 4
        %v3944 = vshll.u32 %v3740, 16
        %v3946 = vrot.slane %v3944, 5
        %v3947 = vsel %vm1512, %v3942, %v3946
        %v3948 = vshrl.u32 %v3740, 16
        %v3950 = vrot.slane %v3948, 4
        %v3951 = vor.u32 %v3950, %v3946
        %v3952 = vrot.slane %v3951, 4
        %v3954 = vshll.u32 %v3741, 16
        %v3956 = vrot.slane %v3954, 5
        %v3957 = vsel %vm1512, %v3952, %v3956
        %v3959 = vshrl.u32 %v3742, 16
        %v3961 = vrot.slane %v3959, 4
        %v3962 = vshll.u32 %v3742, 16
        %v3964 = vrot.slane %v3962, 5
        %v3965 = vor.u32 %v3961, %v3964
        %v3966 = vrot.slane %v3965, 4
        %v3968 = vshll.u32 %v3743, 16
        %v3970 = vrot.slane %v3968, 5
        %v3971 = vsel %vm1512, %v3966, %v3970
        %v3972 = vshrl.u32 %v3743, 16
        %v3974 = vrot.slane %v3972, 4
        %v3975 = vor.u32 %v3974, %v3970
        %v3976 = vrot.slane %v3975, 4
        %v3978 = vshll.u32 %v3744, 16
        %v3980 = vrot.slane %v3978, 5
        %v3981 = vsel %vm1512, %v3976, %v3980
        %v3983 = vshrl.u32 %v3745, 16
        %v3985 = vrot.slane %v3983, 4
        %v3986 = vshll.u32 %v3745, 16
        %v3988 = vrot.slane %v3986, 5
        %v3989 = vor.u32 %v3985, %v3988
        %v3990 = vrot.slane %v3989, 4
        %v3992 = vshll.u32 %v3746, 16
        %v3994 = vrot.slane %v3992, 5
        %v3995 = vsel %vm1512, %v3990, %v3994
        %v3996 = vshrl.u32 %v3746, 16
        %v3998 = vrot.slane %v3996, 4
        %v3999 = vor.u32 %v3998, %v3994
        %v4000 = vrot.slane %v3999, 4
        %v4002 = vshll.u32 %v3747, 16
        %v4004 = vrot.slane %v4002, 5
        %v4005 = vsel %vm1512, %v4000, %v4004
        %v4007 = vshrl.u32 %v3748, 16
        %v4009 = vrot.slane %v4007, 4
        %v4010 = vshll.u32 %v3748, 16
        %v4012 = vrot.slane %v4010, 5
        %v4013 = vor.u32 %v4009, %v4012
        %v4014 = vrot.slane %v4013, 4
        %v4016 = vshll.u32 %v3749, 16
        %v4018 = vrot.slane %v4016, 5
        %v4019 = vsel %vm1512, %v4014, %v4018
        %v4020 = vshrl.u32 %v3749, 16
        %v4022 = vrot.slane %v4020, 4
        %v4023 = vor.u32 %v4022, %v4018
        %v4024 = vrot.slane %v4023, 4
        %v4026 = vshll.u32 %v3750, 16
        %v4028 = vrot.slane %v4026, 5
        %v4029 = vsel %vm1512, %v4024, %v4028
        %v4031 = vshrl.u32 %v3751, 16
        %v4033 = vrot.slane %v4031, 4
        %v4034 = vshll.u32 %v3751, 16
        %v4036 = vrot.slane %v4034, 5
        %v4037 = vor.u32 %v4033, %v4036
        %v4038 = vrot.slane %v4037, 4
        %v4040 = vshll.u32 %v3752, 16
        %v4042 = vrot.slane %v4040, 5
        %v4043 = vsel %vm1512, %v4038, %v4042
        %v4044 = vshrl.u32 %v3752, 16
        %v4046 = vrot.slane %v4044, 4
        %v4047 = vor.u32 %v4046, %v4042
        %v4048 = vrot.slane %v4047, 4
        %v4050 = vshll.u32 %v3753, 16
        %v4052 = vrot.slane %v4050, 5
        %v4053 = vsel %vm1512, %v4048, %v4052
        %v4055 = vshrl.u32 %v3754, 16
        %v4057 = vrot.slane %v4055, 4
        %v4058 = vshll.u32 %v3754, 16
        %v4060 = vrot.slane %v4058, 5
        %v4061 = vor.u32 %v4057, %v4060
        %v4062 = vrot.slane %v4061, 4
        %v4064 = vshll.u32 %v3755, 16
        %v4066 = vrot.slane %v4064, 5
        %v4067 = vsel %vm1512, %v4062, %v4066
        %v4068 = vshrl.u32 %v3755, 16
        %v4070 = vrot.slane %v4068, 4
        %v4071 = vor.u32 %v4070, %v4066
        %v4072 = vrot.slane %v4071, 4
        %v4074 = vshll.u32 %v3756, 16
        %v4076 = vrot.slane %v4074, 5
        %v4077 = vsel %vm1512, %v4072, %v4076
        %v4079 = vshrl.u32 %v3757, 16
        %v4081 = vrot.slane %v4079, 4
        %v4082 = vshll.u32 %v3757, 16
        %v4084 = vrot.slane %v4082, 5
        %v4085 = vor.u32 %v4081, %v4084
        %v4086 = vrot.slane %v4085, 4
        %v4088 = vshll.u32 %v3758, 16
        %v4090 = vrot.slane %v4088, 5
        %v4091 = vsel %vm1512, %v4086, %v4090
        %v4092 = vshrl.u32 %v3758, 16
        %v4094 = vrot.slane %v4092, 4
        %v4095 = vor.u32 %v4094, %v4090
        %v4096 = vrot.slane %v4095, 4
        %v4098 = vshll.u32 %v3759, 16
        %v4100 = vrot.slane %v4098, 5
        %v4101 = vsel %vm1512, %v4096, %v4100
        %v4103 = vshrl.u32 %v3760, 16
        %v4105 = vrot.slane %v4103, 4
        %v4106 = vshll.u32 %v3760, 16
        %v4108 = vrot.slane %v4106, 5
        %v4109 = vor.u32 %v4105, %v4108
        %v4110 = vrot.slane %v4109, 4
        %v4112 = vshll.u32 %v3761, 16
        %v4114 = vrot.slane %v4112, 5
        %v4115 = vsel %vm1512, %v4110, %v4114
        %v4116 = vshrl.u32 %v3761, 16
        %v4118 = vrot.slane %v4116, 4
        %v4119 = vor.u32 %v4118, %v4114
        %v4120 = vrot.slane %v4119, 4
        %v4122 = vshll.u32 %v3762, 16
        %v4124 = vrot.slane %v4122, 5
        %v4125 = vsel %vm1512, %v4120, %v4124
        %v4127 = vshrl.u32 %v3763, 16
        %v4129 = vrot.slane %v4127, 4
        %v4130 = vshll.u32 %v3763, 16
        %v4132 = vrot.slane %v4130, 5
        %v4133 = vor.u32 %v4129, %v4132
        %v4134 = vrot.slane %v4133, 4
        %v4136 = vshll.u32 %v3764, 16
        %v4138 = vrot.slane %v4136, 5
        %v4139 = vsel %vm1512, %v4134, %v4138
        %v4140 = vshrl.u32 %v3764, 16
        %v4142 = vrot.slane %v4140, 4
        %v4143 = vor.u32 %v4142, %v4138
        %v4144 = vrot.slane %v4143, 4
        %v4146 = vshll.u32 %v3765, 16
        %v4148 = vrot.slane %v4146, 5
        %v4149 = vsel %vm1512, %v4144, %v4148
        %4150 = vrot.lane.b32.xlu0 %v3779, 124
        %v4151 = vpop.permute.xlu0 %4150
        %4152 = vrot.lane.b32.xlu0 %v3789, 124
        %v4153 = vpop.permute.xlu0 %4152
        %4154 = vrot.lane.b32.xlu0 %v3803, 124
        %v4155 = vpop.permute.xlu0 %4154
        %4156 = vrot.lane.b32.xlu0 %v3813, 124
        %v4157 = vpop.permute.xlu0 %4156
        %4158 = vrot.lane.b32.xlu0 %v3827, 124
        %v4159 = vpop.permute.xlu0 %4158
        %4160 = vrot.lane.b32.xlu0 %v3837, 124
        %v4161 = vpop.permute.xlu0 %4160
        %4162 = vrot.lane.b32.xlu0 %v3851, 124
        %v4163 = vpop.permute.xlu0 %4162
        %4164 = vrot.lane.b32.xlu0 %v3861, 124
        %v4165 = vpop.permute.xlu0 %4164
        %4166 = vrot.lane.b32.xlu0 %v3875, 124
        %v4167 = vpop.permute.xlu0 %4166
        %4168 = vrot.lane.b32.xlu0 %v3885, 124
        %v4169 = vpop.permute.xlu0 %4168
        %4170 = vrot.lane.b32.xlu0 %v3899, 124
        %v4171 = vpop.permute.xlu0 %4170
        %4172 = vrot.lane.b32.xlu0 %v3909, 124
        %v4173 = vpop.permute.xlu0 %4172
        %4174 = vrot.lane.b32.xlu0 %v3923, 124
        %v4175 = vpop.permute.xlu0 %4174
        %4176 = vrot.lane.b32.xlu0 %v3933, 124
        %v4177 = vpop.permute.xlu0 %4176
        %4178 = vrot.lane.b32.xlu0 %v3947, 124
        %v4179 = vpop.permute.xlu0 %4178
        %4180 = vrot.lane.b32.xlu0 %v3957, 124
        %v4181 = vpop.permute.xlu0 %4180
        %4182 = vrot.lane.b32.xlu0 %v3971, 124
        %v4183 = vpop.permute.xlu0 %4182
        %4184 = vrot.lane.b32.xlu0 %v3981, 124
        %v4185 = vpop.permute.xlu0 %4184
        %4186 = vrot.lane.b32.xlu0 %v3995, 124
        %v4187 = vpop.permute.xlu0 %4186
        %4188 = vrot.lane.b32.xlu0 %v4005, 124
        %v4189 = vpop.permute.xlu0 %4188
        %4190 = vrot.lane.b32.xlu0 %v4019, 124
        %v4191 = vpop.permute.xlu0 %4190
        %4192 = vrot.lane.b32.xlu0 %v4029, 124
        %v4193 = vpop.permute.xlu0 %4192
        %4194 = vrot.lane.b32.xlu0 %v4043, 124
        %v4195 = vpop.permute.xlu0 %4194
        %4196 = vrot.lane.b32.xlu0 %v4053, 124
        %v4197 = vpop.permute.xlu0 %4196
        %4198 = vrot.lane.b32.xlu0 %v4067, 124
        %v4199 = vpop.permute.xlu0 %4198
        %4200 = vrot.lane.b32.xlu0 %v4077, 124
        %v4201 = vpop.permute.xlu0 %4200
        %4202 = vrot.lane.b32.xlu0 %v4091, 124
        %v4203 = vpop.permute.xlu0 %4202
        %4204 = vrot.lane.b32.xlu0 %v4101, 124
        %v4205 = vpop.permute.xlu0 %4204
        %4206 = vrot.lane.b32.xlu0 %v4115, 124
        %v4207 = vpop.permute.xlu0 %4206
        %4208 = vrot.lane.b32.xlu0 %v4125, 124
        %v4209 = vpop.permute.xlu0 %4208
        %4210 = vrot.lane.b32.xlu0 %v4139, 124
        %v4211 = vpop.permute.xlu0 %4210
        %4212 = vrot.lane.b32.xlu0 %v4149, 124
        %v4213 = vpop.permute.xlu0 %4212
        %v4214 = vrot.slane %v4151, 4
        %v4215 = vrot.slane %v4153, 4
        %v4216 = vrot.slane %v4155, 4
        %v4217 = vrot.slane %v4157, 4
        %v4218 = vrot.slane %v4159, 4
        %v4219 = vrot.slane %v4161, 4
        %v4220 = vrot.slane %v4163, 4
        %v4221 = vrot.slane %v4165, 4
        %v4222 = vrot.slane %v4167, 4
        %v4223 = vrot.slane %v4169, 4
        %v4224 = vrot.slane %v4171, 4
        %v4225 = vrot.slane %v4173, 4
        %v4226 = vrot.slane %v4175, 4
        %v4227 = vrot.slane %v4177, 4
        %v4228 = vrot.slane %v4179, 4
        %v4229 = vrot.slane %v4181, 4
        %v4230 = vrot.slane %v4183, 4
        %v4231 = vrot.slane %v4185, 4
        %v4232 = vrot.slane %v4187, 4
        %v4233 = vrot.slane %v4189, 4
        %v4234 = vrot.slane %v4191, 4
        %v4235 = vrot.slane %v4193, 4
        %v4236 = vrot.slane %v4195, 4
        %v4237 = vrot.slane %v4197, 4
        %v4238 = vrot.slane %v4199, 4
        %v4239 = vrot.slane %v4201, 4
        %v4240 = vrot.slane %v4203, 4
        %v4241 = vrot.slane %v4205, 4
        %v4242 = vrot.slane %v4207, 4
        %v4243 = vrot.slane %v4209, 4
        %v4244 = vrot.slane %v4211, 4
        %v4245 = vrot.slane %v4213, 4
        %vm4246 = vcmask 1014784
        %v4247 = vsel %vm4246, %v4214, %v4151
        %v4248 = vsel %vm4246, %v4215, %v4153
        %v4249 = vsel %vm4246, %v4216, %v4155
        %v4250 = vsel %vm4246, %v4217, %v4157
        %v4251 = vsel %vm4246, %v4218, %v4159
        %v4252 = vsel %vm4246, %v4219, %v4161
        %v4253 = vsel %vm4246, %v4220, %v4163
        %v4254 = vsel %vm4246, %v4221, %v4165
        %v4255 = vsel %vm4246, %v4222, %v4167
        %v4256 = vsel %vm4246, %v4223, %v4169
        %v4257 = vsel %vm4246, %v4224, %v4171
        %v4258 = vsel %vm4246, %v4225, %v4173
        %v4259 = vsel %vm4246, %v4226, %v4175
        %v4260 = vsel %vm4246, %v4227, %v4177
        %v4261 = vsel %vm4246, %v4228, %v4179
        %v4262 = vsel %vm4246, %v4229, %v4181
        %v4263 = vsel %vm4246, %v4230, %v4183
        %v4264 = vsel %vm4246, %v4231, %v4185
        %v4265 = vsel %vm4246, %v4232, %v4187
        %v4266 = vsel %vm4246, %v4233, %v4189
        %v4267 = vsel %vm4246, %v4234, %v4191
        %v4268 = vsel %vm4246, %v4235, %v4193
        %v4269 = vsel %vm4246, %v4236, %v4195
        %v4270 = vsel %vm4246, %v4237, %v4197
        %v4271 = vsel %vm4246, %v4238, %v4199
        %v4272 = vsel %vm4246, %v4239, %v4201
        %v4273 = vsel %vm4246, %v4240, %v4203
        %v4274 = vsel %vm4246, %v4241, %v4205
        %v4275 = vsel %vm4246, %v4242, %v4207
        %v4276 = vsel %vm4246, %v4243, %v4209
        %v4277 = vsel %vm4246, %v4244, %v4211
        %v4278 = vsel %vm4246, %v4245, %v4213
        %vm4311 = vcmask 1044448
        %vm4312 = vcmask 261124
        %vm4313 = vmor %vm4312, %vm4311
        %4314 = vst.msk [vmem:[#allocation3 + $0x4] sm:$0xff] %vm4313, %v4247
        %4315 = vst.msk [vmem:[#allocation3 + $0x10] sm:$0xff] %vm4313, %v4248
        %4316 = vst.msk [vmem:[#allocation3 + $0x1c] sm:$0xff] %vm4313, %v4249
        %4317 = vst.msk [vmem:[#allocation3 + $0x28] sm:$0xff] %vm4313, %v4250
        %4318 = vst.msk [vmem:[#allocation3 + $0x34] sm:$0xff] %vm4313, %v4251
        %4319 = vst.msk [vmem:[#allocation3 + $0x40] sm:$0xff] %vm4313, %v4252
        %4320 = vst.msk [vmem:[#allocation3 + $0x4c] sm:$0xff] %vm4313, %v4253
        %4321 = vst.msk [vmem:[#allocation3 + $0x58] sm:$0xff] %vm4313, %v4254
        %4322 = vst.msk [vmem:[#allocation3 + $0x64] sm:$0xff] %vm4313, %v4255
        %4323 = vst.msk [vmem:[#allocation3 + $0x70] sm:$0xff] %vm4313, %v4256
        %4324 = vst.msk [vmem:[#allocation3 + $0x7c] sm:$0xff] %vm4313, %v4257
        %4325 = vst.msk [vmem:[#allocation3 + $0x88] sm:$0xff] %vm4313, %v4258
        %4326 = vst.msk [vmem:[#allocation3 + $0x94] sm:$0xff] %vm4313, %v4259
        %4327 = vst.msk [vmem:[#allocation3 + $0xa0] sm:$0xff] %vm4313, %v4260
        %4328 = vst.msk [vmem:[#allocation3 + $0xac] sm:$0xff] %vm4313, %v4261
        %4329 = vst.msk [vmem:[#allocation3 + $0xb8] sm:$0xff] %vm4313, %v4262
        %4330 = vst.msk [vmem:[#allocation3 + $0xc4] sm:$0xff] %vm4313, %v4263
        %4331 = vst.msk [vmem:[#allocation3 + $0xd0] sm:$0xff] %vm4313, %v4264
        %4332 = vst.msk [vmem:[#allocation3 + $0xdc] sm:$0xff] %vm4313, %v4265
        %4333 = vst.msk [vmem:[#allocation3 + $0xe8] sm:$0xff] %vm4313, %v4266
        %4334 = vst.msk [vmem:[#allocation3 + $0xf4] sm:$0xff] %vm4313, %v4267
        %4335 = vst.msk [vmem:[#allocation3 + $0x100] sm:$0xff] %vm4313, %v4268
        %4336 = vst.msk [vmem:[#allocation3 + $0x10c] sm:$0xff] %vm4313, %v4269
        %4337 = vst.msk [vmem:[#allocation3 + $0x118] sm:$0xff] %vm4313, %v4270
        %4338 = vst.msk [vmem:[#allocation3 + $0x124] sm:$0xff] %vm4313, %v4271
        %4339 = vst.msk [vmem:[#allocation3 + $0x130] sm:$0xff] %vm4313, %v4272
        %4340 = vst.msk [vmem:[#allocation3 + $0x13c] sm:$0xff] %vm4313, %v4273
        %4341 = vst.msk [vmem:[#allocation3 + $0x148] sm:$0xff] %vm4313, %v4274
        %4342 = vst.msk [vmem:[#allocation3 + $0x154] sm:$0xff] %vm4313, %v4275
        %4343 = vst.msk [vmem:[#allocation3 + $0x160] sm:$0xff] %vm4313, %v4276
        %4344 = vst.msk [vmem:[#allocation3 + $0x16c] sm:$0xff] %vm4313, %v4277
        %4345 = vst.msk [vmem:[#allocation3 + $0x178] sm:$0xff] %vm4313, %v4278
        %v4346 = vld [vmem:[%s3524] sm:$0xe]
        %v4347 = vld [vmem:[%s3524 + $0x4] sm:$0xf]
        %v4348 = vld [vmem:[%s3524 + $0x8] sm:$0x1]
        %v4349 = vld [vmem:[%s3524 + $0xc] sm:$0xe]
        %v4350 = vld [vmem:[%s3524 + $0x10] sm:$0xf]
        %v4351 = vld [vmem:[%s3524 + $0x14] sm:$0x1]
        %v4352 = vld [vmem:[%s3524 + $0x18] sm:$0xe]
        %v4353 = vld [vmem:[%s3524 + $0x1c] sm:$0xf]
        %v4354 = vld [vmem:[%s3524 + $0x20] sm:$0x1]
        %v4355 = vld [vmem:[%s3524 + $0x24] sm:$0xe]
        %v4356 = vld [vmem:[%s3524 + $0x28] sm:$0xf]
        %v4357 = vld [vmem:[%s3524 + $0x2c] sm:$0x1]
        %v4358 = vld [vmem:[%s3524 + $0x30] sm:$0xe]
        %v4359 = vld [vmem:[%s3524 + $0x34] sm:$0xf]
        %v4360 = vld [vmem:[%s3524 + $0x38] sm:$0x1]
        %v4361 = vld [vmem:[%s3524 + $0x3c] sm:$0xe]
        %v4362 = vld [vmem:[%s3524 + $0x40] sm:$0xf]
        %v4363 = vld [vmem:[%s3524 + $0x44] sm:$0x1]
        %v4364 = vld [vmem:[%s3524 + $0x48] sm:$0xe]
        %v4365 = vld [vmem:[%s3524 + $0x4c] sm:$0xf]
        %v4366 = vld [vmem:[%s3524 + $0x50] sm:$0x1]
        %v4367 = vld [vmem:[%s3524 + $0x54] sm:$0xe]
        %v4368 = vld [vmem:[%s3524 + $0x58] sm:$0xf]
        %v4369 = vld [vmem:[%s3524 + $0x5c] sm:$0x1]
        %v4370 = vld [vmem:[%s3524 + $0x60] sm:$0xe]
        %v4371 = vld [vmem:[%s3524 + $0x64] sm:$0xf]
        %v4372 = vld [vmem:[%s3524 + $0x68] sm:$0x1]
        %v4373 = vld [vmem:[%s3524 + $0x6c] sm:$0xe]
        %v4374 = vld [vmem:[%s3524 + $0x70] sm:$0xf]
        %v4375 = vld [vmem:[%s3524 + $0x74] sm:$0x1]
        %v4376 = vld [vmem:[%s3524 + $0x78] sm:$0xe]
        %v4377 = vld [vmem:[%s3524 + $0x7c] sm:$0xf]
        %v4378 = vld [vmem:[%s3524 + $0x80] sm:$0x1]
        %v4379 = vld [vmem:[%s3524 + $0x84] sm:$0xe]
        %v4380 = vld [vmem:[%s3524 + $0x88] sm:$0xf]
        %v4381 = vld [vmem:[%s3524 + $0x8c] sm:$0x1]
        %v4382 = vld [vmem:[%s3524 + $0x90] sm:$0xe]
        %v4383 = vld [vmem:[%s3524 + $0x94] sm:$0xf]
        %v4384 = vld [vmem:[%s3524 + $0x98] sm:$0x1]
        %v4385 = vld [vmem:[%s3524 + $0x9c] sm:$0xe]
        %v4386 = vld [vmem:[%s3524 + $0xa0] sm:$0xf]
        %v4387 = vld [vmem:[%s3524 + $0xa4] sm:$0x1]
        %v4388 = vld [vmem:[%s3524 + $0xa8] sm:$0xe]
        %v4389 = vld [vmem:[%s3524 + $0xac] sm:$0xf]
        %v4390 = vld [vmem:[%s3524 + $0xb0] sm:$0x1]
        %v4391 = vld [vmem:[%s3524 + $0xb4] sm:$0xe]
        %v4392 = vld [vmem:[%s3524 + $0xb8] sm:$0xf]
        %v4393 = vld [vmem:[%s3524 + $0xbc] sm:$0x1]
        %v4442 = vrot.slane %v4346, 5
        %v4443 = vrot.slane %v4442, 4
        %v4444 = vrot.slane %v4347, 5
        %v4445 = vsel %vm2124, %v4443, %v4444
        %v4446 = vrot.slane %v4444, 4
        %v4447 = vrot.slane %v4348, 5
        %v4448 = vsel %vm2124, %v4446, %v4447
        %v4449 = vrot.slane %v4349, 5
        %v4450 = vrot.slane %v4449, 4
        %v4451 = vrot.slane %v4350, 5
        %v4452 = vsel %vm2124, %v4450, %v4451
        %v4453 = vrot.slane %v4451, 4
        %v4454 = vrot.slane %v4351, 5
        %v4455 = vsel %vm2124, %v4453, %v4454
        %v4456 = vrot.slane %v4352, 5
        %v4457 = vrot.slane %v4456, 4
        %v4458 = vrot.slane %v4353, 5
        %v4459 = vsel %vm2124, %v4457, %v4458
        %v4460 = vrot.slane %v4458, 4
        %v4461 = vrot.slane %v4354, 5
        %v4462 = vsel %vm2124, %v4460, %v4461
        %v4463 = vrot.slane %v4355, 5
        %v4464 = vrot.slane %v4463, 4
        %v4465 = vrot.slane %v4356, 5
        %v4466 = vsel %vm2124, %v4464, %v4465
        %v4467 = vrot.slane %v4465, 4
        %v4468 = vrot.slane %v4357, 5
        %v4469 = vsel %vm2124, %v4467, %v4468
        %v4470 = vrot.slane %v4358, 5
        %v4471 = vrot.slane %v4470, 4
        %v4472 = vrot.slane %v4359, 5
        %v4473 = vsel %vm2124, %v4471, %v4472
        %v4474 = vrot.slane %v4472, 4
        %v4475 = vrot.slane %v4360, 5
        %v4476 = vsel %vm2124, %v4474, %v4475
        %v4477 = vrot.slane %v4361, 5
        %v4478 = vrot.slane %v4477, 4
        %v4479 = vrot.slane %v4362, 5
        %v4480 = vsel %vm2124, %v4478, %v4479
        %v4481 = vrot.slane %v4479, 4
        %v4482 = vrot.slane %v4363, 5
        %v4483 = vsel %vm2124, %v4481, %v4482
        %v4484 = vrot.slane %v4364, 5
        %v4485 = vrot.slane %v4484, 4
        %v4486 = vrot.slane %v4365, 5
        %v4487 = vsel %vm2124, %v4485, %v4486
        %v4488 = vrot.slane %v4486, 4
        %v4489 = vrot.slane %v4366, 5
        %v4490 = vsel %vm2124, %v4488, %v4489
        %v4491 = vrot.slane %v4367, 5
        %v4492 = vrot.slane %v4491, 4
        %v4493 = vrot.slane %v4368, 5
        %v4494 = vsel %vm2124, %v4492, %v4493
        %v4495 = vrot.slane %v4493, 4
        %v4496 = vrot.slane %v4369, 5
        %v4497 = vsel %vm2124, %v4495, %v4496
        %v4498 = vrot.slane %v4370, 5
        %v4499 = vrot.slane %v4498, 4
        %v4500 = vrot.slane %v4371, 5
        %v4501 = vsel %vm2124, %v4499, %v4500
        %v4502 = vrot.slane %v4500, 4
        %v4503 = vrot.slane %v4372, 5
        %v4504 = vsel %vm2124, %v4502, %v4503
        %v4505 = vrot.slane %v4373, 5
        %v4506 = vrot.slane %v4505, 4
        %v4507 = vrot.slane %v4374, 5
        %v4508 = vsel %vm2124, %v4506, %v4507
        %v4509 = vrot.slane %v4507, 4
        %v4510 = vrot.slane %v4375, 5
        %v4511 = vsel %vm2124, %v4509, %v4510
        %v4512 = vrot.slane %v4376, 5
        %v4513 = vrot.slane %v4512, 4
        %v4514 = vrot.slane %v4377, 5
        %v4515 = vsel %vm2124, %v4513, %v4514
        %v4516 = vrot.slane %v4514, 4
        %v4517 = vrot.slane %v4378, 5
        %v4518 = vsel %vm2124, %v4516, %v4517
        %v4519 = vrot.slane %v4379, 5
        %v4520 = vrot.slane %v4519, 4
        %v4521 = vrot.slane %v4380, 5
        %v4522 = vsel %vm2124, %v4520, %v4521
        %v4523 = vrot.slane %v4521, 4
        %v4524 = vrot.slane %v4381, 5
        %v4525 = vsel %vm2124, %v4523, %v4524
        %v4526 = vrot.slane %v4382, 5
        %v4527 = vrot.slane %v4526, 4
        %v4528 = vrot.slane %v4383, 5
        %v4529 = vsel %vm2124, %v4527, %v4528
        %v4530 = vrot.slane %v4528, 4
        %v4531 = vrot.slane %v4384, 5
        %v4532 = vsel %vm2124, %v4530, %v4531
        %v4533 = vrot.slane %v4385, 5
        %v4534 = vrot.slane %v4533, 4
        %v4535 = vrot.slane %v4386, 5
        %v4536 = vsel %vm2124, %v4534, %v4535
        %v4537 = vrot.slane %v4535, 4
        %v4538 = vrot.slane %v4387, 5
        %v4539 = vsel %vm2124, %v4537, %v4538
        %v4540 = vrot.slane %v4388, 5
        %v4541 = vrot.slane %v4540, 4
        %v4542 = vrot.slane %v4389, 5
        %v4543 = vsel %vm2124, %v4541, %v4542
        %v4544 = vrot.slane %v4542, 4
        %v4545 = vrot.slane %v4390, 5
        %v4546 = vsel %vm2124, %v4544, %v4545
        %v4547 = vrot.slane %v4391, 5
        %v4548 = vrot.slane %v4547, 4
        %v4549 = vrot.slane %v4392, 5
        %v4550 = vsel %vm2124, %v4548, %v4549
        %v4551 = vrot.slane %v4549, 4
        %v4552 = vrot.slane %v4393, 5
        %v4553 = vsel %vm2124, %v4551, %v4552
        %4554 = vrot.lane.b32.xlu0 %v4445, 32
        %v4555 = vpop.permute.xlu0 %4554
        %4556 = vrot.lane.b32.xlu0 %v4448, 32
        %v4557 = vpop.permute.xlu0 %4556
        %4558 = vrot.lane.b32.xlu0 %v4452, 32
        %v4559 = vpop.permute.xlu0 %4558
        %4560 = vrot.lane.b32.xlu0 %v4455, 32
        %v4561 = vpop.permute.xlu0 %4560
        %4562 = vrot.lane.b32.xlu0 %v4459, 32
        %v4563 = vpop.permute.xlu0 %4562
        %4564 = vrot.lane.b32.xlu0 %v4462, 32
        %v4565 = vpop.permute.xlu0 %4564
        %4566 = vrot.lane.b32.xlu0 %v4466, 32
        %v4567 = vpop.permute.xlu0 %4566
        %4568 = vrot.lane.b32.xlu0 %v4469, 32
        %v4569 = vpop.permute.xlu0 %4568
        %4570 = vrot.lane.b32.xlu0 %v4473, 32
        %v4571 = vpop.permute.xlu0 %4570
        %4572 = vrot.lane.b32.xlu0 %v4476, 32
        %v4573 = vpop.permute.xlu0 %4572
        %4574 = vrot.lane.b32.xlu0 %v4480, 32
        %v4575 = vpop.permute.xlu0 %4574
        %4576 = vrot.lane.b32.xlu0 %v4483, 32
        %v4577 = vpop.permute.xlu0 %4576
        %4578 = vrot.lane.b32.xlu0 %v4487, 32
        %v4579 = vpop.permute.xlu0 %4578
        %4580 = vrot.lane.b32.xlu0 %v4490, 32
        %v4581 = vpop.permute.xlu0 %4580
        %4582 = vrot.lane.b32.xlu0 %v4494, 32
        %v4583 = vpop.permute.xlu0 %4582
        %4584 = vrot.lane.b32.xlu0 %v4497, 32
        %v4585 = vpop.permute.xlu0 %4584
        %4586 = vrot.lane.b32.xlu0 %v4501, 32
        %v4587 = vpop.permute.xlu0 %4586
        %4588 = vrot.lane.b32.xlu0 %v4504, 32
        %v4589 = vpop.permute.xlu0 %4588
        %4590 = vrot.lane.b32.xlu0 %v4508, 32
        %v4591 = vpop.permute.xlu0 %4590
        %4592 = vrot.lane.b32.xlu0 %v4511, 32
        %v4593 = vpop.permute.xlu0 %4592
        %4594 = vrot.lane.b32.xlu0 %v4515, 32
        %v4595 = vpop.permute.xlu0 %4594
        %4596 = vrot.lane.b32.xlu0 %v4518, 32
        %v4597 = vpop.permute.xlu0 %4596
        %4598 = vrot.lane.b32.xlu0 %v4522, 32
        %v4599 = vpop.permute.xlu0 %4598
        %4600 = vrot.lane.b32.xlu0 %v4525, 32
        %v4601 = vpop.permute.xlu0 %4600
        %4602 = vrot.lane.b32.xlu0 %v4529, 32
        %v4603 = vpop.permute.xlu0 %4602
        %4604 = vrot.lane.b32.xlu0 %v4532, 32
        %v4605 = vpop.permute.xlu0 %4604
        %4606 = vrot.lane.b32.xlu0 %v4536, 32
        %v4607 = vpop.permute.xlu0 %4606
        %4608 = vrot.lane.b32.xlu0 %v4539, 32
        %v4609 = vpop.permute.xlu0 %4608
        %4610 = vrot.lane.b32.xlu0 %v4543, 32
        %v4611 = vpop.permute.xlu0 %4610
        %4612 = vrot.lane.b32.xlu0 %v4546, 32
        %v4613 = vpop.permute.xlu0 %4612
        %4614 = vrot.lane.b32.xlu0 %v4550, 32
        %v4615 = vpop.permute.xlu0 %4614
        %4616 = vrot.lane.b32.xlu0 %v4553, 32
        %v4617 = vpop.permute.xlu0 %4616
        %vm4650 = vcmask 552192
        %4651 = vst.msk [vmem:[#allocation3 + $0x8] sm:$0xf] %vm4650, %v4555
        %4652 = vst.msk [vmem:[#allocation3 + $0x14] sm:$0xf] %vm4650, %v4557
        %4653 = vst.msk [vmem:[#allocation3 + $0x20] sm:$0xf] %vm4650, %v4559
        %4654 = vst.msk [vmem:[#allocation3 + $0x2c] sm:$0xf] %vm4650, %v4561
        %4655 = vst.msk [vmem:[#allocation3 + $0x38] sm:$0xf] %vm4650, %v4563
        %4656 = vst.msk [vmem:[#allocation3 + $0x44] sm:$0xf] %vm4650, %v4565
        %4657 = vst.msk [vmem:[#allocation3 + $0x50] sm:$0xf] %vm4650, %v4567
        %4658 = vst.msk [vmem:[#allocation3 + $0x5c] sm:$0xf] %vm4650, %v4569
        %4659 = vst.msk [vmem:[#allocation3 + $0x68] sm:$0xf] %vm4650, %v4571
        %4660 = vst.msk [vmem:[#allocation3 + $0x74] sm:$0xf] %vm4650, %v4573
        %4661 = vst.msk [vmem:[#allocation3 + $0x80] sm:$0xf] %vm4650, %v4575
        %4662 = vst.msk [vmem:[#allocation3 + $0x8c] sm:$0xf] %vm4650, %v4577
        %4663 = vst.msk [vmem:[#allocation3 + $0x98] sm:$0xf] %vm4650, %v4579
        %4664 = vst.msk [vmem:[#allocation3 + $0xa4] sm:$0xf] %vm4650, %v4581
        %4665 = vst.msk [vmem:[#allocation3 + $0xb0] sm:$0xf] %vm4650, %v4583
        %4666 = vst.msk [vmem:[#allocation3 + $0xbc] sm:$0xf] %vm4650, %v4585
        %4667 = vst.msk [vmem:[#allocation3 + $0xc8] sm:$0xf] %vm4650, %v4587
        %4668 = vst.msk [vmem:[#allocation3 + $0xd4] sm:$0xf] %vm4650, %v4589
        %4669 = vst.msk [vmem:[#allocation3 + $0xe0] sm:$0xf] %vm4650, %v4591
        %4670 = vst.msk [vmem:[#allocation3 + $0xec] sm:$0xf] %vm4650, %v4593
        %4671 = vst.msk [vmem:[#allocation3 + $0xf8] sm:$0xf] %vm4650, %v4595
        %4672 = vst.msk [vmem:[#allocation3 + $0x104] sm:$0xf] %vm4650, %v4597
        %4673 = vst.msk [vmem:[#allocation3 + $0x110] sm:$0xf] %vm4650, %v4599
        %4674 = vst.msk [vmem:[#allocation3 + $0x11c] sm:$0xf] %vm4650, %v4601
        %4675 = vst.msk [vmem:[#allocation3 + $0x128] sm:$0xf] %vm4650, %v4603
        %4676 = vst.msk [vmem:[#allocation3 + $0x134] sm:$0xf] %vm4650, %v4605
        %4677 = vst.msk [vmem:[#allocation3 + $0x140] sm:$0xf] %vm4650, %v4607
        %4678 = vst.msk [vmem:[#allocation3 + $0x14c] sm:$0xf] %vm4650, %v4609
        %4679 = vst.msk [vmem:[#allocation3 + $0x158] sm:$0xf] %vm4650, %v4611
        %4680 = vst.msk [vmem:[#allocation3 + $0x164] sm:$0xf] %vm4650, %v4613
        %4681 = vst.msk [vmem:[#allocation3 + $0x170] sm:$0xf] %vm4650, %v4615
        %4682 = vst.msk [vmem:[#allocation3 + $0x17c] sm:$0xf] %vm4650, %v4617
        %v4683 = vld [vmem:[#allocation3] sm:$0xff]
        %v4684 = vld [vmem:[#allocation3 + $0x8] sm:$0xf]
        %v4685 = vld [vmem:[#allocation3 + $0xc] sm:$0xff]
        %v4686 = vld [vmem:[#allocation3 + $0x14] sm:$0xf]
        %v4687 = vld [vmem:[#allocation3 + $0x18] sm:$0xff]
        %v4688 = vld [vmem:[#allocation3 + $0x20] sm:$0xf]
        %v4689 = vld [vmem:[#allocation3 + $0x24] sm:$0xff]
        %v4690 = vld [vmem:[#allocation3 + $0x2c] sm:$0xf]
        %v4691 = vld [vmem:[#allocation3 + $0x30] sm:$0xff]
        %v4692 = vld [vmem:[#allocation3 + $0x38] sm:$0xf]
        %v4693 = vld [vmem:[#allocation3 + $0x3c] sm:$0xff]
        %v4694 = vld [vmem:[#allocation3 + $0x44] sm:$0xf]
        %v4695 = vld [vmem:[#allocation3 + $0x48] sm:$0xff]
        %v4696 = vld [vmem:[#allocation3 + $0x50] sm:$0xf]
        %v4697 = vld [vmem:[#allocation3 + $0x54] sm:$0xff]
        %v4698 = vld [vmem:[#allocation3 + $0x5c] sm:$0xf]
        %v4699 = vld [vmem:[#allocation3 + $0x60] sm:$0xff]
        %v4700 = vld [vmem:[#allocation3 + $0x68] sm:$0xf]
        %v4701 = vld [vmem:[#allocation3 + $0x6c] sm:$0xff]
        %v4702 = vld [vmem:[#allocation3 + $0x74] sm:$0xf]
        %v4703 = vld [vmem:[#allocation3 + $0x78] sm:$0xff]
        %v4704 = vld [vmem:[#allocation3 + $0x80] sm:$0xf]
        %v4705 = vld [vmem:[#allocation3 + $0x84] sm:$0xff]
        %v4706 = vld [vmem:[#allocation3 + $0x8c] sm:$0xf]
        %v4707 = vld [vmem:[#allocation3 + $0x90] sm:$0xff]
        %v4708 = vld [vmem:[#allocation3 + $0x98] sm:$0xf]
        %v4709 = vld [vmem:[#allocation3 + $0x9c] sm:$0xff]
        %v4710 = vld [vmem:[#allocation3 + $0xa4] sm:$0xf]
        %v4711 = vld [vmem:[#allocation3 + $0xa8] sm:$0xff]
        %v4712 = vld [vmem:[#allocation3 + $0xb0] sm:$0xf]
        %v4713 = vld [vmem:[#allocation3 + $0xb4] sm:$0xff]
        %v4714 = vld [vmem:[#allocation3 + $0xbc] sm:$0xf]
        %v4715 = vld [vmem:[#allocation3 + $0xc0] sm:$0xff]
        %v4716 = vld [vmem:[#allocation3 + $0xc8] sm:$0xf]
        %v4717 = vld [vmem:[#allocation3 + $0xcc] sm:$0xff]
        %v4718 = vld [vmem:[#allocation3 + $0xd4] sm:$0xf]
        %v4719 = vld [vmem:[#allocation3 + $0xd8] sm:$0xff]
        %v4720 = vld [vmem:[#allocation3 + $0xe0] sm:$0xf]
        %v4721 = vld [vmem:[#allocation3 + $0xe4] sm:$0xff]
        %v4722 = vld [vmem:[#allocation3 + $0xec] sm:$0xf]
        %v4723 = vld [vmem:[#allocation3 + $0xf0] sm:$0xff]
        %v4724 = vld [vmem:[#allocation3 + $0xf8] sm:$0xf]
        %v4725 = vld [vmem:[#allocation3 + $0xfc] sm:$0xff]
        %v4726 = vld [vmem:[#allocation3 + $0x104] sm:$0xf]
        %v4727 = vld [vmem:[#allocation3 + $0x108] sm:$0xff]
        %v4728 = vld [vmem:[#allocation3 + $0x110] sm:$0xf]
        %v4729 = vld [vmem:[#allocation3 + $0x114] sm:$0xff]
        %v4730 = vld [vmem:[#allocation3 + $0x11c] sm:$0xf]
        %v4731 = vld [vmem:[#allocation3 + $0x120] sm:$0xff]
        %v4732 = vld [vmem:[#allocation3 + $0x128] sm:$0xf]
        %v4733 = vld [vmem:[#allocation3 + $0x12c] sm:$0xff]
        %v4734 = vld [vmem:[#allocation3 + $0x134] sm:$0xf]
        %v4735 = vld [vmem:[#allocation3 + $0x138] sm:$0xff]
        %v4736 = vld [vmem:[#allocation3 + $0x140] sm:$0xf]
        %v4737 = vld [vmem:[#allocation3 + $0x144] sm:$0xff]
        %v4738 = vld [vmem:[#allocation3 + $0x14c] sm:$0xf]
        %v4739 = vld [vmem:[#allocation3 + $0x150] sm:$0xff]
        %v4740 = vld [vmem:[#allocation3 + $0x158] sm:$0xf]
        %v4741 = vld [vmem:[#allocation3 + $0x15c] sm:$0xff]
        %v4742 = vld [vmem:[#allocation3 + $0x164] sm:$0xf]
        %v4743 = vld [vmem:[#allocation3 + $0x168] sm:$0xff]
        %v4744 = vld [vmem:[#allocation3 + $0x170] sm:$0xf]
        %v4745 = vld [vmem:[#allocation3 + $0x174] sm:$0xff]
        %v4746 = vld [vmem:[#allocation3 + $0x17c] sm:$0xf]
        %v4747 = vld [vmem:[#allocation4] sm:$0xf]
        %v4748 = vld [vmem:[#allocation4 + $0x4] sm:$0xf]
        %v4749 = vld [vmem:[#allocation4 + $0x8] sm:$0xf]
        %v4750 = vld [vmem:[#allocation4 + $0xc] sm:$0xf]
        %v4751 = vld [vmem:[#allocation4 + $0x10] sm:$0xf]
        %v4752 = vld [vmem:[#allocation4 + $0x14] sm:$0xf]
        %v4753 = vld [vmem:[#allocation4 + $0x18] sm:$0xf]
        %v4754 = vld [vmem:[#allocation4 + $0x1c] sm:$0xf]
        %v4755 = vld [vmem:[#allocation4 + $0x20] sm:$0xf]
        %v4756 = vld [vmem:[#allocation4 + $0x24] sm:$0xf]
        %v4757 = vld [vmem:[#allocation4 + $0x28] sm:$0xf]
        %v4758 = vld [vmem:[#allocation4 + $0x2c] sm:$0xf]
        %v4759 = vld [vmem:[#allocation4 + $0x30] sm:$0xf]
        %v4760 = vld [vmem:[#allocation4 + $0x34] sm:$0xf]
        %v4761 = vld [vmem:[#allocation4 + $0x38] sm:$0xf]
        %v4762 = vld [vmem:[#allocation4 + $0x3c] sm:$0xf]
        %v4763 = vld [vmem:[#allocation4 + $0x40] sm:$0xf]
        %v4764 = vld [vmem:[#allocation4 + $0x44] sm:$0xf]
        %v4765 = vld [vmem:[#allocation4 + $0x48] sm:$0xf]
        %v4766 = vld [vmem:[#allocation4 + $0x4c] sm:$0xf]
        %v4767 = vld [vmem:[#allocation4 + $0x50] sm:$0xf]
        %v4768 = vld [vmem:[#allocation4 + $0x54] sm:$0xf]
        %v4769 = vld [vmem:[#allocation4 + $0x58] sm:$0xf]
        %v4770 = vld [vmem:[#allocation4 + $0x5c] sm:$0xf]
        %v4771 = vld [vmem:[#allocation4 + $0x60] sm:$0xf]
        %v4772 = vld [vmem:[#allocation4 + $0x64] sm:$0xf]
        %v4773 = vld [vmem:[#allocation4 + $0x68] sm:$0xf]
        %v4774 = vld [vmem:[#allocation4 + $0x6c] sm:$0xf]
        %v4775 = vld [vmem:[#allocation4 + $0x70] sm:$0xf]
        %v4776 = vld [vmem:[#allocation4 + $0x74] sm:$0xf]
        %v4777 = vld [vmem:[#allocation4 + $0x78] sm:$0xf]
        %v4778 = vld [vmem:[#allocation4 + $0x7c] sm:$0xf]
        %v4779 = vld [vmem:[#allocation4 + $0x80] sm:$0xf]
        %v4780 = vld [vmem:[#allocation4 + $0x84] sm:$0xf]
        %v4781 = vld [vmem:[#allocation4 + $0x88] sm:$0xf]
        %v4782 = vld [vmem:[#allocation4 + $0x8c] sm:$0xf]
        %v4783 = vld [vmem:[#allocation4 + $0x90] sm:$0xf]
        %v4784 = vld [vmem:[#allocation4 + $0x94] sm:$0xf]
        %v4785 = vld [vmem:[#allocation4 + $0x98] sm:$0xf]
        %v4786 = vld [vmem:[#allocation4 + $0x9c] sm:$0xf]
        %v4787 = vld [vmem:[#allocation4 + $0xa0] sm:$0x3]
        %v4788 = vld [vmem:[%s3] sm:$0x1]
        %v4790 = vperm.slane %v4788, 0
        %v4856 = vunpack.c.l.b16 %v4683
        %v4857 = vunpack.c.h.b16 %v4683
        %v4858 = vunpack.c.l.b16 %v4684
        %v4859 = vunpack.c.l.b16 %v4685
        %v4860 = vunpack.c.h.b16 %v4685
        %v4861 = vunpack.c.l.b16 %v4686
        %v4862 = vunpack.c.l.b16 %v4687
        %v4863 = vunpack.c.h.b16 %v4687
        %v4864 = vunpack.c.l.b16 %v4688
        %v4865 = vunpack.c.l.b16 %v4689
        %v4866 = vunpack.c.h.b16 %v4689
        %v4867 = vunpack.c.l.b16 %v4690
        %v4868 = vunpack.c.l.b16 %v4691
        %v4869 = vunpack.c.h.b16 %v4691
        %v4870 = vunpack.c.l.b16 %v4692
        %v4871 = vunpack.c.l.b16 %v4693
        %v4872 = vunpack.c.h.b16 %v4693
        %v4873 = vunpack.c.l.b16 %v4694
        %v4874 = vunpack.c.l.b16 %v4695
        %v4875 = vunpack.c.h.b16 %v4695
        %v4876 = vunpack.c.l.b16 %v4696
        %v4877 = vunpack.c.l.b16 %v4697
        %v4878 = vunpack.c.h.b16 %v4697
        %v4879 = vunpack.c.l.b16 %v4698
        %v4880 = vunpack.c.l.b16 %v4699
        %v4881 = vunpack.c.h.b16 %v4699
        %v4882 = vunpack.c.l.b16 %v4700
        %v4883 = vunpack.c.l.b16 %v4701
        %v4884 = vunpack.c.h.b16 %v4701
        %v4885 = vunpack.c.l.b16 %v4702
        %v4886 = vunpack.c.l.b16 %v4703
        %v4887 = vunpack.c.h.b16 %v4703
        %v4888 = vunpack.c.l.b16 %v4704
        %v4889 = vunpack.c.l.b16 %v4705
        %v4890 = vunpack.c.h.b16 %v4705
        %v4891 = vunpack.c.l.b16 %v4706
        %v4892 = vunpack.c.l.b16 %v4707
        %v4893 = vunpack.c.h.b16 %v4707
        %v4894 = vunpack.c.l.b16 %v4708
        %v4895 = vunpack.c.l.b16 %v4709
        %v4896 = vunpack.c.h.b16 %v4709
        %v4897 = vunpack.c.l.b16 %v4710
        %v4898 = vunpack.c.l.b16 %v4711
        %v4899 = vunpack.c.h.b16 %v4711
        %v4900 = vunpack.c.l.b16 %v4712
        %v4901 = vunpack.c.l.b16 %v4713
        %v4902 = vunpack.c.h.b16 %v4713
        %v4903 = vunpack.c.l.b16 %v4714
        %v4904 = vunpack.c.l.b16 %v4715
        %v4905 = vunpack.c.h.b16 %v4715
        %v4906 = vunpack.c.l.b16 %v4716
        %v4907 = vunpack.c.l.b16 %v4717
        %v4908 = vunpack.c.h.b16 %v4717
        %v4909 = vunpack.c.l.b16 %v4718
        %v4910 = vunpack.c.l.b16 %v4719
        %v4911 = vunpack.c.h.b16 %v4719
        %v4912 = vunpack.c.l.b16 %v4720
        %v4913 = vunpack.c.l.b16 %v4721
        %v4914 = vunpack.c.h.b16 %v4721
        %v4915 = vunpack.c.l.b16 %v4722
        %v4916 = vunpack.c.l.b16 %v4723
        %v4917 = vunpack.c.h.b16 %v4723
        %v4918 = vunpack.c.l.b16 %v4724
        %v4919 = vunpack.c.l.b16 %v4725
        %v4920 = vunpack.c.h.b16 %v4725
        %v4921 = vunpack.c.l.b16 %v4726
        %v4922 = vunpack.c.l.b16 %v4727
        %v4923 = vunpack.c.h.b16 %v4727
        %v4924 = vunpack.c.l.b16 %v4728
        %v4925 = vunpack.c.l.b16 %v4729
        %v4926 = vunpack.c.h.b16 %v4729
        %v4927 = vunpack.c.l.b16 %v4730
        %v4928 = vunpack.c.l.b16 %v4731
        %v4929 = vunpack.c.h.b16 %v4731
        %v4930 = vunpack.c.l.b16 %v4732
        %v4931 = vunpack.c.l.b16 %v4733
        %v4932 = vunpack.c.h.b16 %v4733
        %v4933 = vunpack.c.l.b16 %v4734
        %v4934 = vunpack.c.l.b16 %v4735
        %v4935 = vunpack.c.h.b16 %v4735
        %v4936 = vunpack.c.l.b16 %v4736
        %v4937 = vunpack.c.l.b16 %v4737
        %v4938 = vunpack.c.h.b16 %v4737
        %v4939 = vunpack.c.l.b16 %v4738
        %v4940 = vunpack.c.l.b16 %v4739
        %v4941 = vunpack.c.h.b16 %v4739
        %v4942 = vunpack.c.l.b16 %v4740
        %v4943 = vunpack.c.l.b16 %v4741
        %v4944 = vunpack.c.h.b16 %v4741
        %v4945 = vunpack.c.l.b16 %v4742
        %v4946 = vunpack.c.l.b16 %v4743
        %v4947 = vunpack.c.h.b16 %v4743
        %v4948 = vunpack.c.l.b16 %v4744
        %v4949 = vunpack.c.l.b16 %v4745
        %v4950 = vunpack.c.h.b16 %v4745
        %v4951 = vunpack.c.l.b16 %v4746
        %v4952 = vpack.c.b16 %v4859, %v4856
        %v4953 = vpack.c.b16 %v4860, %v4857
        %v4954 = vpack.c.b16 %v4861, %v4858
        %v4955 = vpack.c.b16 %v4865, %v4862
        %v4956 = vpack.c.b16 %v4866, %v4863
        %v4957 = vpack.c.b16 %v4867, %v4864
        %v4958 = vpack.c.b16 %v4871, %v4868
        %v4959 = vpack.c.b16 %v4872, %v4869
        %v4960 = vpack.c.b16 %v4873, %v4870
        %v4961 = vpack.c.b16 %v4877, %v4874
        %v4962 = vpack.c.b16 %v4878, %v4875
        %v4963 = vpack.c.b16 %v4879, %v4876
        %v4964 = vpack.c.b16 %v4883, %v4880
        %v4965 = vpack.c.b16 %v4884, %v4881
        %v4966 = vpack.c.b16 %v4885, %v4882
        %v4967 = vpack.c.b16 %v4889, %v4886
        %v4968 = vpack.c.b16 %v4890, %v4887
        %v4969 = vpack.c.b16 %v4891, %v4888
        %v4970 = vpack.c.b16 %v4895, %v4892
        %v4971 = vpack.c.b16 %v4896, %v4893
        %v4972 = vpack.c.b16 %v4897, %v4894
        %v4973 = vpack.c.b16 %v4901, %v4898
        %v4974 = vpack.c.b16 %v4902, %v4899
        %v4975 = vpack.c.b16 %v4903, %v4900
        %v4976 = vpack.c.b16 %v4907, %v4904
        %v4977 = vpack.c.b16 %v4908, %v4905
        %v4978 = vpack.c.b16 %v4909, %v4906
        %v4979 = vpack.c.b16 %v4913, %v4910
        %v4980 = vpack.c.b16 %v4914, %v4911
        %v4981 = vpack.c.b16 %v4915, %v4912
        %v4982 = vpack.c.b16 %v4919, %v4916
        %v4983 = vpack.c.b16 %v4920, %v4917
        %v4984 = vpack.c.b16 %v4921, %v4918
        %v4985 = vpack.c.b16 %v4925, %v4922
        %v4986 = vpack.c.b16 %v4926, %v4923
        %v4987 = vpack.c.b16 %v4927, %v4924
        %v4988 = vpack.c.b16 %v4931, %v4928
        %v4989 = vpack.c.b16 %v4932, %v4929
        %v4990 = vpack.c.b16 %v4933, %v4930
        %v4991 = vpack.c.b16 %v4937, %v4934
        %v4992 = vpack.c.b16 %v4938, %v4935
        %v4993 = vpack.c.b16 %v4939, %v4936
        %v4994 = vpack.c.b16 %v4943, %v4940
        %v4995 = vpack.c.b16 %v4944, %v4941
        %v4996 = vpack.c.b16 %v4945, %v4942
        %v4997 = vpack.c.b16 %v4949, %v4946
        %v4998 = vpack.c.b16 %v4950, %v4947
        %v4999 = vpack.c.b16 %v4951, %v4948
        %v5073 = vunpack.c.l.b16 %v4747
        %v5074 = vunpack.c.l.b16 %v4748
        %v5075 = vunpack.c.l.b16 %v4749
        %v5076 = vunpack.c.l.b16 %v4750
        %v5077 = vunpack.c.l.b16 %v4751
        %v5078 = vunpack.c.l.b16 %v4752
        %v5079 = vunpack.c.l.b16 %v4753
        %v5080 = vunpack.c.l.b16 %v4754
        %v5081 = vunpack.c.l.b16 %v4755
        %v5082 = vunpack.c.l.b16 %v4756
        %v5083 = vunpack.c.l.b16 %v4757
        %v5084 = vunpack.c.l.b16 %v4758
        %v5085 = vunpack.c.l.b16 %v4759
        %v5086 = vunpack.c.l.b16 %v4760
        %v5087 = vunpack.c.l.b16 %v4761
        %v5088 = vunpack.c.l.b16 %v4762
        %v5089 = vunpack.c.l.b16 %v4763
        %v5090 = vunpack.c.l.b16 %v4764
        %v5091 = vunpack.c.l.b16 %v4765
        %v5092 = vunpack.c.l.b16 %v4766
        %v5093 = vunpack.c.l.b16 %v4767
        %v5094 = vunpack.c.l.b16 %v4768
        %v5095 = vunpack.c.l.b16 %v4769
        %v5096 = vunpack.c.l.b16 %v4770
        %v5097 = vunpack.c.l.b16 %v4771
        %v5098 = vunpack.c.l.b16 %v4772
        %v5099 = vunpack.c.l.b16 %v4773
        %v5100 = vunpack.c.l.b16 %v4774
        %v5101 = vunpack.c.l.b16 %v4775
        %v5102 = vunpack.c.l.b16 %v4776
        %v5103 = vunpack.c.l.b16 %v4777
        %v5104 = vunpack.c.l.b16 %v4778
        %v5105 = vunpack.c.l.b16 %v4779
        %v5106 = vunpack.c.l.b16 %v4780
        %v5107 = vunpack.c.l.b16 %v4781
        %v5108 = vunpack.c.l.b16 %v4782
        %v5109 = vunpack.c.l.b16 %v4783
        %v5110 = vunpack.c.l.b16 %v4784
        %v5111 = vunpack.c.l.b16 %v4785
        %v5112 = vunpack.c.l.b16 %v4786
        %v5113 = vunpack.c.l.b16 %v4787
        %v5114 = vpack.c.b16 %v5074, %v5073
        %v5115 = vpack.c.b16 %v5076, %v5075
        %v5116 = vpack.c.b16 %v5078, %v5077
        %v5117 = vpack.c.b16 %v5080, %v5079
        %v5118 = vpack.c.b16 %v5082, %v5081
        %v5119 = vpack.c.b16 %v5084, %v5083
        %v5120 = vpack.c.b16 %v5086, %v5085
        %v5121 = vpack.c.b16 %v5088, %v5087
        %v5122 = vpack.c.b16 %v5090, %v5089
        %v5123 = vpack.c.b16 %v5092, %v5091
        %v5124 = vpack.c.b16 %v5094, %v5093
        %v5125 = vpack.c.b16 %v5096, %v5095
        %v5126 = vpack.c.b16 %v5098, %v5097
        %v5127 = vpack.c.b16 %v5100, %v5099
        %v5128 = vpack.c.b16 %v5102, %v5101
        %v5129 = vpack.c.b16 %v5104, %v5103
        %v5130 = vpack.c.b16 %v5106, %v5105
        %v5131 = vpack.c.b16 %v5108, %v5107
        %v5132 = vpack.c.b16 %v5110, %v5109
        %v5133 = vpack.c.b16 %v5112, %v5111
        %v5134 = vpack.c.b16 %v5113, %v5113
        %vm5155 = vcmask 556032
        %v5157 = vsel %vm5155, %v4954, 0
        %v5160 = vsel %vm5155, %v4957, 0
        %v5163 = vsel %vm5155, %v4960, 0
        %v5166 = vsel %vm5155, %v4963, 0
        %v5169 = vsel %vm5155, %v4966, 0
        %v5172 = vsel %vm5155, %v4969, 0
        %v5175 = vsel %vm5155, %v4972, 0
        %v5178 = vsel %vm5155, %v4975, 0
        %v5181 = vsel %vm5155, %v4978, 0
        %v5184 = vsel %vm5155, %v4981, 0
        %v5187 = vsel %vm5155, %v4984, 0
        %v5190 = vsel %vm5155, %v4987, 0
        %v5193 = vsel %vm5155, %v4990, 0
        %v5196 = vsel %vm5155, %v4993, 0
        %v5199 = vsel %vm5155, %v4996, 0
        %v5202 = vsel %vm5155, %v4999, 0
        %vm5204 = vcmask 1041408
        %v5206 = vsel %vm5204, %v5134, 0
        %5208 = vmatpush.bf16.msra.mxu0 %v5121
        %5209 = vmatpush.bf16.msra.mxu0 %v5120
        %5210 = vmatpush.bf16.msra.mxu0 %v5119
        %5211 = vmatpush.bf16.msra.mxu0 %v5118
        %5212 = vmatpush.bf16.msra.mxu0 %v5117
        %5213 = vmatpush.bf16.msra.mxu0 %v5116
        %5214 = vmatpush.bf16.msra.mxu0 %v5115
        %5215 = vmatpush.bf16.msra.mxu0 %v5114
        %5216 = vmatmul.bf16.gmra.mxu0 %v4952
        %v5217 = vpop.f32.mrf.mxu0
        %v5218 = vadd.f32 %v4790, %v5217
        %v5219 = vpop.f32.mrf.mxu0
        %v5220 = vadd.f32 %v4790, %v5219
        %5221 = vmatmul.bf16.gmra.mxu0 %v4955
        %v5222 = vpop.f32.mrf.mxu0
        %v5223 = vadd.f32 %v4790, %v5222
        %v5224 = vpop.f32.mrf.mxu0
        %v5225 = vadd.f32 %v4790, %v5224
        %5226 = vmatmul.bf16.gmra.mxu0 %v4958
        %v5227 = vpop.f32.mrf.mxu0
        %v5228 = vadd.f32 %v4790, %v5227
        %v5229 = vpop.f32.mrf.mxu0
        %v5230 = vadd.f32 %v4790, %v5229
        %5231 = vmatmul.bf16.gmra.mxu0 %v4961
        %v5232 = vpop.f32.mrf.mxu0
        %v5233 = vadd.f32 %v4790, %v5232
        %v5234 = vpop.f32.mrf.mxu0
        %v5235 = vadd.f32 %v4790, %v5234
        %5236 = vmatmul.bf16.gmra.mxu0 %v4964
        %v5237 = vpop.f32.mrf.mxu0
        %v5238 = vadd.f32 %v4790, %v5237
        %v5239 = vpop.f32.mrf.mxu0
        %v5240 = vadd.f32 %v4790, %v5239
        %5241 = vmatmul.bf16.gmra.mxu0 %v4967
        %v5242 = vpop.f32.mrf.mxu0
        %v5243 = vadd.f32 %v4790, %v5242
        %v5244 = vpop.f32.mrf.mxu0
        %v5245 = vadd.f32 %v4790, %v5244
        %5246 = vmatmul.bf16.gmra.mxu0 %v4970
        %v5247 = vpop.f32.mrf.mxu0
        %v5248 = vadd.f32 %v4790, %v5247
        %v5249 = vpop.f32.mrf.mxu0
        %v5250 = vadd.f32 %v4790, %v5249
        %5251 = vmatmul.bf16.gmra.mxu0 %v4973
        %v5252 = vpop.f32.mrf.mxu0
        %v5253 = vadd.f32 %v4790, %v5252
        %v5254 = vpop.f32.mrf.mxu0
        %v5255 = vadd.f32 %v4790, %v5254
        %5256 = vmatmul.bf16.gmra.mxu0 %v4976
        %v5257 = vpop.f32.mrf.mxu0
        %v5258 = vadd.f32 %v4790, %v5257
        %v5259 = vpop.f32.mrf.mxu0
        %v5260 = vadd.f32 %v4790, %v5259
        %5261 = vmatmul.bf16.gmra.mxu0 %v4979
        %v5262 = vpop.f32.mrf.mxu0
        %v5263 = vadd.f32 %v4790, %v5262
        %v5264 = vpop.f32.mrf.mxu0
        %v5265 = vadd.f32 %v4790, %v5264
        %5266 = vmatmul.bf16.gmra.mxu0 %v4982
        %v5267 = vpop.f32.mrf.mxu0
        %v5268 = vadd.f32 %v4790, %v5267
        %v5269 = vpop.f32.mrf.mxu0
        %v5270 = vadd.f32 %v4790, %v5269
        %5271 = vmatmul.bf16.gmra.mxu0 %v4985
        %v5272 = vpop.f32.mrf.mxu0
        %v5273 = vadd.f32 %v4790, %v5272
        %v5274 = vpop.f32.mrf.mxu0
        %v5275 = vadd.f32 %v4790, %v5274
        %5276 = vmatmul.bf16.gmra.mxu0 %v4988
        %v5277 = vpop.f32.mrf.mxu0
        %v5278 = vadd.f32 %v4790, %v5277
        %v5279 = vpop.f32.mrf.mxu0
        %v5280 = vadd.f32 %v4790, %v5279
        %5281 = vmatmul.bf16.gmra.mxu0 %v4991
        %v5282 = vpop.f32.mrf.mxu0
        %v5283 = vadd.f32 %v4790, %v5282
        %v5284 = vpop.f32.mrf.mxu0
        %v5285 = vadd.f32 %v4790, %v5284
        %5286 = vmatmul.bf16.gmra.mxu0 %v4994
        %v5287 = vpop.f32.mrf.mxu0
        %v5288 = vadd.f32 %v4790, %v5287
        %v5289 = vpop.f32.mrf.mxu0
        %v5290 = vadd.f32 %v4790, %v5289
        %5291 = vmatmul.bf16.gmra.mxu0 %v4997
        %v5292 = vpop.f32.mrf.mxu0
        %v5293 = vadd.f32 %v4790, %v5292
        %v5294 = vpop.f32.mrf.mxu0
        %v5295 = vadd.f32 %v4790, %v5294
        %5296 = vdwg.mxu0
        %5297 = vmatpush.bf16.msra.mxu0 %v5129
        %5298 = vmatpush.bf16.msra.mxu0 %v5128
        %5299 = vmatpush.bf16.msra.mxu0 %v5127
        %5300 = vmatpush.bf16.msra.mxu0 %v5126
        %5301 = vmatpush.bf16.msra.mxu0 %v5125
        %5302 = vmatpush.bf16.msra.mxu0 %v5124
        %5303 = vmatpush.bf16.msra.mxu0 %v5123
        %5304 = vmatpush.bf16.msra.mxu0 %v5122
        %5305 = vmatmul.bf16.gmra.mxu0 %v4953
        %v5306 = vpop.f32.mrf.mxu0
        %v5307 = vadd.f32 %v5218, %v5306
        %v5308 = vpop.f32.mrf.mxu0
        %v5309 = vadd.f32 %v5220, %v5308
        %5310 = vmatmul.bf16.gmra.mxu0 %v4956
        %v5311 = vpop.f32.mrf.mxu0
        %v5312 = vadd.f32 %v5223, %v5311
        %v5313 = vpop.f32.mrf.mxu0
        %v5314 = vadd.f32 %v5225, %v5313
        %5315 = vmatmul.bf16.gmra.mxu0 %v4959
        %v5316 = vpop.f32.mrf.mxu0
        %v5317 = vadd.f32 %v5228, %v5316
        %v5318 = vpop.f32.mrf.mxu0
        %v5319 = vadd.f32 %v5230, %v5318
        %5320 = vmatmul.bf16.gmra.mxu0 %v4962
        %v5321 = vpop.f32.mrf.mxu0
        %v5322 = vadd.f32 %v5233, %v5321
        %v5323 = vpop.f32.mrf.mxu0
        %v5324 = vadd.f32 %v5235, %v5323
        %5325 = vmatmul.bf16.gmra.mxu0 %v4965
        %v5326 = vpop.f32.mrf.mxu0
        %v5327 = vadd.f32 %v5238, %v5326
        %v5328 = vpop.f32.mrf.mxu0
        %v5329 = vadd.f32 %v5240, %v5328
        %5330 = vmatmul.bf16.gmra.mxu0 %v4968
        %v5331 = vpop.f32.mrf.mxu0
        %v5332 = vadd.f32 %v5243, %v5331
        %v5333 = vpop.f32.mrf.mxu0
        %v5334 = vadd.f32 %v5245, %v5333
        %5335 = vmatmul.bf16.gmra.mxu0 %v4971
        %v5336 = vpop.f32.mrf.mxu0
        %v5337 = vadd.f32 %v5248, %v5336
        %v5338 = vpop.f32.mrf.mxu0
        %v5339 = vadd.f32 %v5250, %v5338
        %5340 = vmatmul.bf16.gmra.mxu0 %v4974
        %v5341 = vpop.f32.mrf.mxu0
        %v5342 = vadd.f32 %v5253, %v5341
        %v5343 = vpop.f32.mrf.mxu0
        %v5344 = vadd.f32 %v5255, %v5343
        %5345 = vmatmul.bf16.gmra.mxu0 %v4977
        %v5346 = vpop.f32.mrf.mxu0
        %v5347 = vadd.f32 %v5258, %v5346
        %v5348 = vpop.f32.mrf.mxu0
        %v5349 = vadd.f32 %v5260, %v5348
        %5350 = vmatmul.bf16.gmra.mxu0 %v4980
        %v5351 = vpop.f32.mrf.mxu0
        %v5352 = vadd.f32 %v5263, %v5351
        %v5353 = vpop.f32.mrf.mxu0
        %v5354 = vadd.f32 %v5265, %v5353
        %5355 = vmatmul.bf16.gmra.mxu0 %v4983
        %v5356 = vpop.f32.mrf.mxu0
        %v5357 = vadd.f32 %v5268, %v5356
        %v5358 = vpop.f32.mrf.mxu0
        %v5359 = vadd.f32 %v5270, %v5358
        %5360 = vmatmul.bf16.gmra.mxu0 %v4986
        %v5361 = vpop.f32.mrf.mxu0
        %v5362 = vadd.f32 %v5273, %v5361
        %v5363 = vpop.f32.mrf.mxu0
        %v5364 = vadd.f32 %v5275, %v5363
        %5365 = vmatmul.bf16.gmra.mxu0 %v4989
        %v5366 = vpop.f32.mrf.mxu0
        %v5367 = vadd.f32 %v5278, %v5366
        %v5368 = vpop.f32.mrf.mxu0
        %v5369 = vadd.f32 %v5280, %v5368
        %5370 = vmatmul.bf16.gmra.mxu0 %v4992
        %v5371 = vpop.f32.mrf.mxu0
        %v5372 = vadd.f32 %v5283, %v5371
        %v5373 = vpop.f32.mrf.mxu0
        %v5374 = vadd.f32 %v5285, %v5373
        %5375 = vmatmul.bf16.gmra.mxu0 %v4995
        %v5376 = vpop.f32.mrf.mxu0
        %v5377 = vadd.f32 %v5288, %v5376
        %v5378 = vpop.f32.mrf.mxu0
        %v5379 = vadd.f32 %v5290, %v5378
        %5380 = vmatmul.bf16.gmra.mxu0 %v4998
        %v5381 = vpop.f32.mrf.mxu0
        %v5382 = vadd.f32 %v5293, %v5381
        %v5383 = vpop.f32.mrf.mxu0
        %v5384 = vadd.f32 %v5295, %v5383
        %5385 = vdwg.mxu0
        %5386 = vmatpush.bf16.msra.mxu0 0
        %5387 = vmatpush.bf16.msra.mxu0 0
        %5388 = vmatpush.bf16.msra.mxu0 0
        %5389 = vmatpush.bf16.msra.mxu0 %v5206
        %5390 = vmatpush.bf16.msra.mxu0 %v5133
        %5391 = vmatpush.bf16.msra.mxu0 %v5132
        %5392 = vmatpush.bf16.msra.mxu0 %v5131
        %5393 = vmatpush.bf16.msra.mxu0 %v5130
        %5394 = vmatmul.bf16.gmra.mxu0 %v5157
        %v5395 = vpop.f32.mrf.mxu0
        %v5396 = vadd.f32 %v5307, %v5395
        %v5397 = vpop.f32.mrf.mxu0
        %v5398 = vadd.f32 %v5309, %v5397
        %5399 = vmatmul.bf16.gmra.mxu0 %v5160
        %v5400 = vpop.f32.mrf.mxu0
        %v5401 = vadd.f32 %v5312, %v5400
        %v5402 = vpop.f32.mrf.mxu0
        %v5403 = vadd.f32 %v5314, %v5402
        %5404 = vmatmul.bf16.gmra.mxu0 %v5163
        %v5405 = vpop.f32.mrf.mxu0
        %v5406 = vadd.f32 %v5317, %v5405
        %v5407 = vpop.f32.mrf.mxu0
        %v5408 = vadd.f32 %v5319, %v5407
        %5409 = vmatmul.bf16.gmra.mxu0 %v5166
        %v5410 = vpop.f32.mrf.mxu0
        %v5411 = vadd.f32 %v5322, %v5410
        %v5412 = vpop.f32.mrf.mxu0
        %v5413 = vadd.f32 %v5324, %v5412
        %5414 = vmatmul.bf16.gmra.mxu0 %v5169
        %v5415 = vpop.f32.mrf.mxu0
        %v5416 = vadd.f32 %v5327, %v5415
        %v5417 = vpop.f32.mrf.mxu0
        %v5418 = vadd.f32 %v5329, %v5417
        %5419 = vmatmul.bf16.gmra.mxu0 %v5172
        %v5420 = vpop.f32.mrf.mxu0
        %v5421 = vadd.f32 %v5332, %v5420
        %v5422 = vpop.f32.mrf.mxu0
        %v5423 = vadd.f32 %v5334, %v5422
        %5424 = vmatmul.bf16.gmra.mxu0 %v5175
        %v5425 = vpop.f32.mrf.mxu0
        %v5426 = vadd.f32 %v5337, %v5425
        %v5427 = vpop.f32.mrf.mxu0
        %v5428 = vadd.f32 %v5339, %v5427
        %5429 = vmatmul.bf16.gmra.mxu0 %v5178
        %v5430 = vpop.f32.mrf.mxu0
        %v5431 = vadd.f32 %v5342, %v5430
        %v5432 = vpop.f32.mrf.mxu0
        %v5433 = vadd.f32 %v5344, %v5432
        %5434 = vmatmul.bf16.gmra.mxu0 %v5181
        %v5435 = vpop.f32.mrf.mxu0
        %v5436 = vadd.f32 %v5347, %v5435
        %v5437 = vpop.f32.mrf.mxu0
        %v5438 = vadd.f32 %v5349, %v5437
        %5439 = vmatmul.bf16.gmra.mxu0 %v5184
        %v5440 = vpop.f32.mrf.mxu0
        %v5441 = vadd.f32 %v5352, %v5440
        %v5442 = vpop.f32.mrf.mxu0
        %v5443 = vadd.f32 %v5354, %v5442
        %5444 = vmatmul.bf16.gmra.mxu0 %v5187
        %v5445 = vpop.f32.mrf.mxu0
        %v5446 = vadd.f32 %v5357, %v5445
        %v5447 = vpop.f32.mrf.mxu0
        %v5448 = vadd.f32 %v5359, %v5447
        %5449 = vmatmul.bf16.gmra.mxu0 %v5190
        %v5450 = vpop.f32.mrf.mxu0
        %v5451 = vadd.f32 %v5362, %v5450
        %v5452 = vpop.f32.mrf.mxu0
        %v5453 = vadd.f32 %v5364, %v5452
        %5454 = vmatmul.bf16.gmra.mxu0 %v5193
        %v5455 = vpop.f32.mrf.mxu0
        %v5456 = vadd.f32 %v5367, %v5455
        %v5457 = vpop.f32.mrf.mxu0
        %v5458 = vadd.f32 %v5369, %v5457
        %5459 = vmatmul.bf16.gmra.mxu0 %v5196
        %v5460 = vpop.f32.mrf.mxu0
        %v5461 = vadd.f32 %v5372, %v5460
        %v5462 = vpop.f32.mrf.mxu0
        %v5463 = vadd.f32 %v5374, %v5462
        %5464 = vmatmul.bf16.gmra.mxu0 %v5199
        %v5465 = vpop.f32.mrf.mxu0
        %v5466 = vadd.f32 %v5377, %v5465
        %v5467 = vpop.f32.mrf.mxu0
        %v5468 = vadd.f32 %v5379, %v5467
        %5469 = vmatmul.bf16.gmra.mxu0 %v5202
        %v5470 = vpop.f32.mrf.mxu0
        %v5471 = vadd.f32 %v5382, %v5470
        %v5472 = vpop.f32.mrf.mxu0
        %v5473 = vadd.f32 %v5384, %v5472
        %5474 = vdwg.mxu0
        %v5475 = vlaneseq
        %v5476 = vand.u32 %v5475, 127
        %v5477 = vsub.f32 0.0, %v5396
        %v5478 = vsub.f32 0.0, %v5398
        %v5479 = vsub.f32 0.0, %v5401
        %v5480 = vsub.f32 0.0, %v5403
        %v5481 = vsub.f32 0.0, %v5406
        %v5482 = vsub.f32 0.0, %v5408
        %v5483 = vsub.f32 0.0, %v5411
        %v5484 = vsub.f32 0.0, %v5413
        %v5485 = vsub.f32 0.0, %v5416
        %v5486 = vsub.f32 0.0, %v5418
        %v5487 = vsub.f32 0.0, %v5421
        %v5488 = vsub.f32 0.0, %v5423
        %v5489 = vsub.f32 0.0, %v5426
        %v5490 = vsub.f32 0.0, %v5428
        %v5491 = vsub.f32 0.0, %v5431
        %v5492 = vsub.f32 0.0, %v5433
        %v5493 = vsub.f32 0.0, %v5436
        %v5494 = vsub.f32 0.0, %v5438
        %v5495 = vsub.f32 0.0, %v5441
        %v5496 = vsub.f32 0.0, %v5443
        %v5497 = vsub.f32 0.0, %v5446
        %v5498 = vsub.f32 0.0, %v5448
        %v5499 = vsub.f32 0.0, %v5451
        %v5500 = vsub.f32 0.0, %v5453
        %v5501 = vsub.f32 0.0, %v5456
        %v5502 = vsub.f32 0.0, %v5458
        %v5503 = vsub.f32 0.0, %v5461
        %v5504 = vsub.f32 0.0, %v5463
        %v5505 = vsub.f32 0.0, %v5466
        %v5506 = vsub.f32 0.0, %v5468
        %v5507 = vsub.f32 0.0, %v5471
        %v5508 = vsub.f32 0.0, %v5473
        %v5509 = vmul.f32 %v5477, 1.442695
        %v5510 = vpow.pop %v5509
        %v5511 = vmul.f32 %v5478, 1.442695
        %v5512 = vpow.pop %v5511
        %v5513 = vmul.f32 %v5479, 1.442695
        %v5514 = vpow.pop %v5513
        %v5515 = vmul.f32 %v5480, 1.442695
        %v5516 = vpow.pop %v5515
        %v5517 = vmul.f32 %v5481, 1.442695
        %v5518 = vpow.pop %v5517
        %v5519 = vmul.f32 %v5482, 1.442695
        %v5520 = vpow.pop %v5519
        %v5521 = vmul.f32 %v5483, 1.442695
        %v5522 = vpow.pop %v5521
        %v5523 = vmul.f32 %v5484, 1.442695
        %v5524 = vpow.pop %v5523
        %v5525 = vmul.f32 %v5485, 1.442695
        %v5526 = vpow.pop %v5525
        %v5527 = vmul.f32 %v5486, 1.442695
        %v5528 = vpow.pop %v5527
        %v5529 = vmul.f32 %v5487, 1.442695
        %v5530 = vpow.pop %v5529
        %v5531 = vmul.f32 %v5488, 1.442695
        %v5532 = vpow.pop %v5531
        %v5533 = vmul.f32 %v5489, 1.442695
        %v5534 = vpow.pop %v5533
        %v5535 = vmul.f32 %v5490, 1.442695
        %v5536 = vpow.pop %v5535
        %v5537 = vmul.f32 %v5491, 1.442695
        %v5538 = vpow.pop %v5537
        %v5539 = vmul.f32 %v5492, 1.442695
        %v5540 = vpow.pop %v5539
        %v5541 = vmul.f32 %v5493, 1.442695
        %v5542 = vpow.pop %v5541
        %v5543 = vmul.f32 %v5494, 1.442695
        %v5544 = vpow.pop %v5543
        %v5545 = vmul.f32 %v5495, 1.442695
        %v5546 = vpow.pop %v5545
        %v5547 = vmul.f32 %v5496, 1.442695
        %v5548 = vpow.pop %v5547
        %v5549 = vmul.f32 %v5497, 1.442695
        %v5550 = vpow.pop %v5549
        %v5551 = vmul.f32 %v5498, 1.442695
        %v5552 = vpow.pop %v5551
        %v5553 = vmul.f32 %v5499, 1.442695
        %v5554 = vpow.pop %v5553
        %v5555 = vmul.f32 %v5500, 1.442695
        %v5556 = vpow.pop %v5555
        %v5557 = vmul.f32 %v5501, 1.442695
        %v5558 = vpow.pop %v5557
        %v5559 = vmul.f32 %v5502, 1.442695
        %v5560 = vpow.pop %v5559
        %v5561 = vmul.f32 %v5503, 1.442695
        %v5562 = vpow.pop %v5561
        %v5563 = vmul.f32 %v5504, 1.442695
        %v5564 = vpow.pop %v5563
        %v5565 = vmul.f32 %v5505, 1.442695
        %v5566 = vpow.pop %v5565
        %v5567 = vmul.f32 %v5506, 1.442695
        %v5568 = vpow.pop %v5567
        %v5569 = vmul.f32 %v5507, 1.442695
        %v5570 = vpow.pop %v5569
        %v5571 = vmul.f32 %v5508, 1.442695
        %v5572 = vpow.pop %v5571
        %v5573 = vadd.f32 %v5510, 1.0
        %v5574 = vadd.f32 %v5512, 1.0
        %v5575 = vadd.f32 %v5514, 1.0
        %v5576 = vadd.f32 %v5516, 1.0
        %v5577 = vadd.f32 %v5518, 1.0
        %v5578 = vadd.f32 %v5520, 1.0
        %v5579 = vadd.f32 %v5522, 1.0
        %v5580 = vadd.f32 %v5524, 1.0
        %v5581 = vadd.f32 %v5526, 1.0
        %v5582 = vadd.f32 %v5528, 1.0
        %v5583 = vadd.f32 %v5530, 1.0
        %v5584 = vadd.f32 %v5532, 1.0
        %v5585 = vadd.f32 %v5534, 1.0
        %v5586 = vadd.f32 %v5536, 1.0
        %v5587 = vadd.f32 %v5538, 1.0
        %v5588 = vadd.f32 %v5540, 1.0
        %v5589 = vadd.f32 %v5542, 1.0
        %v5590 = vadd.f32 %v5544, 1.0
        %v5591 = vadd.f32 %v5546, 1.0
        %v5592 = vadd.f32 %v5548, 1.0
        %v5593 = vadd.f32 %v5550, 1.0
        %v5594 = vadd.f32 %v5552, 1.0
        %v5595 = vadd.f32 %v5554, 1.0
        %v5596 = vadd.f32 %v5556, 1.0
        %v5597 = vadd.f32 %v5558, 1.0
        %v5598 = vadd.f32 %v5560, 1.0
        %v5599 = vadd.f32 %v5562, 1.0
        %v5600 = vadd.f32 %v5564, 1.0
        %v5601 = vadd.f32 %v5566, 1.0
        %v5602 = vadd.f32 %v5568, 1.0
        %v5603 = vadd.f32 %v5570, 1.0
        %v5604 = vadd.f32 %v5572, 1.0
        %v5605 = vrcp.pop %v5573
        %v5606 = vrcp.pop %v5574
        %v5607 = vrcp.pop %v5575
        %v5608 = vrcp.pop %v5576
        %v5609 = vrcp.pop %v5577
        %v5610 = vrcp.pop %v5578
        %v5611 = vrcp.pop %v5579
        %v5612 = vrcp.pop %v5580
        %v5613 = vrcp.pop %v5581
        %v5614 = vrcp.pop %v5582
        %v5615 = vrcp.pop %v5583
        %v5616 = vrcp.pop %v5584
        %v5617 = vrcp.pop %v5585
        %v5618 = vrcp.pop %v5586
        %v5619 = vrcp.pop %v5587
        %v5620 = vrcp.pop %v5588
        %v5621 = vrcp.pop %v5589
        %v5622 = vrcp.pop %v5590
        %v5623 = vrcp.pop %v5591
        %v5624 = vrcp.pop %v5592
        %v5625 = vrcp.pop %v5593
        %v5626 = vrcp.pop %v5594
        %v5627 = vrcp.pop %v5595
        %v5628 = vrcp.pop %v5596
        %v5629 = vrcp.pop %v5597
        %v5630 = vrcp.pop %v5598
        %v5631 = vrcp.pop %v5599
        %v5632 = vrcp.pop %v5600
        %v5633 = vrcp.pop %v5601
        %v5634 = vrcp.pop %v5602
        %v5635 = vrcp.pop %v5603
        %v5636 = vrcp.pop %v5604
        %vm5637 = vcmp.lt.s32.totalorder %v5476, 96
        %v5638 = vtanh.pop %v5396
        %v5639 = vtanh.pop %v5398
        %v5640 = vtanh.pop %v5401
        %v5641 = vtanh.pop %v5403
        %v5642 = vtanh.pop %v5406
        %v5643 = vtanh.pop %v5408
        %v5644 = vtanh.pop %v5411
        %v5645 = vtanh.pop %v5413
        %v5646 = vtanh.pop %v5416
        %v5647 = vtanh.pop %v5418
        %v5648 = vtanh.pop %v5421
        %v5649 = vtanh.pop %v5423
        %v5650 = vtanh.pop %v5426
        %v5651 = vtanh.pop %v5428
        %v5652 = vtanh.pop %v5431
        %v5653 = vtanh.pop %v5433
        %v5654 = vtanh.pop %v5436
        %v5655 = vtanh.pop %v5438
        %v5656 = vtanh.pop %v5441
        %v5657 = vtanh.pop %v5443
        %v5658 = vtanh.pop %v5446
        %v5659 = vtanh.pop %v5448
        %v5660 = vtanh.pop %v5451
        %v5661 = vtanh.pop %v5453
        %v5662 = vtanh.pop %v5456
        %v5663 = vtanh.pop %v5458
        %v5664 = vtanh.pop %v5461
        %v5665 = vtanh.pop %v5463
        %v5666 = vtanh.pop %v5466
        %v5667 = vtanh.pop %v5468
        %v5668 = vtanh.pop %v5471
        %v5669 = vtanh.pop %v5473
        %v5670 = vsel %vm5637, %v5605, %v5638
        %v5671 = vsel %vm5637, %v5606, %v5639
        %v5672 = vsel %vm5637, %v5607, %v5640
        %v5673 = vsel %vm5637, %v5608, %v5641
        %v5674 = vsel %vm5637, %v5609, %v5642
        %v5675 = vsel %vm5637, %v5610, %v5643
        %v5676 = vsel %vm5637, %v5611, %v5644
        %v5677 = vsel %vm5637, %v5612, %v5645
        %v5678 = vsel %vm5637, %v5613, %v5646
        %v5679 = vsel %vm5637, %v5614, %v5647
        %v5680 = vsel %vm5637, %v5615, %v5648
        %v5681 = vsel %vm5637, %v5616, %v5649
        %v5682 = vsel %vm5637, %v5617, %v5650
        %v5683 = vsel %vm5637, %v5618, %v5651
        %v5684 = vsel %vm5637, %v5619, %v5652
        %v5685 = vsel %vm5637, %v5620, %v5653
        %v5686 = vsel %vm5637, %v5621, %v5654
        %v5687 = vsel %vm5637, %v5622, %v5655
        %v5688 = vsel %vm5637, %v5623, %v5656
        %v5689 = vsel %vm5637, %v5624, %v5657
        %v5690 = vsel %vm5637, %v5625, %v5658
        %v5691 = vsel %vm5637, %v5626, %v5659
        %v5692 = vsel %vm5637, %v5627, %v5660
        %v5693 = vsel %vm5637, %v5628, %v5661
        %v5694 = vsel %vm5637, %v5629, %v5662
        %v5695 = vsel %vm5637, %v5630, %v5663
        %v5696 = vsel %vm5637, %v5631, %v5664
        %v5697 = vsel %vm5637, %v5632, %v5665
        %v5698 = vsel %vm5637, %v5633, %v5666
        %v5699 = vsel %vm5637, %v5634, %v5667
        %v5700 = vsel %vm5637, %v5635, %v5668
        %v5701 = vsel %vm5637, %v5636, %v5669
        %v5702 = vld [vmem:[%s254] sm:$0xff]
        %v5703 = vld [vmem:[%s254 + $0x8] sm:$0xff]
        %v5704 = vld [vmem:[%s254 + $0x10] sm:$0xff]
        %v5705 = vld [vmem:[%s254 + $0x18] sm:$0xff]
        %v5706 = vld [vmem:[%s254 + $0x20] sm:$0xff]
        %v5707 = vld [vmem:[%s254 + $0x28] sm:$0xff]
        %v5708 = vld [vmem:[%s254 + $0x30] sm:$0xff]
        %v5709 = vld [vmem:[%s254 + $0x38] sm:$0xff]
        %v5710 = vld [vmem:[%s254 + $0x40] sm:$0xff]
        %v5711 = vld [vmem:[%s254 + $0x48] sm:$0xff]
        %v5712 = vld [vmem:[%s254 + $0x50] sm:$0xff]
        %v5713 = vld [vmem:[%s254 + $0x58] sm:$0xff]
        %v5714 = vld [vmem:[%s254 + $0x60] sm:$0xff]
        %v5715 = vld [vmem:[%s254 + $0x68] sm:$0xff]
        %v5716 = vld [vmem:[%s254 + $0x70] sm:$0xff]
        %v5717 = vld [vmem:[%s254 + $0x78] sm:$0xff]
        %v5718 = vld [vmem:[%s254 + $0x80] sm:$0xff]
        %v5719 = vld [vmem:[%s254 + $0x88] sm:$0xff]
        %v5720 = vld [vmem:[%s254 + $0x90] sm:$0xff]
        %v5721 = vld [vmem:[%s254 + $0x98] sm:$0xff]
        %v5722 = vld [vmem:[%s254 + $0xa0] sm:$0xff]
        %v5723 = vld [vmem:[%s254 + $0xa8] sm:$0xff]
        %v5724 = vld [vmem:[%s254 + $0xb0] sm:$0xff]
        %v5725 = vld [vmem:[%s254 + $0xb8] sm:$0xff]
        %v5726 = vld [vmem:[%s254 + $0xc0] sm:$0xff]
        %v5727 = vld [vmem:[%s254 + $0xc8] sm:$0xff]
        %v5728 = vld [vmem:[%s254 + $0xd0] sm:$0xff]
        %v5729 = vld [vmem:[%s254 + $0xd8] sm:$0xff]
        %v5730 = vld [vmem:[%s254 + $0xe0] sm:$0xff]
        %v5731 = vld [vmem:[%s254 + $0xe8] sm:$0xff]
        %v5732 = vld [vmem:[%s254 + $0xf0] sm:$0xff]
        %v5733 = vld [vmem:[%s254 + $0xf8] sm:$0xff]
        %v5734 = vmul.f32 %v5670, %v5702
        %v5735 = vmul.f32 %v5671, %v5703
        %v5736 = vmul.f32 %v5672, %v5704
        %v5737 = vmul.f32 %v5673, %v5705
        %v5738 = vmul.f32 %v5674, %v5706
        %v5739 = vmul.f32 %v5675, %v5707
        %v5740 = vmul.f32 %v5676, %v5708
        %v5741 = vmul.f32 %v5677, %v5709
        %v5742 = vmul.f32 %v5678, %v5710
        %v5743 = vmul.f32 %v5679, %v5711
        %v5744 = vmul.f32 %v5680, %v5712
        %v5745 = vmul.f32 %v5681, %v5713
        %v5746 = vmul.f32 %v5682, %v5714
        %v5747 = vmul.f32 %v5683, %v5715
        %v5748 = vmul.f32 %v5684, %v5716
        %v5749 = vmul.f32 %v5685, %v5717
        %v5750 = vmul.f32 %v5686, %v5718
        %v5751 = vmul.f32 %v5687, %v5719
        %v5752 = vmul.f32 %v5688, %v5720
        %v5753 = vmul.f32 %v5689, %v5721
        %v5754 = vmul.f32 %v5690, %v5722
        %v5755 = vmul.f32 %v5691, %v5723
        %v5756 = vmul.f32 %v5692, %v5724
        %v5757 = vmul.f32 %v5693, %v5725
        %v5758 = vmul.f32 %v5694, %v5726
        %v5759 = vmul.f32 %v5695, %v5727
        %v5760 = vmul.f32 %v5696, %v5728
        %v5761 = vmul.f32 %v5697, %v5729
        %v5762 = vmul.f32 %v5698, %v5730
        %v5763 = vmul.f32 %v5699, %v5731
        %v5764 = vmul.f32 %v5700, %v5732
        %v5765 = vmul.f32 %v5701, %v5733
        %5798 = vrot.lane.b32.xlu0 %v5670, 64
        %v5799 = vpop.permute.xlu0 %5798
        %5800 = vrot.lane.b32.xlu0 %v5671, 64
        %v5801 = vpop.permute.xlu0 %5800
        %5802 = vrot.lane.b32.xlu0 %v5672, 64
        %v5803 = vpop.permute.xlu0 %5802
        %5804 = vrot.lane.b32.xlu0 %v5673, 64
        %v5805 = vpop.permute.xlu0 %5804
        %5806 = vrot.lane.b32.xlu0 %v5674, 64
        %v5807 = vpop.permute.xlu0 %5806
        %5808 = vrot.lane.b32.xlu0 %v5675, 64
        %v5809 = vpop.permute.xlu0 %5808
        %5810 = vrot.lane.b32.xlu0 %v5676, 64
        %v5811 = vpop.permute.xlu0 %5810
        %5812 = vrot.lane.b32.xlu0 %v5677, 64
        %v5813 = vpop.permute.xlu0 %5812
        %5814 = vrot.lane.b32.xlu0 %v5678, 64
        %v5815 = vpop.permute.xlu0 %5814
        %5816 = vrot.lane.b32.xlu0 %v5679, 64
        %v5817 = vpop.permute.xlu0 %5816
        %5818 = vrot.lane.b32.xlu0 %v5680, 64
        %v5819 = vpop.permute.xlu0 %5818
        %5820 = vrot.lane.b32.xlu0 %v5681, 64
        %v5821 = vpop.permute.xlu0 %5820
        %5822 = vrot.lane.b32.xlu0 %v5682, 64
        %v5823 = vpop.permute.xlu0 %5822
        %5824 = vrot.lane.b32.xlu0 %v5683, 64
        %v5825 = vpop.permute.xlu0 %5824
        %5826 = vrot.lane.b32.xlu0 %v5684, 64
        %v5827 = vpop.permute.xlu0 %5826
        %5828 = vrot.lane.b32.xlu0 %v5685, 64
        %v5829 = vpop.permute.xlu0 %5828
        %5830 = vrot.lane.b32.xlu0 %v5686, 64
        %v5831 = vpop.permute.xlu0 %5830
        %5832 = vrot.lane.b32.xlu0 %v5687, 64
        %v5833 = vpop.permute.xlu0 %5832
        %5834 = vrot.lane.b32.xlu0 %v5688, 64
        %v5835 = vpop.permute.xlu0 %5834
        %5836 = vrot.lane.b32.xlu0 %v5689, 64
        %v5837 = vpop.permute.xlu0 %5836
        %5838 = vrot.lane.b32.xlu0 %v5690, 64
        %v5839 = vpop.permute.xlu0 %5838
        %5840 = vrot.lane.b32.xlu0 %v5691, 64
        %v5841 = vpop.permute.xlu0 %5840
        %5842 = vrot.lane.b32.xlu0 %v5692, 64
        %v5843 = vpop.permute.xlu0 %5842
        %5844 = vrot.lane.b32.xlu0 %v5693, 64
        %v5845 = vpop.permute.xlu0 %5844
        %5846 = vrot.lane.b32.xlu0 %v5694, 64
        %v5847 = vpop.permute.xlu0 %5846
        %5848 = vrot.lane.b32.xlu0 %v5695, 64
        %v5849 = vpop.permute.xlu0 %5848
        %5850 = vrot.lane.b32.xlu0 %v5696, 64
        %v5851 = vpop.permute.xlu0 %5850
        %5852 = vrot.lane.b32.xlu0 %v5697, 64
        %v5853 = vpop.permute.xlu0 %5852
        %5854 = vrot.lane.b32.xlu0 %v5698, 64
        %v5855 = vpop.permute.xlu0 %5854
        %5856 = vrot.lane.b32.xlu0 %v5699, 64
        %v5857 = vpop.permute.xlu0 %5856
        %5858 = vrot.lane.b32.xlu0 %v5700, 64
        %v5859 = vpop.permute.xlu0 %5858
        %5860 = vrot.lane.b32.xlu0 %v5701, 64
        %v5861 = vpop.permute.xlu0 %5860
        %v5894 = vmul.f32 %v5670, %v5799
        %v5895 = vmul.f32 %v5671, %v5801
        %v5896 = vmul.f32 %v5672, %v5803
        %v5897 = vmul.f32 %v5673, %v5805
        %v5898 = vmul.f32 %v5674, %v5807
        %v5899 = vmul.f32 %v5675, %v5809
        %v5900 = vmul.f32 %v5676, %v5811
        %v5901 = vmul.f32 %v5677, %v5813
        %v5902 = vmul.f32 %v5678, %v5815
        %v5903 = vmul.f32 %v5679, %v5817
        %v5904 = vmul.f32 %v5680, %v5819
        %v5905 = vmul.f32 %v5681, %v5821
        %v5906 = vmul.f32 %v5682, %v5823
        %v5907 = vmul.f32 %v5683, %v5825
        %v5908 = vmul.f32 %v5684, %v5827
        %v5909 = vmul.f32 %v5685, %v5829
        %v5910 = vmul.f32 %v5686, %v5831
        %v5911 = vmul.f32 %v5687, %v5833
        %v5912 = vmul.f32 %v5688, %v5835
        %v5913 = vmul.f32 %v5689, %v5837
        %v5914 = vmul.f32 %v5690, %v5839
        %v5915 = vmul.f32 %v5691, %v5841
        %v5916 = vmul.f32 %v5692, %v5843
        %v5917 = vmul.f32 %v5693, %v5845
        %v5918 = vmul.f32 %v5694, %v5847
        %v5919 = vmul.f32 %v5695, %v5849
        %v5920 = vmul.f32 %v5696, %v5851
        %v5921 = vmul.f32 %v5697, %v5853
        %v5922 = vmul.f32 %v5698, %v5855
        %v5923 = vmul.f32 %v5699, %v5857
        %v5924 = vmul.f32 %v5700, %v5859
        %v5925 = vmul.f32 %v5701, %v5861
        %5958 = vrot.lane.b32.xlu0 %v5894, 96
        %v5959 = vpop.permute.xlu0 %5958
        %5960 = vrot.lane.b32.xlu0 %v5895, 96
        %v5961 = vpop.permute.xlu0 %5960
        %5962 = vrot.lane.b32.xlu0 %v5896, 96
        %v5963 = vpop.permute.xlu0 %5962
        %5964 = vrot.lane.b32.xlu0 %v5897, 96
        %v5965 = vpop.permute.xlu0 %5964
        %5966 = vrot.lane.b32.xlu0 %v5898, 96
        %v5967 = vpop.permute.xlu0 %5966
        %5968 = vrot.lane.b32.xlu0 %v5899, 96
        %v5969 = vpop.permute.xlu0 %5968
        %5970 = vrot.lane.b32.xlu0 %v5900, 96
        %v5971 = vpop.permute.xlu0 %5970
        %5972 = vrot.lane.b32.xlu0 %v5901, 96
        %v5973 = vpop.permute.xlu0 %5972
        %5974 = vrot.lane.b32.xlu0 %v5902, 96
        %v5975 = vpop.permute.xlu0 %5974
        %5976 = vrot.lane.b32.xlu0 %v5903, 96
        %v5977 = vpop.permute.xlu0 %5976
        %5978 = vrot.lane.b32.xlu0 %v5904, 96
        %v5979 = vpop.permute.xlu0 %5978
        %5980 = vrot.lane.b32.xlu0 %v5905, 96
        %v5981 = vpop.permute.xlu0 %5980
        %5982 = vrot.lane.b32.xlu0 %v5906, 96
        %v5983 = vpop.permute.xlu0 %5982
        %5984 = vrot.lane.b32.xlu0 %v5907, 96
        %v5985 = vpop.permute.xlu0 %5984
        %5986 = vrot.lane.b32.xlu0 %v5908, 96
        %v5987 = vpop.permute.xlu0 %5986
        %5988 = vrot.lane.b32.xlu0 %v5909, 96
        %v5989 = vpop.permute.xlu0 %5988
        %5990 = vrot.lane.b32.xlu0 %v5910, 96
        %v5991 = vpop.permute.xlu0 %5990
        %5992 = vrot.lane.b32.xlu0 %v5911, 96
        %v5993 = vpop.permute.xlu0 %5992
        %5994 = vrot.lane.b32.xlu0 %v5912, 96
        %v5995 = vpop.permute.xlu0 %5994
        %5996 = vrot.lane.b32.xlu0 %v5913, 96
        %v5997 = vpop.permute.xlu0 %5996
        %5998 = vrot.lane.b32.xlu0 %v5914, 96
        %v5999 = vpop.permute.xlu0 %5998
        %6000 = vrot.lane.b32.xlu0 %v5915, 96
        %v6001 = vpop.permute.xlu0 %6000
        %6002 = vrot.lane.b32.xlu0 %v5916, 96
        %v6003 = vpop.permute.xlu0 %6002
        %6004 = vrot.lane.b32.xlu0 %v5917, 96
        %v6005 = vpop.permute.xlu0 %6004
        %6006 = vrot.lane.b32.xlu0 %v5918, 96
        %v6007 = vpop.permute.xlu0 %6006
        %6008 = vrot.lane.b32.xlu0 %v5919, 96
        %v6009 = vpop.permute.xlu0 %6008
        %6010 = vrot.lane.b32.xlu0 %v5920, 96
        %v6011 = vpop.permute.xlu0 %6010
        %6012 = vrot.lane.b32.xlu0 %v5921, 96
        %v6013 = vpop.permute.xlu0 %6012
        %6014 = vrot.lane.b32.xlu0 %v5922, 96
        %v6015 = vpop.permute.xlu0 %6014
        %6016 = vrot.lane.b32.xlu0 %v5923, 96
        %v6017 = vpop.permute.xlu0 %6016
        %6018 = vrot.lane.b32.xlu0 %v5924, 96
        %v6019 = vpop.permute.xlu0 %6018
        %6020 = vrot.lane.b32.xlu0 %v5925, 96
        %v6021 = vpop.permute.xlu0 %6020
        %v6054 = vadd.f32 %v5734, %v5959
        %v6055 = vadd.f32 %v5735, %v5961
        %v6056 = vadd.f32 %v5736, %v5963
        %v6057 = vadd.f32 %v5737, %v5965
        %v6058 = vadd.f32 %v5738, %v5967
        %v6059 = vadd.f32 %v5739, %v5969
        %v6060 = vadd.f32 %v5740, %v5971
        %v6061 = vadd.f32 %v5741, %v5973
        %v6062 = vadd.f32 %v5742, %v5975
        %v6063 = vadd.f32 %v5743, %v5977
        %v6064 = vadd.f32 %v5744, %v5979
        %v6065 = vadd.f32 %v5745, %v5981
        %v6066 = vadd.f32 %v5746, %v5983
        %v6067 = vadd.f32 %v5747, %v5985
        %v6068 = vadd.f32 %v5748, %v5987
        %v6069 = vadd.f32 %v5749, %v5989
        %v6070 = vadd.f32 %v5750, %v5991
        %v6071 = vadd.f32 %v5751, %v5993
        %v6072 = vadd.f32 %v5752, %v5995
        %v6073 = vadd.f32 %v5753, %v5997
        %v6074 = vadd.f32 %v5754, %v5999
        %v6075 = vadd.f32 %v5755, %v6001
        %v6076 = vadd.f32 %v5756, %v6003
        %v6077 = vadd.f32 %v5757, %v6005
        %v6078 = vadd.f32 %v5758, %v6007
        %v6079 = vadd.f32 %v5759, %v6009
        %v6080 = vadd.f32 %v5760, %v6011
        %v6081 = vadd.f32 %v5761, %v6013
        %v6082 = vadd.f32 %v5762, %v6015
        %v6083 = vadd.f32 %v5763, %v6017
        %v6084 = vadd.f32 %v5764, %v6019
        %v6085 = vadd.f32 %v5765, %v6021
        %v6086 = vtanh.pop %v6054
        %v6087 = vtanh.pop %v6055
        %v6088 = vtanh.pop %v6056
        %v6089 = vtanh.pop %v6057
        %v6090 = vtanh.pop %v6058
        %v6091 = vtanh.pop %v6059
        %v6092 = vtanh.pop %v6060
        %v6093 = vtanh.pop %v6061
        %v6094 = vtanh.pop %v6062
        %v6095 = vtanh.pop %v6063
        %v6096 = vtanh.pop %v6064
        %v6097 = vtanh.pop %v6065
        %v6098 = vtanh.pop %v6066
        %v6099 = vtanh.pop %v6067
        %v6100 = vtanh.pop %v6068
        %v6101 = vtanh.pop %v6069
        %v6102 = vtanh.pop %v6070
        %v6103 = vtanh.pop %v6071
        %v6104 = vtanh.pop %v6072
        %v6105 = vtanh.pop %v6073
        %v6106 = vtanh.pop %v6074
        %v6107 = vtanh.pop %v6075
        %v6108 = vtanh.pop %v6076
        %v6109 = vtanh.pop %v6077
        %v6110 = vtanh.pop %v6078
        %v6111 = vtanh.pop %v6079
        %v6112 = vtanh.pop %v6080
        %v6113 = vtanh.pop %v6081
        %v6114 = vtanh.pop %v6082
        %v6115 = vtanh.pop %v6083
        %v6116 = vtanh.pop %v6084
        %v6117 = vtanh.pop %v6085
        %6150 = vrot.lane.b32.xlu0 %v6086, 64
        %v6151 = vpop.permute.xlu0 %6150
        %6152 = vrot.lane.b32.xlu0 %v6087, 64
        %v6153 = vpop.permute.xlu0 %6152
        %6154 = vrot.lane.b32.xlu0 %v6088, 64
        %v6155 = vpop.permute.xlu0 %6154
        %6156 = vrot.lane.b32.xlu0 %v6089, 64
        %v6157 = vpop.permute.xlu0 %6156
        %6158 = vrot.lane.b32.xlu0 %v6090, 64
        %v6159 = vpop.permute.xlu0 %6158
        %6160 = vrot.lane.b32.xlu0 %v6091, 64
        %v6161 = vpop.permute.xlu0 %6160
        %6162 = vrot.lane.b32.xlu0 %v6092, 64
        %v6163 = vpop.permute.xlu0 %6162
        %6164 = vrot.lane.b32.xlu0 %v6093, 64
        %v6165 = vpop.permute.xlu0 %6164
        %6166 = vrot.lane.b32.xlu0 %v6094, 64
        %v6167 = vpop.permute.xlu0 %6166
        %6168 = vrot.lane.b32.xlu0 %v6095, 64
        %v6169 = vpop.permute.xlu0 %6168
        %6170 = vrot.lane.b32.xlu0 %v6096, 64
        %v6171 = vpop.permute.xlu0 %6170
        %6172 = vrot.lane.b32.xlu0 %v6097, 64
        %v6173 = vpop.permute.xlu0 %6172
        %6174 = vrot.lane.b32.xlu0 %v6098, 64
        %v6175 = vpop.permute.xlu0 %6174
        %6176 = vrot.lane.b32.xlu0 %v6099, 64
        %v6177 = vpop.permute.xlu0 %6176
        %6178 = vrot.lane.b32.xlu0 %v6100, 64
        %v6179 = vpop.permute.xlu0 %6178
        %6180 = vrot.lane.b32.xlu0 %v6101, 64
        %v6181 = vpop.permute.xlu0 %6180
        %6182 = vrot.lane.b32.xlu0 %v6102, 64
        %v6183 = vpop.permute.xlu0 %6182
        %6184 = vrot.lane.b32.xlu0 %v6103, 64
        %v6185 = vpop.permute.xlu0 %6184
        %6186 = vrot.lane.b32.xlu0 %v6104, 64
        %v6187 = vpop.permute.xlu0 %6186
        %6188 = vrot.lane.b32.xlu0 %v6105, 64
        %v6189 = vpop.permute.xlu0 %6188
        %6190 = vrot.lane.b32.xlu0 %v6106, 64
        %v6191 = vpop.permute.xlu0 %6190
        %6192 = vrot.lane.b32.xlu0 %v6107, 64
        %v6193 = vpop.permute.xlu0 %6192
        %6194 = vrot.lane.b32.xlu0 %v6108, 64
        %v6195 = vpop.permute.xlu0 %6194
        %6196 = vrot.lane.b32.xlu0 %v6109, 64
        %v6197 = vpop.permute.xlu0 %6196
        %6198 = vrot.lane.b32.xlu0 %v6110, 64
        %v6199 = vpop.permute.xlu0 %6198
        %6200 = vrot.lane.b32.xlu0 %v6111, 64
        %v6201 = vpop.permute.xlu0 %6200
        %6202 = vrot.lane.b32.xlu0 %v6112, 64
        %v6203 = vpop.permute.xlu0 %6202
        %6204 = vrot.lane.b32.xlu0 %v6113, 64
        %v6205 = vpop.permute.xlu0 %6204
        %6206 = vrot.lane.b32.xlu0 %v6114, 64
        %v6207 = vpop.permute.xlu0 %6206
        %6208 = vrot.lane.b32.xlu0 %v6115, 64
        %v6209 = vpop.permute.xlu0 %6208
        %6210 = vrot.lane.b32.xlu0 %v6116, 64
        %v6211 = vpop.permute.xlu0 %6210
        %6212 = vrot.lane.b32.xlu0 %v6117, 64
        %v6213 = vpop.permute.xlu0 %6212
        %v6246 = vmul.f32 %v5670, %v6151
        %v6247 = vmul.f32 %v5671, %v6153
        %v6248 = vmul.f32 %v5672, %v6155
        %v6249 = vmul.f32 %v5673, %v6157
        %v6250 = vmul.f32 %v5674, %v6159
        %v6251 = vmul.f32 %v5675, %v6161
        %v6252 = vmul.f32 %v5676, %v6163
        %v6253 = vmul.f32 %v5677, %v6165
        %v6254 = vmul.f32 %v5678, %v6167
        %v6255 = vmul.f32 %v5679, %v6169
        %v6256 = vmul.f32 %v5680, %v6171
        %v6257 = vmul.f32 %v5681, %v6173
        %v6258 = vmul.f32 %v5682, %v6175
        %v6259 = vmul.f32 %v5683, %v6177
        %v6260 = vmul.f32 %v5684, %v6179
        %v6261 = vmul.f32 %v5685, %v6181
        %v6262 = vmul.f32 %v5686, %v6183
        %v6263 = vmul.f32 %v5687, %v6185
        %v6264 = vmul.f32 %v5688, %v6187
        %v6265 = vmul.f32 %v5689, %v6189
        %v6266 = vmul.f32 %v5690, %v6191
        %v6267 = vmul.f32 %v5691, %v6193
        %v6268 = vmul.f32 %v5692, %v6195
        %v6269 = vmul.f32 %v5693, %v6197
        %v6270 = vmul.f32 %v5694, %v6199
        %v6271 = vmul.f32 %v5695, %v6201
        %v6272 = vmul.f32 %v5696, %v6203
        %v6273 = vmul.f32 %v5697, %v6205
        %v6274 = vmul.f32 %v5698, %v6207
        %v6275 = vmul.f32 %v5699, %v6209
        %v6276 = vmul.f32 %v5700, %v6211
        %v6277 = vmul.f32 %v5701, %v6213
        %6310 = vrot.lane.b32.xlu0 %v6246, 96
        %v6311 = vpop.permute.xlu0 %6310
        %6312 = vrot.lane.b32.xlu0 %v6247, 96
        %v6313 = vpop.permute.xlu0 %6312
        %6314 = vrot.lane.b32.xlu0 %v6248, 96
        %v6315 = vpop.permute.xlu0 %6314
        %6316 = vrot.lane.b32.xlu0 %v6249, 96
        %v6317 = vpop.permute.xlu0 %6316
        %6318 = vrot.lane.b32.xlu0 %v6250, 96
        %v6319 = vpop.permute.xlu0 %6318
        %6320 = vrot.lane.b32.xlu0 %v6251, 96
        %v6321 = vpop.permute.xlu0 %6320
        %6322 = vrot.lane.b32.xlu0 %v6252, 96
        %v6323 = vpop.permute.xlu0 %6322
        %6324 = vrot.lane.b32.xlu0 %v6253, 96
        %v6325 = vpop.permute.xlu0 %6324
        %6326 = vrot.lane.b32.xlu0 %v6254, 96
        %v6327 = vpop.permute.xlu0 %6326
        %6328 = vrot.lane.b32.xlu0 %v6255, 96
        %v6329 = vpop.permute.xlu0 %6328
        %6330 = vrot.lane.b32.xlu0 %v6256, 96
        %v6331 = vpop.permute.xlu0 %6330
        %6332 = vrot.lane.b32.xlu0 %v6257, 96
        %v6333 = vpop.permute.xlu0 %6332
        %6334 = vrot.lane.b32.xlu0 %v6258, 96
        %v6335 = vpop.permute.xlu0 %6334
        %6336 = vrot.lane.b32.xlu0 %v6259, 96
        %v6337 = vpop.permute.xlu0 %6336
        %6338 = vrot.lane.b32.xlu0 %v6260, 96
        %v6339 = vpop.permute.xlu0 %6338
        %6340 = vrot.lane.b32.xlu0 %v6261, 96
        %v6341 = vpop.permute.xlu0 %6340
        %6342 = vrot.lane.b32.xlu0 %v6262, 96
        %v6343 = vpop.permute.xlu0 %6342
        %6344 = vrot.lane.b32.xlu0 %v6263, 96
        %v6345 = vpop.permute.xlu0 %6344
        %6346 = vrot.lane.b32.xlu0 %v6264, 96
        %v6347 = vpop.permute.xlu0 %6346
        %6348 = vrot.lane.b32.xlu0 %v6265, 96
        %v6349 = vpop.permute.xlu0 %6348
        %6350 = vrot.lane.b32.xlu0 %v6266, 96
        %v6351 = vpop.permute.xlu0 %6350
        %6352 = vrot.lane.b32.xlu0 %v6267, 96
        %v6353 = vpop.permute.xlu0 %6352
        %6354 = vrot.lane.b32.xlu0 %v6268, 96
        %v6355 = vpop.permute.xlu0 %6354
        %6356 = vrot.lane.b32.xlu0 %v6269, 96
        %v6357 = vpop.permute.xlu0 %6356
        %6358 = vrot.lane.b32.xlu0 %v6270, 96
        %v6359 = vpop.permute.xlu0 %6358
        %6360 = vrot.lane.b32.xlu0 %v6271, 96
        %v6361 = vpop.permute.xlu0 %6360
        %6362 = vrot.lane.b32.xlu0 %v6272, 96
        %v6363 = vpop.permute.xlu0 %6362
        %6364 = vrot.lane.b32.xlu0 %v6273, 96
        %v6365 = vpop.permute.xlu0 %6364
        %6366 = vrot.lane.b32.xlu0 %v6274, 96
        %v6367 = vpop.permute.xlu0 %6366
        %6368 = vrot.lane.b32.xlu0 %v6275, 96
        %v6369 = vpop.permute.xlu0 %6368
        %6370 = vrot.lane.b32.xlu0 %v6276, 96
        %v6371 = vpop.permute.xlu0 %6370
        %6372 = vrot.lane.b32.xlu0 %v6277, 96
        %v6373 = vpop.permute.xlu0 %6372
        %vm6406 = vcmask 261120
        %v6407 = vsel %vm6406, %v6054, %v6311
        %v6408 = vsel %vm6406, %v6055, %v6313
        %v6409 = vsel %vm6406, %v6056, %v6315
        %v6410 = vsel %vm6406, %v6057, %v6317
        %v6411 = vsel %vm6406, %v6058, %v6319
        %v6412 = vsel %vm6406, %v6059, %v6321
        %v6413 = vsel %vm6406, %v6060, %v6323
        %v6414 = vsel %vm6406, %v6061, %v6325
        %v6415 = vsel %vm6406, %v6062, %v6327
        %v6416 = vsel %vm6406, %v6063, %v6329
        %v6417 = vsel %vm6406, %v6064, %v6331
        %v6418 = vsel %vm6406, %v6065, %v6333
        %v6419 = vsel %vm6406, %v6066, %v6335
        %v6420 = vsel %vm6406, %v6067, %v6337
        %v6421 = vsel %vm6406, %v6068, %v6339
        %v6422 = vsel %vm6406, %v6069, %v6341
        %v6423 = vsel %vm6406, %v6070, %v6343
        %v6424 = vsel %vm6406, %v6071, %v6345
        %v6425 = vsel %vm6406, %v6072, %v6347
        %v6426 = vsel %vm6406, %v6073, %v6349
        %v6427 = vsel %vm6406, %v6074, %v6351
        %v6428 = vsel %vm6406, %v6075, %v6353
        %v6429 = vsel %vm6406, %v6076, %v6355
        %v6430 = vsel %vm6406, %v6077, %v6357
        %v6431 = vsel %vm6406, %v6078, %v6359
        %v6432 = vsel %vm6406, %v6079, %v6361
        %v6433 = vsel %vm6406, %v6080, %v6363
        %v6434 = vsel %vm6406, %v6081, %v6365
        %v6435 = vsel %vm6406, %v6082, %v6367
        %v6436 = vsel %vm6406, %v6083, %v6369
        %v6437 = vsel %vm6406, %v6084, %v6371
        %v6438 = vsel %vm6406, %v6085, %v6373
        %vm6439 = vcmask 523264
        %6440 = vst.msk [vmem:[%s291] sm:$0xff] %vm6439, %v6407
        %6441 = vst.msk [vmem:[%s291 + $0x8] sm:$0xff] %vm6439, %v6408
        %6442 = vst.msk [vmem:[%s291 + $0x10] sm:$0xff] %vm6439, %v6409
        %6443 = vst.msk [vmem:[%s291 + $0x18] sm:$0xff] %vm6439, %v6410
        %6444 = vst.msk [vmem:[%s291 + $0x20] sm:$0xff] %vm6439, %v6411
        %6445 = vst.msk [vmem:[%s291 + $0x28] sm:$0xff] %vm6439, %v6412
        %6446 = vst.msk [vmem:[%s291 + $0x30] sm:$0xff] %vm6439, %v6413
        %6447 = vst.msk [vmem:[%s291 + $0x38] sm:$0xff] %vm6439, %v6414
        %6448 = vst.msk [vmem:[%s291 + $0x40] sm:$0xff] %vm6439, %v6415
        %6449 = vst.msk [vmem:[%s291 + $0x48] sm:$0xff] %vm6439, %v6416
        %6450 = vst.msk [vmem:[%s291 + $0x50] sm:$0xff] %vm6439, %v6417
        %6451 = vst.msk [vmem:[%s291 + $0x58] sm:$0xff] %vm6439, %v6418
        %6452 = vst.msk [vmem:[%s291 + $0x60] sm:$0xff] %vm6439, %v6419
        %6453 = vst.msk [vmem:[%s291 + $0x68] sm:$0xff] %vm6439, %v6420
        %6454 = vst.msk [vmem:[%s291 + $0x70] sm:$0xff] %vm6439, %v6421
        %6455 = vst.msk [vmem:[%s291 + $0x78] sm:$0xff] %vm6439, %v6422
        %6456 = vst.msk [vmem:[%s291 + $0x80] sm:$0xff] %vm6439, %v6423
        %6457 = vst.msk [vmem:[%s291 + $0x88] sm:$0xff] %vm6439, %v6424
        %6458 = vst.msk [vmem:[%s291 + $0x90] sm:$0xff] %vm6439, %v6425
        %6459 = vst.msk [vmem:[%s291 + $0x98] sm:$0xff] %vm6439, %v6426
        %6460 = vst.msk [vmem:[%s291 + $0xa0] sm:$0xff] %vm6439, %v6427
        %6461 = vst.msk [vmem:[%s291 + $0xa8] sm:$0xff] %vm6439, %v6428
        %6462 = vst.msk [vmem:[%s291 + $0xb0] sm:$0xff] %vm6439, %v6429
        %6463 = vst.msk [vmem:[%s291 + $0xb8] sm:$0xff] %vm6439, %v6430
        %6464 = vst.msk [vmem:[%s291 + $0xc0] sm:$0xff] %vm6439, %v6431
        %6465 = vst.msk [vmem:[%s291 + $0xc8] sm:$0xff] %vm6439, %v6432
        %6466 = vst.msk [vmem:[%s291 + $0xd0] sm:$0xff] %vm6439, %v6433
        %6467 = vst.msk [vmem:[%s291 + $0xd8] sm:$0xff] %vm6439, %v6434
        %6468 = vst.msk [vmem:[%s291 + $0xe0] sm:$0xff] %vm6439, %v6435
        %6469 = vst.msk [vmem:[%s291 + $0xe8] sm:$0xff] %vm6439, %v6436
        %6470 = vst.msk [vmem:[%s291 + $0xf0] sm:$0xff] %vm6439, %v6437
        %6471 = vst.msk [vmem:[%s291 + $0xf8] sm:$0xff] %vm6439, %v6438
        %s6472 = sand.u32 %s151, 1
        %s6473 = scalar_lea.sflag [#allocation6], %s6472
        %s6474 = sand.u32 %s151, 1
        %s6475 = smul.addr %s6474, 256
        %s6476 = scalar_lea.vmem [#allocation9], %s6475
        // Predicated region
        $region49: #{tpu_custom_call.1} parent=39 // pred_check
          %p6477 = pneg %p161
        $region50: #{tpu_custom_call.1} parent=39 // pred_check_branch
          %6479 = sbr.rel (%p6477) target = $region52
        $region51: #{tpu_custom_call.1} parent=39 // pred_region
          %6481 = vsyncadd %s6473, 0
          %s6482 = smul.addr %s23, 32
          %s6483 = smul.addr %s6482, 8
          %s6484 = scalar_lea.hbm %s5, %s6483
          %s6485 = sshll.u32 %s6476, 4
          %s6486 = int_to_ptr.vmem [resolvable:$true] %s6485
          %s6487 = sshll.u32 %s6484, 4
          %s6488 = int_to_ptr.hbm [resolvable:$true] %s6487
          %6493 = dma.vmem_to_hbm [thread:$0]  %s6486, 4096, %s6488, %s6473, 128, 128, 8
        $region52: #{tpu_custom_call.1} parent=39 // pred_fallthru
          _
      $region40: #{tpu_custom_call.1} parent=5 // pred_fallthru
        _
      %p6494 = scmp.le.s32.totalorder 2, %s18
      // Predicated region
      $region53: #{tpu_custom_call.1} parent=5 // pred_check
        %p6495 = pneg %p6494
      $region54: #{tpu_custom_call.1} parent=5 // pred_check_branch
        %6497 = sbr.rel (%p6495) target = $region56
      $region55: #{tpu_custom_call.1} parent=5 // pred_region
        %s6498 = ssub.s32 %s18, 2
        // Predicated region
        $region57: #{tpu_custom_call.1} parent=55 // pred_check
          %p6499 = pneg %p167
        $region58: #{tpu_custom_call.1} parent=55 // pred_check_branch
          %6501 = sbr.rel (%p6499) target = $region60
        $region59: #{tpu_custom_call.1} parent=55 // pred_region
          %s6502 = sand.u32 %s152, 1
          %s6503 = scalar_lea.sflag [#allocation6], %s6502
          %s6504 = sand.u32 %s152, 1
          %s6505 = smul.addr %s6504, 256
          %s6506 = scalar_lea.vmem [#allocation9], %s6505
          %6508 = dma.done %s6503, 4096
        $region60: #{tpu_custom_call.1} parent=55 // pred_fallthru
          _
      $region56: #{tpu_custom_call.1} parent=5 // pred_fallthru
        _
    $region6: #{tpu_custom_call.1} parent=1 // loop_footer
      %s22 = sadd.s32 1, %s18
    $region7: #{tpu_custom_call.1} parent=1 // loop_footer_branch
      %17 = sbr.rel target = $region3
    $region8: #{tpu_custom_call.1} parent=1 // loop_exit
      _
    %6509 = vsyncpa [#allocation5], 1
    %s6510 = scalar_lea.sflag [#allocation5], 1
    %6511 = vsyncpa %s6510, 1
    %6512 = vsyncpa [#allocation8], 1
    %s6513 = scalar_lea.sflag [#allocation8], 1
    %6514 = vsyncpa %s6513, 1
    %6515 = vsyncpa [#allocation6], 1
    %s6516 = scalar_lea.sflag [#allocation6], 1
    %6517 = vsyncpa %s6516, 1

</llo_original>
